<compile_context>
chip_gen: v6e
topology: v6e:2x2x1
jax: 0.10.0
libtpu: 0.0.40
codegen_flags: <defaults>
</compile_context>

<pallas_src>
import math
import functools

import jax
import jax.numpy as jnp
from jax import lax
from jax.experimental import pallas as pl
from jax.experimental.pallas import tpu as pltpu


# --------------------------- transformer-layers kernel --------------------------- #

def _layers_kernel(z0_ref, wqkv_ref, wc_ref, w1_ref, b1_ref, w2_ref, b2_ref,
                   o_ref, *, bblk, seq, heads, khead):
    """grid = (batch_block, layer).  The activation stream is resident in the output
    block across the (arbitrary) layer axis; layer weights stream through bf16 slabs."""
    layer = pl.program_id(1)
    B, L, H, kk = bblk, seq, heads, khead
    Hk = H * kk
    BL = B * L
    NEG = -1e30

    # First layer: load the embedded input into the resident activation (output) block.
    @pl.when(layer == 0)
    def _():
        o_ref[...] = z0_ref[...]

    x = o_ref[...]                                        # (BL, d) f32 residual stream
    xb = x.astype(jnp.bfloat16)

    # ---- packed QKV projection: one MXU matmul, f32 accumulation ----
    qkv = jnp.dot(xb, wqkv_ref[0], preferred_element_type=jnp.float32)   # (BL, 3*Hk)

    # Split heads and stack them along the batch axis -> (H*B, L, kk) so the scores,
    # softmax and context are each a single head-batched op.
    def split_heads(mat):                                 # (BL, Hk) -> (H*B, L, kk)
        parts = [mat[:, h * kk:(h + 1) * kk].reshape(B, L, kk) for h in range(H)]
        return jnp.concatenate(parts, axis=0)

    qb = split_heads(qkv[:, :Hk]).astype(jnp.bfloat16)
    kb = split_heads(qkv[:, Hk:2 * Hk]).astype(jnp.bfloat16)
    vb = split_heads(qkv[:, 2 * Hk:3 * Hk]).astype(jnp.bfloat16)

    # Causal mask: tiny (L, L) iota compare, broadcast over (H*B).
    row = lax.broadcasted_iota(jnp.int32, (L, L), 0)      # query index
    col = lax.broadcasted_iota(jnp.int32, (L, L), 1)      # key index
    causal = col <= row

    # 1/sqrt(k) is folded into wq at init time.
    s = jnp.einsum('gqc,gkc->gqk', qb, kb,
                   preferred_element_type=jnp.float32)    # (H*B, L, L)
    s = jnp.where(causal[None], s, NEG)
    s = s - jnp.max(s, axis=-1, keepdims=True)
    p = jnp.exp(s)
    p = p * pl.reciprocal(jnp.sum(p, axis=-1, keepdims=True), approx=True)

    ctx = jnp.einsum('gqk,gkc->gqc', p.astype(jnp.bfloat16), vb,
                     preferred_element_type=jnp.float32)  # (H*B, L, kk)

    # Re-pack heads onto the lane axis and apply ONE output projection.
    ctx_all = jnp.concatenate(
        [ctx[h * B:(h + 1) * B].reshape(BL, kk) for h in range(H)], axis=-1)  # (BL, Hk)
    attn = jnp.dot(ctx_all.astype(jnp.bfloat16), wc_ref[0],
                   preferred_element_type=jnp.float32)    # (BL, d)

    h1 = x + attn                                         # residual (attention), f32

    # ---- feed-forward (ReLU MLP), bf16 matmuls / f32 accumulate ----
    ff = jnp.dot(h1.astype(jnp.bfloat16), w1_ref[0],
                 preferred_element_type=jnp.float32) + b1_ref[0]
    ff = jnp.maximum(ff, 0.0)
    ff = jnp.dot(ff.astype(jnp.bfloat16), w2_ref[0],
                 preferred_element_type=jnp.float32) + b2_ref[0]

    o_ref[...] = h1 + ff                                  # residual (MLP)


# ------------------------------ decoder kernel ----------------------------------- #

def _decoder_kernel(z_ref, w_ref, b_ref, o_ref):
    """Row-block tiled decoder + exact log_softmax (separate call -> decoder weight is
    not resident across the layer grid)."""
    zb = z_ref[...].astype(jnp.bfloat16)
    logits = jnp.dot(zb, w_ref[...], preferred_element_type=jnp.float32) + b_ref[...]
    mx = jnp.max(logits, axis=-1, keepdims=True)
    s = logits - mx
    lse = jnp.log(jnp.sum(jnp.exp(s), axis=-1, keepdims=True))
    o_ref[...] = s - lse
    # TODO(synk): for large vocabularies, add a vocab-tile grid axis with a two-pass
    # (running max/sum) logsumexp instead of holding the full (rows, T) logits block.


# ------------------------------ full forward ------------------------------------- #

def transformer_forward(params, x_ids, *, heads, k, batch_block=None):
    """x_ids: (L, B) int32 token ids -> (L, B, tokens) float32 log-probs."""
    L, B = x_ids.shape
    d = params["word_emb"].shape[1]
    T = params["dec_w"].shape[1]
    Nl = params["wqkv"].shape[0]
    m = params["w1"].shape[2]
    Hk = heads * k
    BL = B * L

    # Embedding gather + positional add + relu (tiny glue, plain JAX).
    # TODO(synk): could be folded into the kernel via scalar-prefetched token ids.
    we = jnp.take(params["word_emb"], x_ids, axis=0) * math.sqrt(d)   # (L, B, d)
    pe = params["pos_emb"][:L][:, None, :]                            # (L, 1, d)
    z = jnp.maximum(we + pe, 0.0)                                     # (L, B, d)
    z = jnp.transpose(z, (1, 0, 2)).reshape(BL, d)                    # (B*L, d) batch-major

    if batch_block is None:
        batch_block = B                   # 1 batch-block; >1 blocks feed v7x's 2nd TC
    assert B % batch_block == 0
    rows = batch_block * L
    nbb = B // batch_block

    kernel = functools.partial(_layers_kernel, bblk=batch_block, seq=L,
                               heads=heads, khead=k)

    z_out = pl.pallas_call(
        kernel,
        out_shape=jax.ShapeDtypeStruct((BL, d), jnp.float32),
        grid=(nbb, Nl),
        in_specs=[
            pl.BlockSpec((rows, d), lambda bb, l: (bb, 0)),             # embedded input
            pl.BlockSpec((1, d, 3 * Hk), lambda bb, l: (l, 0, 0)),      # packed wqkv (bf16)
            pl.BlockSpec((1, Hk, d), lambda bb, l: (l, 0, 0)),          # wc (bf16)
            pl.BlockSpec((1, d, m), lambda bb, l: (l, 0, 0)),           # w1 (bf16)
            pl.BlockSpec((1, 1, m), lambda bb, l: (l, 0, 0)),           # b1 (f32)
            pl.BlockSpec((1, m, d), lambda bb, l: (l, 0, 0)),           # w2 (bf16)
            pl.BlockSpec((1, 1, d), lambda bb, l: (l, 0, 0)),           # b2 (f32)
        ],
        # Output block is the resident activation across the layer axis.
        out_specs=pl.BlockSpec((rows, d), lambda bb, l: (bb, 0)),
        compiler_params=pltpu.CompilerParams(
            dimension_semantics=("parallel", "arbitrary")),
        # NOTE: on v6e/v5e (128 MiB VMEM) the big weight specs could additionally use
        # pipeline_mode=pl.Buffered(3) to deepen weight prefetch; default 2 kept here.
    )(z, params["wqkv"], params["wc"], params["w1"], params["b1"],
      params["w2"], params["b2"])

    # Decoder + log_softmax: separate call, row-block "parallel" grid.
    rb = 128 if (BL % 128 == 0) else BL
    logp = pl.pallas_call(
        _decoder_kernel,
        out_shape=jax.ShapeDtypeStruct((BL, T), jnp.float32),
        grid=(BL // rb,),
        in_specs=[
            pl.BlockSpec((rb, d), lambda i: (i, 0)),
            pl.BlockSpec((d, T), lambda i: (0, 0)),
            pl.BlockSpec((1, T), lambda i: (0, 0)),
        ],
        out_specs=pl.BlockSpec((rb, T), lambda i: (i, 0)),
        compiler_params=pltpu.CompilerParams(dimension_semantics=("parallel",)),
    )(z_out, params["dec_w"], params["dec_b"])

    return jnp.transpose(logp.reshape(B, L, T), (1, 0, 2))               # (L, B, tokens)


# ------------------------------ param init --------------------------------------- #

def init_params(key, *, seq_len, tokens, d, k, m, heads, layers):
    """Parameters are created directly in kernel layout (stacked per layer, packed QKV,
    bf16 weights, attention scale folded into wq, decoder biases folded together)."""
    Hk = heads * k
    keys = jax.random.split(key, 4 + 6 * layers)
    it = iter(keys)

    def nrm(shape):
        return 0.02 * jax.random.normal(next(it), shape, dtype=jnp.float32)

    wqkv, wc, w1, w2 = [], [], [], []
    for _ in range(layers):
        wq = nrm((d, Hk)) * (1.0 / math.sqrt(k))   # fold 1/sqrt(k) attention scale
        wk = nrm((d, Hk))
        wv = nrm((d, Hk))
        wqkv.append(jnp.concatenate([wq, wk, wv], axis=1))   # (d, 3*Hk)
        wc.append(nrm((Hk, d)))
        w1.append(nrm((d, m)))
        w2.append(nrm((m, d)))

    return {
        "pos_emb": nrm((seq_len, d)),
        "word_emb": nrm((tokens, d)),
        # decoder weight as (d, tokens) so logits = z @ W; decoder bias + the module's
        # extra `bias` parameter (init to 0) folded into one (1, tokens) f32 vector.
        "dec_w": nrm((d, tokens)).astype(jnp.bfloat16),
        "dec_b": nrm((1, tokens)) + jnp.zeros((1, tokens), jnp.float32),
        "wqkv": jnp.stack(wqkv).astype(jnp.bfloat16),        # (Nl, d, 3*Hk)
        "wc": jnp.stack(wc).astype(jnp.bfloat16),            # (Nl, Hk, d)
        "w1": jnp.stack(w1).astype(jnp.bfloat16),            # (Nl, d, m)
        "b1": jnp.zeros((layers, 1, m), jnp.float32),
        "w2": jnp.stack(w2).astype(jnp.bfloat16),            # (Nl, m, d)
        "b2": jnp.zeros((layers, 1, d), jnp.float32),
    }


# ---------------------------------- main ------------------------------------------ #

if __name__ == "__main__":
    # Small demo shapes, chosen so every lane (last) dim is a 128-multiple:
    # d=128, heads*k=128, m=256, tokens=128, B*L=128.
    seq_len, batch = 16, 8
    tokens, d, k, m, heads, layers = 128, 128, 32, 256, 4, 2

    key = jax.random.PRNGKey(0)
    k_params, k_x = jax.random.split(key)
    params = init_params(k_params, seq_len=seq_len, tokens=tokens, d=d, k=k,
                         m=m, heads=heads, layers=layers)

    x_ids = jax.random.randint(k_x, (seq_len, batch), 0, tokens, dtype=jnp.int32)

    out = transformer_forward(params, x_ids, heads=heads, k=k)   # (L, B, tokens)
    out = jax.block_until_ready(out)

    assert out.shape == (seq_len, batch, tokens)
    assert bool(jnp.all(jnp.isfinite(out)))
    # log_softmax rows sum (in prob space) to 1
    assert bool(jnp.allclose(jnp.sum(jnp.exp(out), axis=-1), 1.0, atol=1e-4))
    print("KERNEL_OK")
</pallas_src>

<mosaic_0001>
module attributes {stable_mosaic.version = 11 : i64} {
  func.func @_layers_kernel(%arg0: i32, %arg1: i32, %arg2: memref<128x128xf32, #tpu.memory_space<vmem>>, %arg3: memref<1x128x384xbf16, #tpu.memory_space<vmem>>, %arg4: memref<1x128x128xbf16, #tpu.memory_space<vmem>>, %arg5: memref<1x128x256xbf16, #tpu.memory_space<vmem>>, %arg6: memref<1x1x256xf32, #tpu.memory_space<vmem>>, %arg7: memref<1x256x128xbf16, #tpu.memory_space<vmem>>, %arg8: memref<1x1x128xf32, #tpu.memory_space<vmem>>, %arg9: memref<128x128xf32, #tpu.memory_space<vmem>>) attributes {dimension_semantics = [#tpu.dimension_semantics<parallel>, #tpu.dimension_semantics<arbitrary>], iteration_bounds = array<i64: 1, 2>, scalar_prefetch = 0 : i64, scratch_operands = 0 : i64, tpu.core_type = #tpu.core_type<tc>, window_params = [{transform_indices = @transform_0, window_bounds = array<i64: 128, 128>}, {transform_indices = @transform_1, window_bounds = array<i64: 1, 128, 384>}, {transform_indices = @transform_2, window_bounds = array<i64: 1, 128, 128>}, {transform_indices = @transform_3, window_bounds = array<i64: 1, 128, 256>}, {transform_indices = @transform_4, window_bounds = array<i64: 1, 1, 256>}, {transform_indices = @transform_5, window_bounds = array<i64: 1, 256, 128>}, {transform_indices = @transform_6, window_bounds = array<i64: 1, 1, 128>}, {transform_indices = @transform_7, window_bounds = array<i64: 128, 128>}]} {
    %c0_i32 = arith.constant 0 : i32
    %0 = arith.cmpi eq, %arg1, %c0_i32 : i32
    %1 = arith.extui %0 : i1 to i32
    %c0_i32_0 = arith.constant 0 : i32
    %2 = arith.cmpi ne, %1, %c0_i32_0 : i32
    scf.if %2 {
      %c0_31 = arith.constant 0 : index
      %c0_32 = arith.constant 0 : index
      %96 = vector.load %arg2[%c0_31, %c0_32] : memref<128x128xf32, #tpu.memory_space<vmem>>, vector<128x128xf32>
      %c0_33 = arith.constant 0 : index
      %c0_34 = arith.constant 0 : index
      %97 = vector.load %arg9[%c0_33, %c0_34] : memref<128x128xf32, #tpu.memory_space<vmem>>, vector<128x128xf32>
      tpu.vector_store %arg9[%c0_33, %c0_34], %96 {strides = array<i32>} : memref<128x128xf32, #tpu.memory_space<vmem>>, vector<128x128xf32>,
    } else {
    }
    %c0 = arith.constant 0 : index
    %c0_1 = arith.constant 0 : index
    %3 = vector.load %arg9[%c0, %c0_1] : memref<128x128xf32, #tpu.memory_space<vmem>>, vector<128x128xf32>
    %4 = arith.truncf %3 : vector<128x128xf32> to vector<128x128xbf16>
    %c0_2 = arith.constant 0 : index
    %c0_3 = arith.constant 0 : index
    %c0_4 = arith.constant 0 : index
    %5 = vector.load %arg3[%c0_2, %c0_3, %c0_4] : memref<1x128x384xbf16, #tpu.memory_space<vmem>>, vector<1x128x384xbf16>
    %6 = vector.shape_cast %5 : vector<1x128x384xbf16> to vector<128x384xbf16>
    %cst = arith.constant dense<0.000000e+00> : vector<128x384xf32>
    %7 = tpu.matmul %4, %6, %cst {dimension_numbers = #tpu.dot_dimension_numbers<[1], [0], [0], [1], [0, 0, 1, 1], [], []>} : vector<128x128xbf16>, vector<128x384xbf16>, vector<128x384xf32> -> vector<128x384xf32>
    %8 = vector.extract_strided_slice %7 {offsets = [0, 0], sizes = [128, 128], strides = [1, 1]} : vector<128x384xf32> to vector<128x128xf32>
    %9 = vector.extract_strided_slice %8 {offsets = [0, 0], sizes = [128, 32], strides = [1, 1]} : vector<128x128xf32> to vector<128x32xf32>
    %10 = vector.shape_cast %9 : vector<128x32xf32> to vector<8x16x32xf32>
    %11 = vector.extract_strided_slice %8 {offsets = [0, 32], sizes = [128, 32], strides = [1, 1]} : vector<128x128xf32> to vector<128x32xf32>
    %12 = vector.shape_cast %11 : vector<128x32xf32> to vector<8x16x32xf32>
    %13 = vector.extract_strided_slice %8 {offsets = [0, 64], sizes = [128, 32], strides = [1, 1]} : vector<128x128xf32> to vector<128x32xf32>
    %14 = vector.shape_cast %13 : vector<128x32xf32> to vector<8x16x32xf32>
    %15 = vector.extract_strided_slice %8 {offsets = [0, 96], sizes = [128, 32], strides = [1, 1]} : vector<128x128xf32> to vector<128x32xf32>
    %16 = vector.shape_cast %15 : vector<128x32xf32> to vector<8x16x32xf32>
    %17 = tpu.concatenate %10, %12, %14, %16 in 0 : vector<8x16x32xf32>, vector<8x16x32xf32>, vector<8x16x32xf32>, vector<8x16x32xf32> -> vector<32x16x32xf32>
    %18 = arith.truncf %17 : vector<32x16x32xf32> to vector<32x16x32xbf16>
    %19 = vector.extract_strided_slice %7 {offsets = [0, 128], sizes = [128, 128], strides = [1, 1]} : vector<128x384xf32> to vector<128x128xf32>
    %20 = vector.extract_strided_slice %19 {offsets = [0, 0], sizes = [128, 32], strides = [1, 1]} : vector<128x128xf32> to vector<128x32xf32>
    %21 = vector.shape_cast %20 : vector<128x32xf32> to vector<8x16x32xf32>
    %22 = vector.extract_strided_slice %19 {offsets = [0, 32], sizes = [128, 32], strides = [1, 1]} : vector<128x128xf32> to vector<128x32xf32>
    %23 = vector.shape_cast %22 : vector<128x32xf32> to vector<8x16x32xf32>
    %24 = vector.extract_strided_slice %19 {offsets = [0, 64], sizes = [128, 32], strides = [1, 1]} : vector<128x128xf32> to vector<128x32xf32>
    %25 = vector.shape_cast %24 : vector<128x32xf32> to vector<8x16x32xf32>
    %26 = vector.extract_strided_slice %19 {offsets = [0, 96], sizes = [128, 32], strides = [1, 1]} : vector<128x128xf32> to vector<128x32xf32>
    %27 = vector.shape_cast %26 : vector<128x32xf32> to vector<8x16x32xf32>
    %28 = tpu.concatenate %21, %23, %25, %27 in 0 : vector<8x16x32xf32>, vector<8x16x32xf32>, vector<8x16x32xf32>, vector<8x16x32xf32> -> vector<32x16x32xf32>
    %29 = arith.truncf %28 : vector<32x16x32xf32> to vector<32x16x32xbf16>
    %30 = vector.extract_strided_slice %7 {offsets = [0, 256], sizes = [128, 128], strides = [1, 1]} : vector<128x384xf32> to vector<128x128xf32>
    %31 = vector.extract_strided_slice %30 {offsets = [0, 0], sizes = [128, 32], strides = [1, 1]} : vector<128x128xf32> to vector<128x32xf32>
    %32 = vector.shape_cast %31 : vector<128x32xf32> to vector<8x16x32xf32>
    %33 = vector.extract_strided_slice %30 {offsets = [0, 32], sizes = [128, 32], strides = [1, 1]} : vector<128x128xf32> to vector<128x32xf32>
    %34 = vector.shape_cast %33 : vector<128x32xf32> to vector<8x16x32xf32>
    %35 = vector.extract_strided_slice %30 {offsets = [0, 64], sizes = [128, 32], strides = [1, 1]} : vector<128x128xf32> to vector<128x32xf32>
    %36 = vector.shape_cast %35 : vector<128x32xf32> to vector<8x16x32xf32>
    %37 = vector.extract_strided_slice %30 {offsets = [0, 96], sizes = [128, 32], strides = [1, 1]} : vector<128x128xf32> to vector<128x32xf32>
    %38 = vector.shape_cast %37 : vector<128x32xf32> to vector<8x16x32xf32>
    %39 = tpu.concatenate %32, %34, %36, %38 in 0 : vector<8x16x32xf32>, vector<8x16x32xf32>, vector<8x16x32xf32>, vector<8x16x32xf32> -> vector<32x16x32xf32>
    %40 = arith.truncf %39 : vector<32x16x32xf32> to vector<32x16x32xbf16>
    %41 = tpu.iota {dimensions = array<i32: 0>} : vector<16x16xi32>
    %42 = tpu.iota {dimensions = array<i32: 1>} : vector<16x16xi32>
    %43 = arith.cmpi sle, %42, %41 : vector<16x16xi32>
    "tpu.trace_start"() <{level = 10 : i32, message = "gqc,gkc->gqk"}> : () -> ()
    %cst_5 = arith.constant dense<0.000000e+00> : vector<32x16x16xf32>
    %44 = tpu.matmul %18, %29, %cst_5 {dimension_numbers = #tpu.dot_dimension_numbers<[2], [2], [1], [1], [0, 0, 0, 1, 1, 1], [0], [0]>} : vector<32x16x32xbf16>, vector<32x16x32xbf16>, vector<32x16x16xf32> -> vector<32x16x16xf32>
    "tpu.trace_stop"() : () -> ()
    %45 = vector.shape_cast %43 : vector<16x16xi1> to vector<1x16x16xi1>
    %cst_6 = arith.constant -1.000000e+30 : f32
    %46 = vector.shape_cast %45 : vector<1x16x16xi1> to vector<1x16x16xi1>
    %47 = vector.broadcast %46 : vector<1x16x16xi1> to vector<32x16x16xi1>
    %48 = vector.broadcast %cst_6 : f32 to vector<32x16x16xf32>
    %49 = arith.select %47, %44, %48 : vector<32x16x16xi1>, vector<32x16x16xf32>
    %cst_7 = arith.constant dense<0xFF800000> : vector<32x16xf32>
    %50 = vector.multi_reduction <maximumf>, %49, %cst_7 [2] : vector<32x16x16xf32> to vector<32x16xf32>
    %51 = vector.shape_cast %50 : vector<32x16xf32> to vector<32x16x1xf32>
    %52 = vector.broadcast %51 : vector<32x16x1xf32> to vector<32x16x16xf32>
    %53 = arith.subf %49, %52 : vector<32x16x16xf32>
    %54 = math.exp %53 : vector<32x16x16xf32>
    %cst_8 = arith.constant dense<0.000000e+00> : vector<32x16xf32>
    %55 = vector.multi_reduction <add>, %54, %cst_8 [2] : vector<32x16x16xf32> to vector<32x16xf32>
    %56 = vector.shape_cast %55 : vector<32x16xf32> to vector<32x16x1xf32>
    %57 = tpu.reciprocal %56 {approx = true} : vector<32x16x1xf32> -> vector<32x16x1xf32>
    %58 = vector.broadcast %57 : vector<32x16x1xf32> to vector<32x16x16xf32>
    %59 = arith.mulf %54, %58 : vector<32x16x16xf32>
    %60 = arith.truncf %59 : vector<32x16x16xf32> to vector<32x16x16xbf16>
    "tpu.trace_start"() <{level = 10 : i32, message = "gqk,gkc->gqc"}> : () -> ()
    %cst_9 = arith.constant dense<0.000000e+00> : vector<32x16x32xf32>
    %61 = tpu.matmul %60, %40, %cst_9 {dimension_numbers = #tpu.dot_dimension_numbers<[2], [1], [1], [2], [0, 0, 0, 1, 1, 2], [0], [0]>} : vector<32x16x16xbf16>, vector<32x16x32xbf16>, vector<32x16x32xf32> -> vector<32x16x32xf32>
    "tpu.trace_stop"() : () -> ()
    %62 = vector.extract_strided_slice %61 {offsets = [0, 0, 0], sizes = [8, 16, 32], strides = [1, 1, 1]} : vector<32x16x32xf32> to vector<8x16x32xf32>
    %63 = vector.shape_cast %62 : vector<8x16x32xf32> to vector<128x32xf32>
    %64 = vector.extract_strided_slice %61 {offsets = [8, 0, 0], sizes = [8, 16, 32], strides = [1, 1, 1]} : vector<32x16x32xf32> to vector<8x16x32xf32>
    %65 = vector.shape_cast %64 : vector<8x16x32xf32> to vector<128x32xf32>
    %66 = vector.extract_strided_slice %61 {offsets = [16, 0, 0], sizes = [8, 16, 32], strides = [1, 1, 1]} : vector<32x16x32xf32> to vector<8x16x32xf32>
    %67 = vector.shape_cast %66 : vector<8x16x32xf32> to vector<128x32xf32>
    %68 = vector.extract_strided_slice %61 {offsets = [24, 0, 0], sizes = [8, 16, 32], strides = [1, 1, 1]} : vector<32x16x32xf32> to vector<8x16x32xf32>
    %69 = vector.shape_cast %68 : vector<8x16x32xf32> to vector<128x32xf32>
    %70 = tpu.concatenate %63, %65, %67, %69 in 1 : vector<128x32xf32>, vector<128x32xf32>, vector<128x32xf32>, vector<128x32xf32> -> vector<128x128xf32>
    %71 = arith.truncf %70 : vector<128x128xf32> to vector<128x128xbf16>
    %c0_10 = arith.constant 0 : index
    %c0_11 = arith.constant 0 : index
    %c0_12 = arith.constant 0 : index
    %72 = vector.load %arg4[%c0_10, %c0_11, %c0_12] : memref<1x128x128xbf16, #tpu.memory_space<vmem>>, vector<1x128x128xbf16>
    %73 = vector.shape_cast %72 : vector<1x128x128xbf16> to vector<128x128xbf16>
    %cst_13 = arith.constant dense<0.000000e+00> : vector<128x128xf32>
    %74 = tpu.matmul %71, %73, %cst_13 {dimension_numbers = #tpu.dot_dimension_numbers<[1], [0], [0], [1], [0, 0, 1, 1], [], []>} : vector<128x128xbf16>, vector<128x128xbf16>, vector<128x128xf32> -> vector<128x128xf32>
    %75 = arith.addf %3, %74 : vector<128x128xf32>
    %76 = arith.truncf %75 : vector<128x128xf32> to vector<128x128xbf16>
    %c0_14 = arith.constant 0 : index
    %c0_15 = arith.constant 0 : index
    %c0_16 = arith.constant 0 : index
    %77 = vector.load %arg5[%c0_14, %c0_15, %c0_16] : memref<1x128x256xbf16, #tpu.memory_space<vmem>>, vector<1x128x256xbf16>
    %78 = vector.shape_cast %77 : vector<1x128x256xbf16> to vector<128x256xbf16>
    %cst_17 = arith.constant dense<0.000000e+00> : vector<128x256xf32>
    %79 = tpu.matmul %76, %78, %cst_17 {dimension_numbers = #tpu.dot_dimension_numbers<[1], [0], [0], [1], [0, 0, 1, 1], [], []>} : vector<128x128xbf16>, vector<128x256xbf16>, vector<128x256xf32> -> vector<128x256xf32>
    %c0_18 = arith.constant 0 : index
    %c0_19 = arith.constant 0 : index
    %c0_20 = arith.constant 0 : index
    %80 = vector.load %arg6[%c0_18, %c0_19, %c0_20] : memref<1x1x256xf32, #tpu.memory_space<vmem>>, vector<1x1x256xf32>
    %81 = vector.shape_cast %80 : vector<1x1x256xf32> to vector<1x256xf32>
    %82 = vector.broadcast %81 : vector<1x256xf32> to vector<128x256xf32>
    %83 = arith.addf %79, %82 : vector<128x256xf32>
    %cst_21 = arith.constant 0.000000e+00 : f32
    %84 = vector.broadcast %cst_21 : f32 to vector<128x256xf32>
    %85 = arith.maximumf %83, %84 : vector<128x256xf32>
    %86 = arith.truncf %85 : vector<128x256xf32> to vector<128x256xbf16>
    %c0_22 = arith.constant 0 : index
    %c0_23 = arith.constant 0 : index
    %c0_24 = arith.constant 0 : index
    %87 = vector.load %arg7[%c0_22, %c0_23, %c0_24] : memref<1x256x128xbf16, #tpu.memory_space<vmem>>, vector<1x256x128xbf16>
    %88 = vector.shape_cast %87 : vector<1x256x128xbf16> to vector<256x128xbf16>
    %cst_25 = arith.constant dense<0.000000e+00> : vector<128x128xf32>
    %89 = tpu.matmul %86, %88, %cst_25 {dimension_numbers = #tpu.dot_dimension_numbers<[1], [0], [0], [1], [0, 0, 1, 1], [], []>} : vector<128x256xbf16>, vector<256x128xbf16>, vector<128x128xf32> -> vector<128x128xf32>
    %c0_26 = arith.constant 0 : index
    %c0_27 = arith.constant 0 : index
    %c0_28 = arith.constant 0 : index
    %90 = vector.load %arg8[%c0_26, %c0_27, %c0_28] : memref<1x1x128xf32, #tpu.memory_space<vmem>>, vector<1x1x128xf32>
    %91 = vector.shape_cast %90 : vector<1x1x128xf32> to vector<1x128xf32>
    %92 = vector.broadcast %91 : vector<1x128xf32> to vector<128x128xf32>
    %93 = arith.addf %89, %92 : vector<128x128xf32>
    %94 = arith.addf %75, %93 : vector<128x128xf32>
    %c0_29 = arith.constant 0 : index
    %c0_30 = arith.constant 0 : index
    %95 = vector.load %arg9[%c0_29, %c0_30] : memref<128x128xf32, #tpu.memory_space<vmem>>, vector<128x128xf32>
    tpu.vector_store %arg9[%c0_29, %c0_30], %94 {strides = array<i32>} : memref<128x128xf32, #tpu.memory_space<vmem>>, vector<128x128xf32>,
    return
  }
  func.func @transform_0(%arg0: i32, %arg1: i32) -> (i32, i32) {
    %c0_i32 = arith.constant 0 : i32
    %c0_i32_0 = arith.constant 0 : i32
    return %arg0, %c0_i32 : i32, i32
  }
  func.func @transform_1(%arg0: i32, %arg1: i32) -> (i32, i32, i32) {
    %c0_i32 = arith.constant 0 : i32
    %c0_i32_0 = arith.constant 0 : i32
    %c0_i32_1 = arith.constant 0 : i32
    return %arg1, %c0_i32, %c0_i32_0 : i32, i32, i32
  }
  func.func @transform_2(%arg0: i32, %arg1: i32) -> (i32, i32, i32) {
    %c0_i32 = arith.constant 0 : i32
    %c0_i32_0 = arith.constant 0 : i32
    %c0_i32_1 = arith.constant 0 : i32
    return %arg1, %c0_i32, %c0_i32_0 : i32, i32, i32
  }
  func.func @transform_3(%arg0: i32, %arg1: i32) -> (i32, i32, i32) {
    %c0_i32 = arith.constant 0 : i32
    %c0_i32_0 = arith.constant 0 : i32
    %c0_i32_1 = arith.constant 0 : i32
    return %arg1, %c0_i32, %c0_i32_0 : i32, i32, i32
  }
  func.func @transform_4(%arg0: i32, %arg1: i32) -> (i32, i32, i32) {
    %c0_i32 = arith.constant 0 : i32
    %c0_i32_0 = arith.constant 0 : i32
    %c0_i32_1 = arith.constant 0 : i32
    return %arg1, %c0_i32, %c0_i32_0 : i32, i32, i32
  }
  func.func @transform_5(%arg0: i32, %arg1: i32) -> (i32, i32, i32) {
    %c0_i32 = arith.constant 0 : i32
    %c0_i32_0 = arith.constant 0 : i32
    %c0_i32_1 = arith.constant 0 : i32
    return %arg1, %c0_i32, %c0_i32_0 : i32, i32, i32
  }
  func.func @transform_6(%arg0: i32, %arg1: i32) -> (i32, i32, i32) {
    %c0_i32 = arith.constant 0 : i32
    %c0_i32_0 = arith.constant 0 : i32
    %c0_i32_1 = arith.constant 0 : i32
    return %arg1, %c0_i32, %c0_i32_0 : i32, i32, i32
  }
  func.func @transform_7(%arg0: i32, %arg1: i32) -> (i32, i32) {
    %c0_i32 = arith.constant 0 : i32
    %c0_i32_0 = arith.constant 0 : i32
    return %arg0, %c0_i32 : i32, i32
  }
}

</mosaic_0001>

<llo_original>
// kernel: tpu_custom_call.1
$region0: #{tpu_custom_call.1}
  #allocation0 [shape = 'u32[]', space=smem, size = 0x4, offset = 0x4, fixed_abs, tag = 'smem constant byte address 0x4 - core index']
  #allocation1 [shape = 'u32[144,128]{1,0:T(1,128)}', space=vmem, size = 0x12000, scoped, tag = 'internal scratch']
  %s0 = inlined_call_operand.hbm [shape: f32[128,128], index: 0, kind: input, shape index: {}]
  %s1 = inlined_call_operand.hbm [shape: bf16[2,128,384], index: 1, kind: input, shape index: {}]
  %s2 = inlined_call_operand.hbm [shape: bf16[2,128,128], index: 2, kind: input, shape index: {}]
  %s3 = inlined_call_operand.hbm [shape: bf16[2,128,256], index: 3, kind: input, shape index: {}]
  %s4 = inlined_call_operand.vmem [shape: f32[2,1,256], index: 4, kind: input, shape index: {}]
  %s5 = inlined_call_operand.hbm [shape: bf16[2,256,128], index: 5, kind: input, shape index: {}]
  %s6 = inlined_call_operand.vmem [shape: f32[2,1,128], index: 6, kind: input, shape index: {}]
  %s7 = inlined_call_operand.hbm [shape: f32[128,128], index: 7, kind: output, shape index: {}]
  %s8 = sld [smem:[#allocation0]]
  $region85: #{tpu_custom_call.1} parent=0
    _
  %s10 = ssub.s32 1, %s8
  %s11 = scalar_select 0, %s10, %s8
  $region1: #{tpu_custom_call.1} parent=0
    #allocation2 [shape = 'u8[65536]{0}', space=vmem, size = 0x10000, scoped, tag = 'input window, operand 0, single buffered']
    #allocation3 [shape = 's32[2]{0}', space=sflag, size = 0x8, scoped, tag = 'scoped memory for tpu_custom_call.1']
    #allocation4 [shape = 's32[2]{0}', space=sflag, size = 0x8, scoped, tag = 'scoped memory for tpu_custom_call.1']
    #allocation5 [shape = 'u8[196608]{0}', space=vmem, size = 0x30000, scoped, tag = 'input window, operand 1']
    #allocation6 [shape = 's32[2]{0}', space=sflag, size = 0x8, scoped, tag = 'scoped memory for tpu_custom_call.1']
    #allocation7 [shape = 'u8[65536]{0}', space=vmem, size = 0x10000, scoped, tag = 'input window, operand 2']
    #allocation8 [shape = 'u8[131072]{0}', space=vmem, size = 0x20000, scoped, tag = 'input window, operand 3']
    #allocation9 [shape = 's32[2]{0}', space=sflag, size = 0x8, scoped, tag = 'scoped memory for tpu_custom_call.1']
    #allocation10 [shape = 'u8[131072]{0}', space=vmem, size = 0x20000, scoped, tag = 'input window, operand 5']
    #allocation11 [shape = 'u8[65536]{0}', space=vmem, size = 0x10000, scoped, tag = 'output window, operand 0, single buffered']
    %12 = vsyncpa [#allocation3], 0
    %13 = vsyncpa [#allocation6], 0
    %s14 = scalar_lea.sflag [#allocation6], 1
    %15 = vsyncpa %s14, 0
    %16 = vsyncpa [#allocation9], 0
    %s17 = scalar_lea.sflag [#allocation9], 1
    %18 = vsyncpa %s17, 0
    %19 = vsyncpa [#allocation4], 0
    loop: start=0, step=1, limit=4
    $region2: #{tpu_custom_call.1} parent=1 // loop_pre_header
      _
    $region3: #{tpu_custom_call.1} parent=1 // loop_header
      %s21 = sphi 0, %s25
      %p22 = scmp.ge.s32.totalorder %s21, 4
      %s28 = sphi 0, %s40
      %s29 = sphi 0, %s36
      %s30 = sphi 0, %s28
      %s31 = sphi 0, %s29
      %s32 = sphi 0, %s30
      %s33 = sphi 0, %s31
      %s43 = sphi 0, %s45
      %s46 = sphi 0, %s43
      %s47 = sphi 0, %s46
      %s63 = sphi 0, %s47
      %s69 = sphi 0, %s71
      %s72 = sphi 0, %s69
      %s73 = sphi 0, %s72
      %s89 = sphi 0, %s73
      %s95 = sphi 0, %s97
      %s98 = sphi 0, %s95
      %s99 = sphi 0, %s98
      %s115 = sphi 0, %s99
      %s121 = sphi 0, %s123
      %s124 = sphi 0, %s121
      %s125 = sphi 0, %s124
      %s141 = sphi 0, %s125
      %s147 = sphi 0, %s149
      %s150 = sphi 0, %s147
      %s151 = sphi 0, %s150
      %s167 = sphi 0, %s151
      %s173 = sphi 0, %s175
      %s176 = sphi 0, %s173
      %s177 = sphi 0, %s176
      %s193 = sphi 0, %s177
      %s199 = sphi 0, %s201
      %s202 = sphi 0, %s199
      %s203 = sphi 0, %s202
      %s219 = sphi 0, %s203
      %s225 = sphi 0, %s227
      %s228 = sphi 0, %s225
      %s229 = sphi 0, %s228
      %s245 = sphi 0, %s229
    $region4: #{tpu_custom_call.1} parent=1 // loop_header_branch
      %24 = sbr.rel (%p22) target = $region8
    $region5: #{tpu_custom_call.1} parent=1 // loop_body
      %s26 = ssub.s32 %s21, 1
      %s27 = ssub.s32 %s21, 2
      %s34 = sadd.s32 1, %s29
      %p35 = scmp.ge.s32.totalorder %s34, 2
      %s36 = scalar_select %p35, 0, %s34
      %s37 = sadd.s32 1, %s28
      %s38 = scalar_select %p35, %s37, %s28
      %p39 = scmp.ge.s32.totalorder %s38, 1
      %s40 = scalar_select %p39, 0, %s38
      %s41 = ssub.s32 %s28, %s40
      %p42 = scmp.eq.s32.totalorder %s41, 0
      %s44 = sadd.s32 %s43, 1
      %s45 = scalar_select %p42, %s43, %s44
      %p48 = pneg %p42
      %p49 = scmp.eq.s32.totalorder %s21, 1
      %p50 = por %p48, %p49
      %p51 = scmp.ne.s32.totalorder %s43, %s46
      %p52 = scmp.eq.s32.totalorder %s21, 0
      %p53 = por %p51, %p52
      %p54 = scmp.ne.s32.totalorder %s43, %s46
      %p55 = scmp.eq.s32.totalorder %s26, 1
      %p56 = por %p54, %p55
      %p57 = scmp.ne.s32.totalorder %s46, %s47
      %p58 = scmp.eq.s32.totalorder %s26, 0
      %p59 = por %p57, %p58
      %p60 = scmp.ne.s32.totalorder %s46, %s47
      %p61 = scmp.eq.s32.totalorder %s27, 1
      %p62 = por %p60, %p61
      %p64 = scmp.ne.s32.totalorder %s47, %s63
      %p65 = scmp.eq.s32.totalorder %s27, 0
      %p66 = por %p64, %p65
      %s67 = ssub.s32 %s29, %s36
      %p68 = scmp.eq.s32.totalorder %s67, 0
      %s70 = sadd.s32 %s69, 1
      %s71 = scalar_select %p68, %s69, %s70
      %p74 = pneg %p68
      %p75 = scmp.eq.s32.totalorder %s21, 1
      %p76 = por %p74, %p75
      %p77 = scmp.ne.s32.totalorder %s69, %s72
      %p78 = scmp.eq.s32.totalorder %s21, 0
      %p79 = por %p77, %p78
      %p80 = scmp.ne.s32.totalorder %s69, %s72
      %p81 = scmp.eq.s32.totalorder %s26, 1
      %p82 = por %p80, %p81
      %p83 = scmp.ne.s32.totalorder %s72, %s73
      %p84 = scmp.eq.s32.totalorder %s26, 0
      %p85 = por %p83, %p84
      %p86 = scmp.ne.s32.totalorder %s72, %s73
      %p87 = scmp.eq.s32.totalorder %s27, 1
      %p88 = por %p86, %p87
      %p90 = scmp.ne.s32.totalorder %s73, %s89
      %p91 = scmp.eq.s32.totalorder %s27, 0
      %p92 = por %p90, %p91
      %s93 = ssub.s32 %s29, %s36
      %p94 = scmp.eq.s32.totalorder %s93, 0
      %s96 = sadd.s32 %s95, 1
      %s97 = scalar_select %p94, %s95, %s96
      %p100 = pneg %p94
      %p101 = scmp.eq.s32.totalorder %s21, 1
      %p102 = por %p100, %p101
      %p103 = scmp.ne.s32.totalorder %s95, %s98
      %p104 = scmp.eq.s32.totalorder %s21, 0
      %p105 = por %p103, %p104
      %p106 = scmp.ne.s32.totalorder %s95, %s98
      %p107 = scmp.eq.s32.totalorder %s26, 1
      %p108 = por %p106, %p107
      %p109 = scmp.ne.s32.totalorder %s98, %s99
      %p110 = scmp.eq.s32.totalorder %s26, 0
      %p111 = por %p109, %p110
      %p112 = scmp.ne.s32.totalorder %s98, %s99
      %p113 = scmp.eq.s32.totalorder %s27, 1
      %p114 = por %p112, %p113
      %p116 = scmp.ne.s32.totalorder %s99, %s115
      %p117 = scmp.eq.s32.totalorder %s27, 0
      %p118 = por %p116, %p117
      %s119 = ssub.s32 %s29, %s36
      %p120 = scmp.eq.s32.totalorder %s119, 0
      %s122 = sadd.s32 %s121, 1
      %s123 = scalar_select %p120, %s121, %s122
      %p126 = pneg %p120
      %p127 = scmp.eq.s32.totalorder %s21, 1
      %p128 = por %p126, %p127
      %p129 = scmp.ne.s32.totalorder %s121, %s124
      %p130 = scmp.eq.s32.totalorder %s21, 0
      %p131 = por %p129, %p130
      %p132 = scmp.ne.s32.totalorder %s121, %s124
      %p133 = scmp.eq.s32.totalorder %s26, 1
      %p134 = por %p132, %p133
      %p135 = scmp.ne.s32.totalorder %s124, %s125
      %p136 = scmp.eq.s32.totalorder %s26, 0
      %p137 = por %p135, %p136
      %p138 = scmp.ne.s32.totalorder %s124, %s125
      %p139 = scmp.eq.s32.totalorder %s27, 1
      %p140 = por %p138, %p139
      %p142 = scmp.ne.s32.totalorder %s125, %s141
      %p143 = scmp.eq.s32.totalorder %s27, 0
      %p144 = por %p142, %p143
      %s145 = ssub.s32 %s29, %s36
      %p146 = scmp.eq.s32.totalorder %s145, 0
      %s148 = sadd.s32 %s147, 1
      %s149 = scalar_select %p146, %s147, %s148
      %p152 = pneg %p146
      %p153 = scmp.eq.s32.totalorder %s21, 1
      %p154 = por %p152, %p153
      %p155 = scmp.ne.s32.totalorder %s147, %s150
      %p156 = scmp.eq.s32.totalorder %s21, 0
      %p157 = por %p155, %p156
      %p158 = scmp.ne.s32.totalorder %s147, %s150
      %p159 = scmp.eq.s32.totalorder %s26, 1
      %p160 = por %p158, %p159
      %p161 = scmp.ne.s32.totalorder %s150, %s151
      %p162 = scmp.eq.s32.totalorder %s26, 0
      %p163 = por %p161, %p162
      %p164 = scmp.ne.s32.totalorder %s150, %s151
      %p165 = scmp.eq.s32.totalorder %s27, 1
      %p166 = por %p164, %p165
      %p168 = scmp.ne.s32.totalorder %s151, %s167
      %p169 = scmp.eq.s32.totalorder %s27, 0
      %p170 = por %p168, %p169
      %s171 = ssub.s32 %s29, %s36
      %p172 = scmp.eq.s32.totalorder %s171, 0
      %s174 = sadd.s32 %s173, 1
      %s175 = scalar_select %p172, %s173, %s174
      %p178 = pneg %p172
      %p179 = scmp.eq.s32.totalorder %s21, 1
      %p180 = por %p178, %p179
      %p181 = scmp.ne.s32.totalorder %s173, %s176
      %p182 = scmp.eq.s32.totalorder %s21, 0
      %p183 = por %p181, %p182
      %p184 = scmp.ne.s32.totalorder %s173, %s176
      %p185 = scmp.eq.s32.totalorder %s26, 1
      %p186 = por %p184, %p185
      %p187 = scmp.ne.s32.totalorder %s176, %s177
      %p188 = scmp.eq.s32.totalorder %s26, 0
      %p189 = por %p187, %p188
      %p190 = scmp.ne.s32.totalorder %s176, %s177
      %p191 = scmp.eq.s32.totalorder %s27, 1
      %p192 = por %p190, %p191
      %p194 = scmp.ne.s32.totalorder %s177, %s193
      %p195 = scmp.eq.s32.totalorder %s27, 0
      %p196 = por %p194, %p195
      %s197 = ssub.s32 %s29, %s36
      %p198 = scmp.eq.s32.totalorder %s197, 0
      %s200 = sadd.s32 %s199, 1
      %s201 = scalar_select %p198, %s199, %s200
      %p204 = pneg %p198
      %p205 = scmp.eq.s32.totalorder %s21, 1
      %p206 = por %p204, %p205
      %p207 = scmp.ne.s32.totalorder %s199, %s202
      %p208 = scmp.eq.s32.totalorder %s21, 0
      %p209 = por %p207, %p208
      %p210 = scmp.ne.s32.totalorder %s199, %s202
      %p211 = scmp.eq.s32.totalorder %s26, 1
      %p212 = por %p210, %p211
      %p213 = scmp.ne.s32.totalorder %s202, %s203
      %p214 = scmp.eq.s32.totalorder %s26, 0
      %p215 = por %p213, %p214
      %p216 = scmp.ne.s32.totalorder %s202, %s203
      %p217 = scmp.eq.s32.totalorder %s27, 1
      %p218 = por %p216, %p217
      %p220 = scmp.ne.s32.totalorder %s203, %s219
      %p221 = scmp.eq.s32.totalorder %s27, 0
      %p222 = por %p220, %p221
      %s223 = ssub.s32 %s28, %s40
      %p224 = scmp.eq.s32.totalorder %s223, 0
      %s226 = sadd.s32 %s225, 1
      %s227 = scalar_select %p224, %s225, %s226
      %p230 = pneg %p224
      %p231 = scmp.eq.s32.totalorder %s21, 1
      %p232 = por %p230, %p231
      %p233 = scmp.ne.s32.totalorder %s225, %s228
      %p234 = scmp.eq.s32.totalorder %s21, 0
      %p235 = por %p233, %p234
      %p236 = scmp.ne.s32.totalorder %s225, %s228
      %p237 = scmp.eq.s32.totalorder %s26, 1
      %p238 = por %p236, %p237
      %p239 = scmp.ne.s32.totalorder %s228, %s229
      %p240 = scmp.eq.s32.totalorder %s26, 0
      %p241 = por %p239, %p240
      %p242 = scmp.ne.s32.totalorder %s228, %s229
      %p243 = scmp.eq.s32.totalorder %s27, 1
      %p244 = por %p242, %p243
      %p246 = scmp.ne.s32.totalorder %s229, %s245
      %p247 = scmp.eq.s32.totalorder %s27, 0
      %p248 = por %p246, %p247
      %p249 = scmp.le.s32.totalorder 1, %s21
      %p250 = scmp.lt.s32.totalorder %s21, 3
      %p251 = pnand %p249, %p250
      %p252 = pneg %p251
      // Predicated region
      $region9: #{tpu_custom_call.1} parent=5 // pred_check
        _
      $region10: #{tpu_custom_call.1} parent=5 // pred_check_branch
        %254 = sbr.rel (%p251) target = $region12
      $region11: #{tpu_custom_call.1} parent=5 // pred_region
        %s255 = ssub.s32 %s21, 1
        // Predicated region
        $region13: #{tpu_custom_call.1} parent=11 // pred_check
          %p256 = pneg %p59
        $region14: #{tpu_custom_call.1} parent=11 // pred_check_branch
          %258 = sbr.rel (%p256) target = $region16
        $region15: #{tpu_custom_call.1} parent=11 // pred_region
          %s259 = smul.u32 16, %s30
          %s261 = ssub.s32 2048, 2048
          %262 = vsyncadd [#allocation3], %s261
          %s263 = smul.addr %s259, 128
          %s264 = scalar_lea.hbm %s0, %s263
          %s265 = sshll.u32 [#allocation2], 4
          %s266 = int_to_ptr.vmem [resolvable:$true] %s265
          %271 = dma.hbm_to_vmem [thread:$0]  %s264, 2048, %s266, [#allocation3], 128, 128, 8
        $region16: #{tpu_custom_call.1} parent=11 // pred_fallthru
          _
      $region12: #{tpu_custom_call.1} parent=5 // pred_fallthru
        _
      %p272 = scmp.lt.s32.totalorder %s21, 2
      // Predicated region
      $region17: #{tpu_custom_call.1} parent=5 // pred_check
        %p273 = pneg %p272
      $region18: #{tpu_custom_call.1} parent=5 // pred_check_branch
        %275 = sbr.rel (%p273) target = $region20
      $region19: #{tpu_custom_call.1} parent=5 // pred_region
        // Predicated region
        $region21: #{tpu_custom_call.1} parent=19 // pred_check
          %p276 = pneg %p79
        $region22: #{tpu_custom_call.1} parent=19 // pred_check_branch
          %278 = sbr.rel (%p276) target = $region24
        $region23: #{tpu_custom_call.1} parent=19 // pred_region
          %s279 = sand.u32 %s21, 1
          %s280 = scalar_lea.sflag [#allocation6], %s279
          %s281 = sand.u32 %s69, 1
          %s282 = smul.addr %s281, 192
          %s283 = scalar_lea.vmem [#allocation5], %s282
          %s285 = ssub.s32 3072, 3072
          %286 = vsyncadd %s280, %s285
          %s287 = smul.addr %s29, 48
          %s288 = smul.addr %s287, 64
          %s289 = scalar_lea.hbm %s1, %s288
          %s290 = sshll.u32 %s283, 4
          %s291 = int_to_ptr.vmem [resolvable:$true] %s290
          %296 = dma.hbm_to_vmem [thread:$0]  %s289, 3072, %s291, %s280, 192, 192, 12
        $region24: #{tpu_custom_call.1} parent=19 // pred_fallthru
          _
        // Predicated region
        $region25: #{tpu_custom_call.1} parent=19 // pred_check
          %p297 = pneg %p105
        $region26: #{tpu_custom_call.1} parent=19 // pred_check_branch
          %299 = sbr.rel (%p297) target = $region28
        $region27: #{tpu_custom_call.1} parent=19 // pred_region
          %s300 = sand.u32 %s21, 1
          %s301 = scalar_lea.sflag [#allocation6], %s300
          %s302 = sand.u32 %s95, 1
          %s303 = smul.addr %s302, 64
          %s304 = scalar_lea.vmem [#allocation7], %s303
          %s306 = ssub.s32 1024, 1024
          %307 = vsyncadd %s301, %s306
          %s308 = smul.addr %s29, 16
          %s309 = smul.addr %s308, 64
          %s310 = scalar_lea.hbm %s2, %s309
          %s311 = sshll.u32 %s304, 4
          %s312 = int_to_ptr.vmem [resolvable:$true] %s311
          %317 = dma.hbm_to_vmem [thread:$0]  %s310, 1024, %s312, %s301, 64, 64, 4
        $region28: #{tpu_custom_call.1} parent=19 // pred_fallthru
          _
        // Predicated region
        $region29: #{tpu_custom_call.1} parent=19 // pred_check
          %p318 = pneg %p131
        $region30: #{tpu_custom_call.1} parent=19 // pred_check_branch
          %320 = sbr.rel (%p318) target = $region32
        $region31: #{tpu_custom_call.1} parent=19 // pred_region
          %s321 = sand.u32 %s21, 1
          %s322 = scalar_lea.sflag [#allocation9], %s321
          %s323 = sand.u32 %s121, 1
          %s324 = smul.addr %s323, 128
          %s325 = scalar_lea.vmem [#allocation8], %s324
          %s327 = ssub.s32 2048, 2048
          %328 = vsyncadd %s322, %s327
          %s329 = smul.addr %s29, 32
          %s330 = smul.addr %s329, 64
          %s331 = scalar_lea.hbm %s3, %s330
          %s332 = sshll.u32 %s325, 4
          %s333 = int_to_ptr.vmem [resolvable:$true] %s332
          %338 = dma.hbm_to_vmem [thread:$0]  %s331, 2048, %s333, %s322, 128, 128, 8
        $region32: #{tpu_custom_call.1} parent=19 // pred_fallthru
          _
        // Predicated region
        $region33: #{tpu_custom_call.1} parent=19 // pred_check
          %p339 = pneg %p157
        $region34: #{tpu_custom_call.1} parent=19 // pred_check_branch
          %341 = sbr.rel (%p339) target = $region36
        $region35: #{tpu_custom_call.1} parent=19 // pred_region
          %p342 = scmp.lt.s32.totalorder %s29, 1
          %s343 = scalar_select %p342, %s29, 1
          %s344 = smul.addr %s343, 2
          %s345 = scalar_lea.vmem %s4, %s344
        $region36: #{tpu_custom_call.1} parent=19 // pred_fallthru
          _
        // Predicated region
        $region37: #{tpu_custom_call.1} parent=19 // pred_check
          %p346 = pneg %p183
        $region38: #{tpu_custom_call.1} parent=19 // pred_check_branch
          %348 = sbr.rel (%p346) target = $region40
        $region39: #{tpu_custom_call.1} parent=19 // pred_region
          %s349 = sand.u32 %s21, 1
          %s350 = scalar_lea.sflag [#allocation9], %s349
          %s351 = sand.u32 %s173, 1
          %s352 = smul.addr %s351, 128
          %s353 = scalar_lea.vmem [#allocation10], %s352
          %s355 = ssub.s32 2048, 2048
          %356 = vsyncadd %s350, %s355
          %s357 = smul.addr %s29, 32
          %s358 = smul.addr %s357, 64
          %s359 = scalar_lea.hbm %s5, %s358
          %s360 = sshll.u32 %s353, 4
          %s361 = int_to_ptr.vmem [resolvable:$true] %s360
          %366 = dma.hbm_to_vmem [thread:$0]  %s359, 2048, %s361, %s350, 64, 64, 4
        $region40: #{tpu_custom_call.1} parent=19 // pred_fallthru
          _
        // Predicated region
        $region41: #{tpu_custom_call.1} parent=19 // pred_check
          %p367 = pneg %p209
        $region42: #{tpu_custom_call.1} parent=19 // pred_check_branch
          %369 = sbr.rel (%p367) target = $region44
        $region43: #{tpu_custom_call.1} parent=19 // pred_region
          %p370 = scmp.lt.s32.totalorder %s29, 1
          %s371 = scalar_select %p370, %s29, 1
          %s372 = scalar_lea.vmem %s6, %s371
        $region44: #{tpu_custom_call.1} parent=19 // pred_fallthru
          _
      $region20: #{tpu_custom_call.1} parent=5 // pred_fallthru
        _
      %p373 = scmp.le.s32.totalorder 1, %s21
      %p374 = scmp.lt.s32.totalorder %s21, 3
      %p375 = pnand %p373, %p374
      %p376 = pneg %p375
      // Predicated region
      $region45: #{tpu_custom_call.1} parent=5 // pred_check
        _
      $region46: #{tpu_custom_call.1} parent=5 // pred_check_branch
        %378 = sbr.rel (%p375) target = $region48
      $region47: #{tpu_custom_call.1} parent=5 // pred_region
        %s379 = ssub.s32 %s21, 1
        // Predicated region
        $region49: #{tpu_custom_call.1} parent=47 // pred_check
          %p380 = pneg %p59
        $region50: #{tpu_custom_call.1} parent=47 // pred_check_branch
          %382 = sbr.rel (%p380) target = $region52
        $region51: #{tpu_custom_call.1} parent=47 // pred_region
          %383 = dma.done [#allocation3], 2048
        $region52: #{tpu_custom_call.1} parent=47 // pred_fallthru
          _
        %s384 = sand.u32 %s26, 1
        %s385 = scalar_lea.sflag [#allocation6], %s384
        %s386 = sand.u32 %s72, 1
        %s387 = smul.addr %s386, 192
        %s388 = scalar_lea.vmem [#allocation5], %s387
        // Predicated region
        $region53: #{tpu_custom_call.1} parent=47 // pred_check
          %p389 = pneg %p85
        $region54: #{tpu_custom_call.1} parent=47 // pred_check_branch
          %391 = sbr.rel (%p389) target = $region56
        $region55: #{tpu_custom_call.1} parent=47 // pred_region
          %392 = dma.done %s385, 3072
        $region56: #{tpu_custom_call.1} parent=47 // pred_fallthru
          _
        %s393 = sand.u32 %s26, 1
        %s394 = scalar_lea.sflag [#allocation6], %s393
        %s395 = sand.u32 %s98, 1
        %s396 = smul.addr %s395, 64
        %s397 = scalar_lea.vmem [#allocation7], %s396
        // Predicated region
        $region57: #{tpu_custom_call.1} parent=47 // pred_check
          %p398 = pneg %p111
        $region58: #{tpu_custom_call.1} parent=47 // pred_check_branch
          %400 = sbr.rel (%p398) target = $region60
        $region59: #{tpu_custom_call.1} parent=47 // pred_region
          %401 = dma.done %s394, 1024
        $region60: #{tpu_custom_call.1} parent=47 // pred_fallthru
          _
        %s402 = sand.u32 %s26, 1
        %s403 = scalar_lea.sflag [#allocation9], %s402
        %s404 = sand.u32 %s124, 1
        %s405 = smul.addr %s404, 128
        %s406 = scalar_lea.vmem [#allocation8], %s405
        // Predicated region
        $region61: #{tpu_custom_call.1} parent=47 // pred_check
          %p407 = pneg %p137
        $region62: #{tpu_custom_call.1} parent=47 // pred_check_branch
          %409 = sbr.rel (%p407) target = $region64
        $region63: #{tpu_custom_call.1} parent=47 // pred_region
          %410 = dma.done %s403, 2048
        $region64: #{tpu_custom_call.1} parent=47 // pred_fallthru
          _
        %s411 = sand.u32 %s26, 1
        %s412 = scalar_lea.sflag [#allocation9], %s411
        %s413 = sand.u32 %s176, 1
        %s414 = smul.addr %s413, 128
        %s415 = scalar_lea.vmem [#allocation10], %s414
        // Predicated region
        $region65: #{tpu_custom_call.1} parent=47 // pred_check
          %p416 = pneg %p189
        $region66: #{tpu_custom_call.1} parent=47 // pred_check_branch
          %418 = sbr.rel (%p416) target = $region68
        $region67: #{tpu_custom_call.1} parent=47 // pred_region
          %419 = dma.done %s412, 2048
        $region68: #{tpu_custom_call.1} parent=47 // pred_fallthru
          _
        %p420 = pneg %p59
        %p421 = pneg %p56
        %s422 = sand.u32 %s26, 1
        %s423 = scalar_lea.sflag [#allocation6], %s422
        %s424 = sand.u32 %s72, 1
        %s425 = smul.addr %s424, 192
        %s426 = scalar_lea.vmem [#allocation5], %s425
        %p427 = pneg %p85
        %p428 = pneg %p82
        %s429 = sand.u32 %s26, 1
        %s430 = scalar_lea.sflag [#allocation6], %s429
        %s431 = sand.u32 %s98, 1
        %s432 = smul.addr %s431, 64
        %s433 = scalar_lea.vmem [#allocation7], %s432
        %p434 = pneg %p111
        %p435 = pneg %p108
        %s436 = sand.u32 %s26, 1
        %s437 = scalar_lea.sflag [#allocation9], %s436
        %s438 = sand.u32 %s124, 1
        %s439 = smul.addr %s438, 128
        %s440 = scalar_lea.vmem [#allocation8], %s439
        %p441 = pneg %p137
        %p442 = pneg %p134
        %p443 = scmp.lt.s32.totalorder %s31, 1
        %s444 = scalar_select %p443, %s31, 1
        %s445 = smul.addr %s444, 2
        %s446 = scalar_lea.vmem %s4, %s445
        %p447 = pneg %p163
        %p448 = pneg %p160
        %s449 = sand.u32 %s26, 1
        %s450 = scalar_lea.sflag [#allocation9], %s449
        %s451 = sand.u32 %s176, 1
        %s452 = smul.addr %s451, 128
        %s453 = scalar_lea.vmem [#allocation10], %s452
        %p454 = pneg %p189
        %p455 = pneg %p186
        %p456 = scmp.lt.s32.totalorder %s31, 1
        %s457 = scalar_select %p456, %s31, 1
        %s458 = scalar_lea.vmem %s6, %s457
        %p459 = pneg %p215
        %p460 = pneg %p212
        %p461 = pneg %p241
        %p462 = pneg %p238
        %s463 = smul.u32 16, %s30
        %p464 = scmp.lt.s32.totalorder %s31, 1
        %s465 = scalar_select %p464, %s31, 1
        %s466 = smul.addr %s465, 2
        %s467 = scalar_lea.vmem %s4, %s466
        %p468 = scmp.lt.s32.totalorder %s31, 1
        %s469 = scalar_select %p468, %s31, 1
        %s470 = scalar_lea.vmem %s6, %s469
        %s471 = smul.u32 16, %s30
        %p473 = scmp.eq.s32.totalorder %s31, 0
        // Predicated region
        $region69: #{tpu_custom_call.1} parent=47 // pred_check
          %p474 = pneg %p473
        $region70: #{tpu_custom_call.1} parent=47 // pred_check_branch
          %476 = sbr.rel (%p474) target = $region72
        $region71: #{tpu_custom_call.1} parent=47 // pred_region
          %v477 = vld [vmem:[#allocation2] sm:$0xff]
          %v478 = vld [vmem:[#allocation2 + $0x8] sm:$0xff]
          %v479 = vld [vmem:[#allocation2 + $0x10] sm:$0xff]
          %v480 = vld [vmem:[#allocation2 + $0x18] sm:$0xff]
          %v481 = vld [vmem:[#allocation2 + $0x20] sm:$0xff]
          %v482 = vld [vmem:[#allocation2 + $0x28] sm:$0xff]
          %v483 = vld [vmem:[#allocation2 + $0x30] sm:$0xff]
          %v484 = vld [vmem:[#allocation2 + $0x38] sm:$0xff]
          %v485 = vld [vmem:[#allocation2 + $0x40] sm:$0xff]
          %v486 = vld [vmem:[#allocation2 + $0x48] sm:$0xff]
          %v487 = vld [vmem:[#allocation2 + $0x50] sm:$0xff]
          %v488 = vld [vmem:[#allocation2 + $0x58] sm:$0xff]
          %v489 = vld [vmem:[#allocation2 + $0x60] sm:$0xff]
          %v490 = vld [vmem:[#allocation2 + $0x68] sm:$0xff]
          %v491 = vld [vmem:[#allocation2 + $0x70] sm:$0xff]
          %v492 = vld [vmem:[#allocation2 + $0x78] sm:$0xff]
          %493 = vst [vmem:[#allocation11] sm:$0xff] %v477
          %494 = vst [vmem:[#allocation11 + $0x8] sm:$0xff] %v478
          %495 = vst [vmem:[#allocation11 + $0x10] sm:$0xff] %v479
          %496 = vst [vmem:[#allocation11 + $0x18] sm:$0xff] %v480
          %497 = vst [vmem:[#allocation11 + $0x20] sm:$0xff] %v481
          %498 = vst [vmem:[#allocation11 + $0x28] sm:$0xff] %v482
          %499 = vst [vmem:[#allocation11 + $0x30] sm:$0xff] %v483
          %500 = vst [vmem:[#allocation11 + $0x38] sm:$0xff] %v484
          %501 = vst [vmem:[#allocation11 + $0x40] sm:$0xff] %v485
          %502 = vst [vmem:[#allocation11 + $0x48] sm:$0xff] %v486
          %503 = vst [vmem:[#allocation11 + $0x50] sm:$0xff] %v487
          %504 = vst [vmem:[#allocation11 + $0x58] sm:$0xff] %v488
          %505 = vst [vmem:[#allocation11 + $0x60] sm:$0xff] %v489
          %506 = vst [vmem:[#allocation11 + $0x68] sm:$0xff] %v490
          %507 = vst [vmem:[#allocation11 + $0x70] sm:$0xff] %v491
          %508 = vst [vmem:[#allocation11 + $0x78] sm:$0xff] %v492
        $region72: #{tpu_custom_call.1} parent=47 // pred_fallthru
          _
        %v509 = vld [vmem:[#allocation11] sm:$0xff]
        %v510 = vld [vmem:[#allocation11 + $0x8] sm:$0xff]
        %v511 = vld [vmem:[#allocation11 + $0x10] sm:$0xff]
        %v512 = vld [vmem:[#allocation11 + $0x18] sm:$0xff]
        %v513 = vld [vmem:[#allocation11 + $0x20] sm:$0xff]
        %v514 = vld [vmem:[#allocation11 + $0x28] sm:$0xff]
        %v515 = vld [vmem:[#allocation11 + $0x30] sm:$0xff]
        %v516 = vld [vmem:[#allocation11 + $0x38] sm:$0xff]
        %v517 = vld [vmem:[#allocation11 + $0x40] sm:$0xff]
        %v518 = vld [vmem:[#allocation11 + $0x48] sm:$0xff]
        %v519 = vld [vmem:[#allocation11 + $0x50] sm:$0xff]
        %v520 = vld [vmem:[#allocation11 + $0x58] sm:$0xff]
        %v521 = vld [vmem:[#allocation11 + $0x60] sm:$0xff]
        %v522 = vld [vmem:[#allocation11 + $0x68] sm:$0xff]
        %v523 = vld [vmem:[#allocation11 + $0x70] sm:$0xff]
        %v524 = vld [vmem:[#allocation11 + $0x78] sm:$0xff]
        %v525 = vpack.c.bf16 %v510, %v509
        %v526 = vpack.c.bf16 %v512, %v511
        %v527 = vpack.c.bf16 %v514, %v513
        %v528 = vpack.c.bf16 %v516, %v515
        %v529 = vpack.c.bf16 %v518, %v517
        %v530 = vpack.c.bf16 %v520, %v519
        %v531 = vpack.c.bf16 %v522, %v521
        %v532 = vpack.c.bf16 %v524, %v523
        %v533 = vld [vmem:[%s388] sm:$0xff]
        %v534 = vld [vmem:[%s388 + $0x8] sm:$0xf]
        %v535 = vld [vmem:[%s388 + $0xc] sm:$0xff]
        %v536 = vld [vmem:[%s388 + $0x14] sm:$0xf]
        %v537 = vld [vmem:[%s388 + $0x18] sm:$0xff]
        %v538 = vld [vmem:[%s388 + $0x20] sm:$0xf]
        %v539 = vld [vmem:[%s388 + $0x24] sm:$0xff]
        %v540 = vld [vmem:[%s388 + $0x2c] sm:$0xf]
        %v541 = vld [vmem:[%s388 + $0x30] sm:$0xff]
        %v542 = vld [vmem:[%s388 + $0x38] sm:$0xf]
        %v543 = vld [vmem:[%s388 + $0x3c] sm:$0xff]
        %v544 = vld [vmem:[%s388 + $0x44] sm:$0xf]
        %v545 = vld [vmem:[%s388 + $0x48] sm:$0xff]
        %v546 = vld [vmem:[%s388 + $0x50] sm:$0xf]
        %v547 = vld [vmem:[%s388 + $0x54] sm:$0xff]
        %v548 = vld [vmem:[%s388 + $0x5c] sm:$0xf]
        %v549 = vld [vmem:[%s388 + $0x60] sm:$0xff]
        %v550 = vld [vmem:[%s388 + $0x68] sm:$0xf]
        %v551 = vld [vmem:[%s388 + $0x6c] sm:$0xff]
        %v552 = vld [vmem:[%s388 + $0x74] sm:$0xf]
        %v553 = vld [vmem:[%s388 + $0x78] sm:$0xff]
        %v554 = vld [vmem:[%s388 + $0x80] sm:$0xf]
        %v555 = vld [vmem:[%s388 + $0x84] sm:$0xff]
        %v556 = vld [vmem:[%s388 + $0x8c] sm:$0xf]
        %v557 = vld [vmem:[%s388 + $0x90] sm:$0xff]
        %v558 = vld [vmem:[%s388 + $0x98] sm:$0xf]
        %v559 = vld [vmem:[%s388 + $0x9c] sm:$0xff]
        %v560 = vld [vmem:[%s388 + $0xa4] sm:$0xf]
        %v561 = vld [vmem:[%s388 + $0xa8] sm:$0xff]
        %v562 = vld [vmem:[%s388 + $0xb0] sm:$0xf]
        %v563 = vld [vmem:[%s388 + $0xb4] sm:$0xff]
        %v564 = vld [vmem:[%s388 + $0xbc] sm:$0xf]
        %v597 = vunpack.c.l.b16 %v533
        %v598 = vunpack.c.h.b16 %v533
        %v599 = vunpack.c.l.b16 %v534
        %v600 = vunpack.c.l.b16 %v535
        %v601 = vunpack.c.h.b16 %v535
        %v602 = vunpack.c.l.b16 %v536
        %v603 = vunpack.c.l.b16 %v537
        %v604 = vunpack.c.h.b16 %v537
        %v605 = vunpack.c.l.b16 %v538
        %v606 = vunpack.c.l.b16 %v539
        %v607 = vunpack.c.h.b16 %v539
        %v608 = vunpack.c.l.b16 %v540
        %v609 = vunpack.c.l.b16 %v541
        %v610 = vunpack.c.h.b16 %v541
        %v611 = vunpack.c.l.b16 %v542
        %v612 = vunpack.c.l.b16 %v543
        %v613 = vunpack.c.h.b16 %v543
        %v614 = vunpack.c.l.b16 %v544
        %v615 = vunpack.c.l.b16 %v545
        %v616 = vunpack.c.h.b16 %v545
        %v617 = vunpack.c.l.b16 %v546
        %v618 = vunpack.c.l.b16 %v547
        %v619 = vunpack.c.h.b16 %v547
        %v620 = vunpack.c.l.b16 %v548
        %v621 = vunpack.c.l.b16 %v549
        %v622 = vunpack.c.h.b16 %v549
        %v623 = vunpack.c.l.b16 %v550
        %v624 = vunpack.c.l.b16 %v551
        %v625 = vunpack.c.h.b16 %v551
        %v626 = vunpack.c.l.b16 %v552
        %v627 = vunpack.c.l.b16 %v553
        %v628 = vunpack.c.h.b16 %v553
        %v629 = vunpack.c.l.b16 %v554
        %v630 = vunpack.c.l.b16 %v555
        %v631 = vunpack.c.h.b16 %v555
        %v632 = vunpack.c.l.b16 %v556
        %v633 = vunpack.c.l.b16 %v557
        %v634 = vunpack.c.h.b16 %v557
        %v635 = vunpack.c.l.b16 %v558
        %v636 = vunpack.c.l.b16 %v559
        %v637 = vunpack.c.h.b16 %v559
        %v638 = vunpack.c.l.b16 %v560
        %v639 = vunpack.c.l.b16 %v561
        %v640 = vunpack.c.h.b16 %v561
        %v641 = vunpack.c.l.b16 %v562
        %v642 = vunpack.c.l.b16 %v563
        %v643 = vunpack.c.h.b16 %v563
        %v644 = vunpack.c.l.b16 %v564
        %v645 = vpack.c.b16 %v600, %v597
        %v646 = vpack.c.b16 %v601, %v598
        %v647 = vpack.c.b16 %v602, %v599
        %v648 = vpack.c.b16 %v606, %v603
        %v649 = vpack.c.b16 %v607, %v604
        %v650 = vpack.c.b16 %v608, %v605
        %v651 = vpack.c.b16 %v612, %v609
        %v652 = vpack.c.b16 %v613, %v610
        %v653 = vpack.c.b16 %v614, %v611
        %v654 = vpack.c.b16 %v618, %v615
        %v655 = vpack.c.b16 %v619, %v616
        %v656 = vpack.c.b16 %v620, %v617
        %v657 = vpack.c.b16 %v624, %v621
        %v658 = vpack.c.b16 %v625, %v622
        %v659 = vpack.c.b16 %v626, %v623
        %v660 = vpack.c.b16 %v630, %v627
        %v661 = vpack.c.b16 %v631, %v628
        %v662 = vpack.c.b16 %v632, %v629
        %v663 = vpack.c.b16 %v636, %v633
        %v664 = vpack.c.b16 %v637, %v634
        %v665 = vpack.c.b16 %v638, %v635
        %v666 = vpack.c.b16 %v642, %v639
        %v667 = vpack.c.b16 %v643, %v640
        %v668 = vpack.c.b16 %v644, %v641
        %693 = vmatprep.subr.bf16.mxu0 %v667
        %694 = vmatpush1.bf16.msra.mxu0 %v666
        %695 = vmatprep.subr.bf16.mxu0 %v664
        %696 = vmatpush1.bf16.msra.mxu0 %v663
        %697 = vmatprep.subr.bf16.mxu0 %v661
        %698 = vmatpush1.bf16.msra.mxu0 %v660
        %699 = vmatprep.subr.bf16.mxu0 %v658
        %700 = vmatpush1.bf16.msra.mxu0 %v657
        %701 = vmatprep.subr.bf16.mxu0 %v655
        %702 = vmatpush1.bf16.msra.mxu0 %v654
        %703 = vmatprep.subr.bf16.mxu0 %v652
        %704 = vmatpush1.bf16.msra.mxu0 %v651
        %705 = vmatprep.subr.bf16.mxu0 %v649
        %706 = vmatpush1.bf16.msra.mxu0 %v648
        %707 = vmatprep.subr.bf16.mxu0 %v646
        %708 = vmatpush1.bf16.msra.mxu0 %v645
        %709 = vmatprep.subr.bf16.mxu0 0
        %710 = vmatpush2.bf16.msra.mxu0 0
        %711 = vmatprep.subr.bf16.mxu0 0
        %712 = vmatpush2.bf16.msra.mxu0 0
        %713 = vmatprep.subr.bf16.mxu0 0
        %714 = vmatpush2.bf16.msra.mxu0 0
        %715 = vmatprep.subr.bf16.mxu0 0
        %716 = vmatpush2.bf16.msra.mxu0 0
        %717 = vmatprep.subr.bf16.mxu0 0
        %718 = vmatpush2.bf16.msra.mxu0 0
        %719 = vmatprep.subr.bf16.mxu0 0
        %720 = vmatpush2.bf16.msra.mxu0 0
        %721 = vmatprep.subr.bf16.mxu0 0
        %722 = vmatpush2.bf16.msra.mxu0 0
        %723 = vmatprep.subr.bf16.mxu0 0
        %724 = vmatpush2.bf16.msra.mxu0 0
        %725 = vmatprep.mubr.bf16.mxu0 0
        %726 = vmatmul.mubr.bf16.gmra.mxu0 %v525
        %v727 = vpop.f32.mrf.mxu0
        %v728 = vadd.f32 0.0, %v727
        %v729 = vpop.f32.mrf.mxu0
        %v730 = vadd.f32 0.0, %v729
        %v731 = vpop.f32.mrf.mxu0
        %v732 = vadd.f32 0.0, %v731
        %v733 = vpop.f32.mrf.mxu0
        %v734 = vadd.f32 0.0, %v733
        %735 = vmatprep.mubr.bf16.mxu0 0
        %736 = vmatmul.mubr.bf16.gmra.mxu0 %v526
        %v737 = vpop.f32.mrf.mxu0
        %v738 = vadd.f32 0.0, %v737
        %v739 = vpop.f32.mrf.mxu0
        %v740 = vadd.f32 0.0, %v739
        %v741 = vpop.f32.mrf.mxu0
        %v742 = vadd.f32 0.0, %v741
        %v743 = vpop.f32.mrf.mxu0
        %v744 = vadd.f32 0.0, %v743
        %745 = vmatprep.mubr.bf16.mxu0 0
        %746 = vmatmul.mubr.bf16.gmra.mxu0 %v527
        %v747 = vpop.f32.mrf.mxu0
        %v748 = vadd.f32 0.0, %v747
        %v749 = vpop.f32.mrf.mxu0
        %v750 = vadd.f32 0.0, %v749
        %v751 = vpop.f32.mrf.mxu0
        %v752 = vadd.f32 0.0, %v751
        %v753 = vpop.f32.mrf.mxu0
        %v754 = vadd.f32 0.0, %v753
        %755 = vmatprep.mubr.bf16.mxu0 0
        %756 = vmatmul.mubr.bf16.gmra.mxu0 %v528
        %v757 = vpop.f32.mrf.mxu0
        %v758 = vadd.f32 0.0, %v757
        %v759 = vpop.f32.mrf.mxu0
        %v760 = vadd.f32 0.0, %v759
        %v761 = vpop.f32.mrf.mxu0
        %v762 = vadd.f32 0.0, %v761
        %v763 = vpop.f32.mrf.mxu0
        %v764 = vadd.f32 0.0, %v763
        %765 = vmatprep.mubr.bf16.mxu0 0
        %766 = vmatmul.mubr.bf16.gmra.mxu0 %v529
        %v767 = vpop.f32.mrf.mxu0
        %v768 = vadd.f32 0.0, %v767
        %v769 = vpop.f32.mrf.mxu0
        %v770 = vadd.f32 0.0, %v769
        %v771 = vpop.f32.mrf.mxu0
        %v772 = vadd.f32 0.0, %v771
        %v773 = vpop.f32.mrf.mxu0
        %v774 = vadd.f32 0.0, %v773
        %775 = vmatprep.mubr.bf16.mxu0 0
        %776 = vmatmul.mubr.bf16.gmra.mxu0 %v530
        %v777 = vpop.f32.mrf.mxu0
        %v778 = vadd.f32 0.0, %v777
        %v779 = vpop.f32.mrf.mxu0
        %v780 = vadd.f32 0.0, %v779
        %v781 = vpop.f32.mrf.mxu0
        %v782 = vadd.f32 0.0, %v781
        %v783 = vpop.f32.mrf.mxu0
        %v784 = vadd.f32 0.0, %v783
        %785 = vmatprep.mubr.bf16.mxu0 0
        %786 = vmatmul.mubr.bf16.gmra.mxu0 %v531
        %v787 = vpop.f32.mrf.mxu0
        %v788 = vadd.f32 0.0, %v787
        %v789 = vpop.f32.mrf.mxu0
        %v790 = vadd.f32 0.0, %v789
        %v791 = vpop.f32.mrf.mxu0
        %v792 = vadd.f32 0.0, %v791
        %v793 = vpop.f32.mrf.mxu0
        %v794 = vadd.f32 0.0, %v793
        %795 = vmatprep.mubr.bf16.mxu0 0
        %796 = vmatmul.mubr.bf16.gmra.mxu0 %v532
        %v797 = vpop.f32.mrf.mxu0
        %v798 = vadd.f32 0.0, %v797
        %v799 = vpop.f32.mrf.mxu0
        %v800 = vadd.f32 0.0, %v799
        %v801 = vpop.f32.mrf.mxu0
        %v802 = vadd.f32 0.0, %v801
        %v803 = vpop.f32.mrf.mxu0
        %v804 = vadd.f32 0.0, %v803
        %805 = vdwg.mxu0
        %806 = vmatprep.subr.bf16.mxu0 0
        %807 = vmatpush1.bf16.msra.mxu0 %v668
        %808 = vmatprep.subr.bf16.mxu0 0
        %809 = vmatpush1.bf16.msra.mxu0 %v665
        %810 = vmatprep.subr.bf16.mxu0 0
        %811 = vmatpush1.bf16.msra.mxu0 %v662
        %812 = vmatprep.subr.bf16.mxu0 0
        %813 = vmatpush1.bf16.msra.mxu0 %v659
        %814 = vmatprep.subr.bf16.mxu0 0
        %815 = vmatpush1.bf16.msra.mxu0 %v656
        %816 = vmatprep.subr.bf16.mxu0 0
        %817 = vmatpush1.bf16.msra.mxu0 %v653
        %818 = vmatprep.subr.bf16.mxu0 0
        %819 = vmatpush1.bf16.msra.mxu0 %v650
        %820 = vmatprep.subr.bf16.mxu0 0
        %821 = vmatpush1.bf16.msra.mxu0 %v647
        %822 = vmatprep.subr.bf16.mxu0 0
        %823 = vmatpush2.bf16.msra.mxu0 0
        %824 = vmatprep.subr.bf16.mxu0 0
        %825 = vmatpush2.bf16.msra.mxu0 0
        %826 = vmatprep.subr.bf16.mxu0 0
        %827 = vmatpush2.bf16.msra.mxu0 0
        %828 = vmatprep.subr.bf16.mxu0 0
        %829 = vmatpush2.bf16.msra.mxu0 0
        %830 = vmatprep.subr.bf16.mxu0 0
        %831 = vmatpush2.bf16.msra.mxu0 0
        %832 = vmatprep.subr.bf16.mxu0 0
        %833 = vmatpush2.bf16.msra.mxu0 0
        %834 = vmatprep.subr.bf16.mxu0 0
        %835 = vmatpush2.bf16.msra.mxu0 0
        %836 = vmatprep.subr.bf16.mxu0 0
        %837 = vmatpush2.bf16.msra.mxu0 0
        %838 = vmatprep.mubr.bf16.mxu0 0
        %839 = vmatmul.mubr.bf16.gmra.mxu0 %v525
        %v840 = vpop.f32.mrf.mxu0
        %v841 = vadd.f32 0.0, %v840
        %v842 = vpop.f32.mrf.mxu0
        %v843 = vpop.f32.mrf.mxu0
        %v844 = vadd.f32 0.0, %v843
        %v845 = vpop.f32.mrf.mxu0
        %846 = vmatprep.mubr.bf16.mxu0 0
        %847 = vmatmul.mubr.bf16.gmra.mxu0 %v526
        %v848 = vpop.f32.mrf.mxu0
        %v849 = vadd.f32 0.0, %v848
        %v850 = vpop.f32.mrf.mxu0
        %v851 = vpop.f32.mrf.mxu0
        %v852 = vadd.f32 0.0, %v851
        %v853 = vpop.f32.mrf.mxu0
        %854 = vmatprep.mubr.bf16.mxu0 0
        %855 = vmatmul.mubr.bf16.gmra.mxu0 %v527
        %v856 = vpop.f32.mrf.mxu0
        %v857 = vadd.f32 0.0, %v856
        %v858 = vpop.f32.mrf.mxu0
        %v859 = vpop.f32.mrf.mxu0
        %v860 = vadd.f32 0.0, %v859
        %v861 = vpop.f32.mrf.mxu0
        %862 = vmatprep.mubr.bf16.mxu0 0
        %863 = vmatmul.mubr.bf16.gmra.mxu0 %v528
        %v864 = vpop.f32.mrf.mxu0
        %v865 = vadd.f32 0.0, %v864
        %v866 = vpop.f32.mrf.mxu0
        %v867 = vpop.f32.mrf.mxu0
        %v868 = vadd.f32 0.0, %v867
        %v869 = vpop.f32.mrf.mxu0
        %870 = vmatprep.mubr.bf16.mxu0 0
        %871 = vmatmul.mubr.bf16.gmra.mxu0 %v529
        %v872 = vpop.f32.mrf.mxu0
        %v873 = vadd.f32 0.0, %v872
        %v874 = vpop.f32.mrf.mxu0
        %v875 = vpop.f32.mrf.mxu0
        %v876 = vadd.f32 0.0, %v875
        %v877 = vpop.f32.mrf.mxu0
        %878 = vmatprep.mubr.bf16.mxu0 0
        %879 = vmatmul.mubr.bf16.gmra.mxu0 %v530
        %v880 = vpop.f32.mrf.mxu0
        %v881 = vadd.f32 0.0, %v880
        %v882 = vpop.f32.mrf.mxu0
        %v883 = vpop.f32.mrf.mxu0
        %v884 = vadd.f32 0.0, %v883
        %v885 = vpop.f32.mrf.mxu0
        %886 = vmatprep.mubr.bf16.mxu0 0
        %887 = vmatmul.mubr.bf16.gmra.mxu0 %v531
        %v888 = vpop.f32.mrf.mxu0
        %v889 = vadd.f32 0.0, %v888
        %v890 = vpop.f32.mrf.mxu0
        %v891 = vpop.f32.mrf.mxu0
        %v892 = vadd.f32 0.0, %v891
        %v893 = vpop.f32.mrf.mxu0
        %894 = vmatprep.mubr.bf16.mxu0 0
        %895 = vmatmul.mubr.bf16.gmra.mxu0 %v532
        %v896 = vpop.f32.mrf.mxu0
        %v897 = vadd.f32 0.0, %v896
        %v898 = vpop.f32.mrf.mxu0
        %v899 = vpop.f32.mrf.mxu0
        %v900 = vadd.f32 0.0, %v899
        %v901 = vpop.f32.mrf.mxu0
        %902 = vdwg.mxu0
        %919 = vrot.lane.b32.xlu0 %v728, 96
        %v920 = vpop.permute.xlu0 %919
        %921 = vrot.lane.b32.xlu0 %v732, 96
        %v922 = vpop.permute.xlu0 %921
        %923 = vrot.lane.b32.xlu0 %v738, 96
        %v924 = vpop.permute.xlu0 %923
        %925 = vrot.lane.b32.xlu0 %v742, 96
        %v926 = vpop.permute.xlu0 %925
        %927 = vrot.lane.b32.xlu0 %v748, 96
        %v928 = vpop.permute.xlu0 %927
        %929 = vrot.lane.b32.xlu0 %v752, 96
        %v930 = vpop.permute.xlu0 %929
        %931 = vrot.lane.b32.xlu0 %v758, 96
        %v932 = vpop.permute.xlu0 %931
        %933 = vrot.lane.b32.xlu0 %v762, 96
        %v934 = vpop.permute.xlu0 %933
        %935 = vrot.lane.b32.xlu0 %v768, 96
        %v936 = vpop.permute.xlu0 %935
        %937 = vrot.lane.b32.xlu0 %v772, 96
        %v938 = vpop.permute.xlu0 %937
        %939 = vrot.lane.b32.xlu0 %v778, 96
        %v940 = vpop.permute.xlu0 %939
        %941 = vrot.lane.b32.xlu0 %v782, 96
        %v942 = vpop.permute.xlu0 %941
        %943 = vrot.lane.b32.xlu0 %v788, 96
        %v944 = vpop.permute.xlu0 %943
        %945 = vrot.lane.b32.xlu0 %v792, 96
        %v946 = vpop.permute.xlu0 %945
        %947 = vrot.lane.b32.xlu0 %v798, 96
        %v948 = vpop.permute.xlu0 %947
        %949 = vrot.lane.b32.xlu0 %v802, 96
        %v950 = vpop.permute.xlu0 %949
        %967 = vrot.lane.b32.xlu0 %v728, 64
        %v968 = vpop.permute.xlu0 %967
        %969 = vrot.lane.b32.xlu0 %v732, 64
        %v970 = vpop.permute.xlu0 %969
        %971 = vrot.lane.b32.xlu0 %v738, 64
        %v972 = vpop.permute.xlu0 %971
        %973 = vrot.lane.b32.xlu0 %v742, 64
        %v974 = vpop.permute.xlu0 %973
        %975 = vrot.lane.b32.xlu0 %v748, 64
        %v976 = vpop.permute.xlu0 %975
        %977 = vrot.lane.b32.xlu0 %v752, 64
        %v978 = vpop.permute.xlu0 %977
        %979 = vrot.lane.b32.xlu0 %v758, 64
        %v980 = vpop.permute.xlu0 %979
        %981 = vrot.lane.b32.xlu0 %v762, 64
        %v982 = vpop.permute.xlu0 %981
        %983 = vrot.lane.b32.xlu0 %v768, 64
        %v984 = vpop.permute.xlu0 %983
        %985 = vrot.lane.b32.xlu0 %v772, 64
        %v986 = vpop.permute.xlu0 %985
        %987 = vrot.lane.b32.xlu0 %v778, 64
        %v988 = vpop.permute.xlu0 %987
        %989 = vrot.lane.b32.xlu0 %v782, 64
        %v990 = vpop.permute.xlu0 %989
        %991 = vrot.lane.b32.xlu0 %v788, 64
        %v992 = vpop.permute.xlu0 %991
        %993 = vrot.lane.b32.xlu0 %v792, 64
        %v994 = vpop.permute.xlu0 %993
        %995 = vrot.lane.b32.xlu0 %v798, 64
        %v996 = vpop.permute.xlu0 %995
        %997 = vrot.lane.b32.xlu0 %v802, 64
        %v998 = vpop.permute.xlu0 %997
        %1015 = vrot.lane.b32.xlu0 %v728, 32
        %v1016 = vpop.permute.xlu0 %1015
        %1017 = vrot.lane.b32.xlu0 %v732, 32
        %v1018 = vpop.permute.xlu0 %1017
        %1019 = vrot.lane.b32.xlu0 %v738, 32
        %v1020 = vpop.permute.xlu0 %1019
        %1021 = vrot.lane.b32.xlu0 %v742, 32
        %v1022 = vpop.permute.xlu0 %1021
        %1023 = vrot.lane.b32.xlu0 %v748, 32
        %v1024 = vpop.permute.xlu0 %1023
        %1025 = vrot.lane.b32.xlu0 %v752, 32
        %v1026 = vpop.permute.xlu0 %1025
        %1027 = vrot.lane.b32.xlu0 %v758, 32
        %v1028 = vpop.permute.xlu0 %1027
        %1029 = vrot.lane.b32.xlu0 %v762, 32
        %v1030 = vpop.permute.xlu0 %1029
        %1031 = vrot.lane.b32.xlu0 %v768, 32
        %v1032 = vpop.permute.xlu0 %1031
        %1033 = vrot.lane.b32.xlu0 %v772, 32
        %v1034 = vpop.permute.xlu0 %1033
        %1035 = vrot.lane.b32.xlu0 %v778, 32
        %v1036 = vpop.permute.xlu0 %1035
        %1037 = vrot.lane.b32.xlu0 %v782, 32
        %v1038 = vpop.permute.xlu0 %1037
        %1039 = vrot.lane.b32.xlu0 %v788, 32
        %v1040 = vpop.permute.xlu0 %1039
        %1041 = vrot.lane.b32.xlu0 %v792, 32
        %v1042 = vpop.permute.xlu0 %1041
        %1043 = vrot.lane.b32.xlu0 %v798, 32
        %v1044 = vpop.permute.xlu0 %1043
        %1045 = vrot.lane.b32.xlu0 %v802, 32
        %v1046 = vpop.permute.xlu0 %1045
        %v1063 = vpack.c.bf16 %v732, %v728
        %v1064 = vpack.c.bf16 %v742, %v738
        %v1065 = vpack.c.bf16 %v752, %v748
        %v1066 = vpack.c.bf16 %v762, %v758
        %v1067 = vpack.c.bf16 %v772, %v768
        %v1068 = vpack.c.bf16 %v782, %v778
        %v1069 = vpack.c.bf16 %v792, %v788
        %v1070 = vpack.c.bf16 %v802, %v798
        %v1071 = vpack.c.bf16 %v922, %v920
        %v1072 = vpack.c.bf16 %v926, %v924
        %v1073 = vpack.c.bf16 %v930, %v928
        %v1074 = vpack.c.bf16 %v934, %v932
        %v1075 = vpack.c.bf16 %v938, %v936
        %v1076 = vpack.c.bf16 %v942, %v940
        %v1077 = vpack.c.bf16 %v946, %v944
        %v1078 = vpack.c.bf16 %v950, %v948
        %v1079 = vpack.c.bf16 %v970, %v968
        %v1080 = vpack.c.bf16 %v974, %v972
        %v1081 = vpack.c.bf16 %v978, %v976
        %v1082 = vpack.c.bf16 %v982, %v980
        %v1083 = vpack.c.bf16 %v986, %v984
        %v1084 = vpack.c.bf16 %v990, %v988
        %v1085 = vpack.c.bf16 %v994, %v992
        %v1086 = vpack.c.bf16 %v998, %v996
        %v1087 = vpack.c.bf16 %v1018, %v1016
        %v1088 = vpack.c.bf16 %v1022, %v1020
        %v1089 = vpack.c.bf16 %v1026, %v1024
        %v1090 = vpack.c.bf16 %v1030, %v1028
        %v1091 = vpack.c.bf16 %v1034, %v1032
        %v1092 = vpack.c.bf16 %v1038, %v1036
        %v1093 = vpack.c.bf16 %v1042, %v1040
        %v1094 = vpack.c.bf16 %v1046, %v1044
        %1111 = vrot.lane.b32.xlu0 %v730, 96
        %v1112 = vpop.permute.xlu0 %1111
        %1113 = vrot.lane.b32.xlu0 %v734, 96
        %v1114 = vpop.permute.xlu0 %1113
        %1115 = vrot.lane.b32.xlu0 %v740, 96
        %v1116 = vpop.permute.xlu0 %1115
        %1117 = vrot.lane.b32.xlu0 %v744, 96
        %v1118 = vpop.permute.xlu0 %1117
        %1119 = vrot.lane.b32.xlu0 %v750, 96
        %v1120 = vpop.permute.xlu0 %1119
        %1121 = vrot.lane.b32.xlu0 %v754, 96
        %v1122 = vpop.permute.xlu0 %1121
        %1123 = vrot.lane.b32.xlu0 %v760, 96
        %v1124 = vpop.permute.xlu0 %1123
        %1125 = vrot.lane.b32.xlu0 %v764, 96
        %v1126 = vpop.permute.xlu0 %1125
        %1127 = vrot.lane.b32.xlu0 %v770, 96
        %v1128 = vpop.permute.xlu0 %1127
        %1129 = vrot.lane.b32.xlu0 %v774, 96
        %v1130 = vpop.permute.xlu0 %1129
        %1131 = vrot.lane.b32.xlu0 %v780, 96
        %v1132 = vpop.permute.xlu0 %1131
        %1133 = vrot.lane.b32.xlu0 %v784, 96
        %v1134 = vpop.permute.xlu0 %1133
        %1135 = vrot.lane.b32.xlu0 %v790, 96
        %v1136 = vpop.permute.xlu0 %1135
        %1137 = vrot.lane.b32.xlu0 %v794, 96
        %v1138 = vpop.permute.xlu0 %1137
        %1139 = vrot.lane.b32.xlu0 %v800, 96
        %v1140 = vpop.permute.xlu0 %1139
        %1141 = vrot.lane.b32.xlu0 %v804, 96
        %v1142 = vpop.permute.xlu0 %1141
        %1159 = vrot.lane.b32.xlu0 %v730, 64
        %v1160 = vpop.permute.xlu0 %1159
        %1161 = vrot.lane.b32.xlu0 %v734, 64
        %v1162 = vpop.permute.xlu0 %1161
        %1163 = vrot.lane.b32.xlu0 %v740, 64
        %v1164 = vpop.permute.xlu0 %1163
        %1165 = vrot.lane.b32.xlu0 %v744, 64
        %v1166 = vpop.permute.xlu0 %1165
        %1167 = vrot.lane.b32.xlu0 %v750, 64
        %v1168 = vpop.permute.xlu0 %1167
        %1169 = vrot.lane.b32.xlu0 %v754, 64
        %v1170 = vpop.permute.xlu0 %1169
        %1171 = vrot.lane.b32.xlu0 %v760, 64
        %v1172 = vpop.permute.xlu0 %1171
        %1173 = vrot.lane.b32.xlu0 %v764, 64
        %v1174 = vpop.permute.xlu0 %1173
        %1175 = vrot.lane.b32.xlu0 %v770, 64
        %v1176 = vpop.permute.xlu0 %1175
        %1177 = vrot.lane.b32.xlu0 %v774, 64
        %v1178 = vpop.permute.xlu0 %1177
        %1179 = vrot.lane.b32.xlu0 %v780, 64
        %v1180 = vpop.permute.xlu0 %1179
        %1181 = vrot.lane.b32.xlu0 %v784, 64
        %v1182 = vpop.permute.xlu0 %1181
        %1183 = vrot.lane.b32.xlu0 %v790, 64
        %v1184 = vpop.permute.xlu0 %1183
        %1185 = vrot.lane.b32.xlu0 %v794, 64
        %v1186 = vpop.permute.xlu0 %1185
        %1187 = vrot.lane.b32.xlu0 %v800, 64
        %v1188 = vpop.permute.xlu0 %1187
        %1189 = vrot.lane.b32.xlu0 %v804, 64
        %v1190 = vpop.permute.xlu0 %1189
        %1207 = vrot.lane.b32.xlu0 %v730, 32
        %v1208 = vpop.permute.xlu0 %1207
        %1209 = vrot.lane.b32.xlu0 %v734, 32
        %v1210 = vpop.permute.xlu0 %1209
        %1211 = vrot.lane.b32.xlu0 %v740, 32
        %v1212 = vpop.permute.xlu0 %1211
        %1213 = vrot.lane.b32.xlu0 %v744, 32
        %v1214 = vpop.permute.xlu0 %1213
        %1215 = vrot.lane.b32.xlu0 %v750, 32
        %v1216 = vpop.permute.xlu0 %1215
        %1217 = vrot.lane.b32.xlu0 %v754, 32
        %v1218 = vpop.permute.xlu0 %1217
        %1219 = vrot.lane.b32.xlu0 %v760, 32
        %v1220 = vpop.permute.xlu0 %1219
        %1221 = vrot.lane.b32.xlu0 %v764, 32
        %v1222 = vpop.permute.xlu0 %1221
        %1223 = vrot.lane.b32.xlu0 %v770, 32
        %v1224 = vpop.permute.xlu0 %1223
        %1225 = vrot.lane.b32.xlu0 %v774, 32
        %v1226 = vpop.permute.xlu0 %1225
        %1227 = vrot.lane.b32.xlu0 %v780, 32
        %v1228 = vpop.permute.xlu0 %1227
        %1229 = vrot.lane.b32.xlu0 %v784, 32
        %v1230 = vpop.permute.xlu0 %1229
        %1231 = vrot.lane.b32.xlu0 %v790, 32
        %v1232 = vpop.permute.xlu0 %1231
        %1233 = vrot.lane.b32.xlu0 %v794, 32
        %v1234 = vpop.permute.xlu0 %1233
        %1235 = vrot.lane.b32.xlu0 %v800, 32
        %v1236 = vpop.permute.xlu0 %1235
        %1237 = vrot.lane.b32.xlu0 %v804, 32
        %v1238 = vpop.permute.xlu0 %1237
        %v1255 = vpack.c.bf16 %v734, %v730
        %v1256 = vpack.c.bf16 %v744, %v740
        %v1257 = vpack.c.bf16 %v754, %v750
        %v1258 = vpack.c.bf16 %v764, %v760
        %v1259 = vpack.c.bf16 %v774, %v770
        %v1260 = vpack.c.bf16 %v784, %v780
        %v1261 = vpack.c.bf16 %v794, %v790
        %v1262 = vpack.c.bf16 %v804, %v800
        %v1263 = vpack.c.bf16 %v1114, %v1112
        %v1264 = vpack.c.bf16 %v1118, %v1116
        %v1265 = vpack.c.bf16 %v1122, %v1120
        %v1266 = vpack.c.bf16 %v1126, %v1124
        %v1267 = vpack.c.bf16 %v1130, %v1128
        %v1268 = vpack.c.bf16 %v1134, %v1132
        %v1269 = vpack.c.bf16 %v1138, %v1136
        %v1270 = vpack.c.bf16 %v1142, %v1140
        %v1271 = vpack.c.bf16 %v1162, %v1160
        %v1272 = vpack.c.bf16 %v1166, %v1164
        %v1273 = vpack.c.bf16 %v1170, %v1168
        %v1274 = vpack.c.bf16 %v1174, %v1172
        %v1275 = vpack.c.bf16 %v1178, %v1176
        %v1276 = vpack.c.bf16 %v1182, %v1180
        %v1277 = vpack.c.bf16 %v1186, %v1184
        %v1278 = vpack.c.bf16 %v1190, %v1188
        %v1279 = vpack.c.bf16 %v1210, %v1208
        %v1280 = vpack.c.bf16 %v1214, %v1212
        %v1281 = vpack.c.bf16 %v1218, %v1216
        %v1282 = vpack.c.bf16 %v1222, %v1220
        %v1283 = vpack.c.bf16 %v1226, %v1224
        %v1284 = vpack.c.bf16 %v1230, %v1228
        %v1285 = vpack.c.bf16 %v1234, %v1232
        %v1286 = vpack.c.bf16 %v1238, %v1236
        %1303 = vrot.lane.b32.xlu0 %v841, 96
        %v1304 = vpop.permute.xlu0 %1303
        %1305 = vrot.lane.b32.xlu0 %v844, 96
        %v1306 = vpop.permute.xlu0 %1305
        %1307 = vrot.lane.b32.xlu0 %v849, 96
        %v1308 = vpop.permute.xlu0 %1307
        %1309 = vrot.lane.b32.xlu0 %v852, 96
        %v1310 = vpop.permute.xlu0 %1309
        %1311 = vrot.lane.b32.xlu0 %v857, 96
        %v1312 = vpop.permute.xlu0 %1311
        %1313 = vrot.lane.b32.xlu0 %v860, 96
        %v1314 = vpop.permute.xlu0 %1313
        %1315 = vrot.lane.b32.xlu0 %v865, 96
        %v1316 = vpop.permute.xlu0 %1315
        %1317 = vrot.lane.b32.xlu0 %v868, 96
        %v1318 = vpop.permute.xlu0 %1317
        %1319 = vrot.lane.b32.xlu0 %v873, 96
        %v1320 = vpop.permute.xlu0 %1319
        %1321 = vrot.lane.b32.xlu0 %v876, 96
        %v1322 = vpop.permute.xlu0 %1321
        %1323 = vrot.lane.b32.xlu0 %v881, 96
        %v1324 = vpop.permute.xlu0 %1323
        %1325 = vrot.lane.b32.xlu0 %v884, 96
        %v1326 = vpop.permute.xlu0 %1325
        %1327 = vrot.lane.b32.xlu0 %v889, 96
        %v1328 = vpop.permute.xlu0 %1327
        %1329 = vrot.lane.b32.xlu0 %v892, 96
        %v1330 = vpop.permute.xlu0 %1329
        %1331 = vrot.lane.b32.xlu0 %v897, 96
        %v1332 = vpop.permute.xlu0 %1331
        %1333 = vrot.lane.b32.xlu0 %v900, 96
        %v1334 = vpop.permute.xlu0 %1333
        %1351 = vrot.lane.b32.xlu0 %v841, 64
        %v1352 = vpop.permute.xlu0 %1351
        %1353 = vrot.lane.b32.xlu0 %v844, 64
        %v1354 = vpop.permute.xlu0 %1353
        %1355 = vrot.lane.b32.xlu0 %v849, 64
        %v1356 = vpop.permute.xlu0 %1355
        %1357 = vrot.lane.b32.xlu0 %v852, 64
        %v1358 = vpop.permute.xlu0 %1357
        %1359 = vrot.lane.b32.xlu0 %v857, 64
        %v1360 = vpop.permute.xlu0 %1359
        %1361 = vrot.lane.b32.xlu0 %v860, 64
        %v1362 = vpop.permute.xlu0 %1361
        %1363 = vrot.lane.b32.xlu0 %v865, 64
        %v1364 = vpop.permute.xlu0 %1363
        %1365 = vrot.lane.b32.xlu0 %v868, 64
        %v1366 = vpop.permute.xlu0 %1365
        %1367 = vrot.lane.b32.xlu0 %v873, 64
        %v1368 = vpop.permute.xlu0 %1367
        %1369 = vrot.lane.b32.xlu0 %v876, 64
        %v1370 = vpop.permute.xlu0 %1369
        %1371 = vrot.lane.b32.xlu0 %v881, 64
        %v1372 = vpop.permute.xlu0 %1371
        %1373 = vrot.lane.b32.xlu0 %v884, 64
        %v1374 = vpop.permute.xlu0 %1373
        %1375 = vrot.lane.b32.xlu0 %v889, 64
        %v1376 = vpop.permute.xlu0 %1375
        %1377 = vrot.lane.b32.xlu0 %v892, 64
        %v1378 = vpop.permute.xlu0 %1377
        %1379 = vrot.lane.b32.xlu0 %v897, 64
        %v1380 = vpop.permute.xlu0 %1379
        %1381 = vrot.lane.b32.xlu0 %v900, 64
        %v1382 = vpop.permute.xlu0 %1381
        %1399 = vrot.lane.b32.xlu0 %v841, 32
        %v1400 = vpop.permute.xlu0 %1399
        %1401 = vrot.lane.b32.xlu0 %v844, 32
        %v1402 = vpop.permute.xlu0 %1401
        %1403 = vrot.lane.b32.xlu0 %v849, 32
        %v1404 = vpop.permute.xlu0 %1403
        %1405 = vrot.lane.b32.xlu0 %v852, 32
        %v1406 = vpop.permute.xlu0 %1405
        %1407 = vrot.lane.b32.xlu0 %v857, 32
        %v1408 = vpop.permute.xlu0 %1407
        %1409 = vrot.lane.b32.xlu0 %v860, 32
        %v1410 = vpop.permute.xlu0 %1409
        %1411 = vrot.lane.b32.xlu0 %v865, 32
        %v1412 = vpop.permute.xlu0 %1411
        %1413 = vrot.lane.b32.xlu0 %v868, 32
        %v1414 = vpop.permute.xlu0 %1413
        %1415 = vrot.lane.b32.xlu0 %v873, 32
        %v1416 = vpop.permute.xlu0 %1415
        %1417 = vrot.lane.b32.xlu0 %v876, 32
        %v1418 = vpop.permute.xlu0 %1417
        %1419 = vrot.lane.b32.xlu0 %v881, 32
        %v1420 = vpop.permute.xlu0 %1419
        %1421 = vrot.lane.b32.xlu0 %v884, 32
        %v1422 = vpop.permute.xlu0 %1421
        %1423 = vrot.lane.b32.xlu0 %v889, 32
        %v1424 = vpop.permute.xlu0 %1423
        %1425 = vrot.lane.b32.xlu0 %v892, 32
        %v1426 = vpop.permute.xlu0 %1425
        %1427 = vrot.lane.b32.xlu0 %v897, 32
        %v1428 = vpop.permute.xlu0 %1427
        %1429 = vrot.lane.b32.xlu0 %v900, 32
        %v1430 = vpop.permute.xlu0 %1429
        %v1447 = vpack.c.bf16 %v844, %v841
        %v1448 = vpack.c.bf16 %v852, %v849
        %v1449 = vpack.c.bf16 %v860, %v857
        %v1450 = vpack.c.bf16 %v868, %v865
        %v1451 = vpack.c.bf16 %v876, %v873
        %v1452 = vpack.c.bf16 %v884, %v881
        %v1453 = vpack.c.bf16 %v892, %v889
        %v1454 = vpack.c.bf16 %v900, %v897
        %v1455 = vpack.c.bf16 %v1306, %v1304
        %v1456 = vpack.c.bf16 %v1310, %v1308
        %v1457 = vpack.c.bf16 %v1314, %v1312
        %v1458 = vpack.c.bf16 %v1318, %v1316
        %v1459 = vpack.c.bf16 %v1322, %v1320
        %v1460 = vpack.c.bf16 %v1326, %v1324
        %v1461 = vpack.c.bf16 %v1330, %v1328
        %v1462 = vpack.c.bf16 %v1334, %v1332
        %v1463 = vpack.c.bf16 %v1354, %v1352
        %v1464 = vpack.c.bf16 %v1358, %v1356
        %v1465 = vpack.c.bf16 %v1362, %v1360
        %v1466 = vpack.c.bf16 %v1366, %v1364
        %v1467 = vpack.c.bf16 %v1370, %v1368
        %v1468 = vpack.c.bf16 %v1374, %v1372
        %v1469 = vpack.c.bf16 %v1378, %v1376
        %v1470 = vpack.c.bf16 %v1382, %v1380
        %v1471 = vpack.c.bf16 %v1402, %v1400
        %v1472 = vpack.c.bf16 %v1406, %v1404
        %v1473 = vpack.c.bf16 %v1410, %v1408
        %v1474 = vpack.c.bf16 %v1414, %v1412
        %v1475 = vpack.c.bf16 %v1418, %v1416
        %v1476 = vpack.c.bf16 %v1422, %v1420
        %v1477 = vpack.c.bf16 %v1426, %v1424
        %v1478 = vpack.c.bf16 %v1430, %v1428
        %v1479 = vlaneseq
        %v1480 = vshrl.u32 %v1479, 7
        %v1481 = vadd.s32 %v1480, 8
        %v1482 = vlaneseq
        %v1483 = vand.u32 %v1482, 127
        %vm1484 = vcmp.le.s32.totalorder %v1483, %v1480
        %vm1485 = vcmp.le.s32.totalorder %v1483, %v1481
        %vm1486 = vcmask 261120
        %v1488 = vsel %vm1486, %v1063, 0
        %v1491 = vsel %vm1486, %v1255, 0
        %1493 = vmatprep.subr.bf16.mxu0 0
        %1494 = vmatpush1.bf16.xpose.msra.mxu0 0
        %1495 = vmatprep.subr.bf16.mxu0 0
        %1496 = vmatpush1.bf16.xpose.msra.mxu0 0
        %1497 = vmatprep.subr.bf16.mxu0 0
        %1498 = vmatpush1.bf16.xpose.msra.mxu0 0
        %1499 = vmatprep.subr.bf16.mxu0 0
        %1500 = vmatpush1.bf16.xpose.msra.mxu0 0
        %1501 = vmatprep.subr.bf16.mxu0 0
        %1502 = vmatpush1.bf16.xpose.msra.mxu0 0
        %1503 = vmatprep.subr.bf16.mxu0 0
        %1504 = vmatpush1.bf16.xpose.msra.mxu0 0
        %1505 = vmatprep.subr.bf16.mxu0 0
        %1506 = vmatpush1.bf16.xpose.msra.mxu0 0
        %1507 = vmatprep.subr.bf16.mxu0 0
        %1508 = vmatpush1.bf16.xpose.msra.mxu0 %v1491
        %1509 = vmatprep.subr.bf16.mxu0 0
        %1510 = vmatpush2.bf16.xpose.msra.mxu0 0
        %1511 = vmatprep.subr.bf16.mxu0 0
        %1512 = vmatpush2.bf16.xpose.msra.mxu0 0
        %1513 = vmatprep.subr.bf16.mxu0 0
        %1514 = vmatpush2.bf16.xpose.msra.mxu0 0
        %1515 = vmatprep.subr.bf16.mxu0 0
        %1516 = vmatpush2.bf16.xpose.msra.mxu0 0
        %1517 = vmatprep.subr.bf16.mxu0 0
        %1518 = vmatpush2.bf16.xpose.msra.mxu0 0
        %1519 = vmatprep.subr.bf16.mxu0 0
        %1520 = vmatpush2.bf16.xpose.msra.mxu0 0
        %1521 = vmatprep.subr.bf16.mxu0 0
        %1522 = vmatpush2.bf16.xpose.msra.mxu0 0
        %1523 = vmatprep.subr.bf16.mxu0 0
        %1524 = vmatpush2.bf16.xpose.msra.mxu0 0
        %1525 = vmatprep.mubr.bf16.mxu0 0
        %1526 = vmatmul.mubr.bf16.gmra.mxu0 %v1488
        %v1527 = vpop.f32.mrf.mxu0
        %v1528 = vadd.f32 0.0, %v1527
        %v1529 = vpop.f32.mrf.mxu0
        %v1530 = vpop.f32.mrf.mxu0
        %v1531 = vadd.f32 0.0, %v1530
        %v1532 = vpop.f32.mrf.mxu0
        %1533 = vdwg.mxu0
        %v1535 = vsel %vm1486, %v1064, 0
        %v1538 = vsel %vm1486, %v1256, 0
        %1540 = vmatprep.subr.bf16.mxu0 0
        %1541 = vmatpush1.bf16.xpose.msra.mxu0 0
        %1542 = vmatprep.subr.bf16.mxu0 0
        %1543 = vmatpush1.bf16.xpose.msra.mxu0 0
        %1544 = vmatprep.subr.bf16.mxu0 0
        %1545 = vmatpush1.bf16.xpose.msra.mxu0 0
        %1546 = vmatprep.subr.bf16.mxu0 0
        %1547 = vmatpush1.bf16.xpose.msra.mxu0 0
        %1548 = vmatprep.subr.bf16.mxu0 0
        %1549 = vmatpush1.bf16.xpose.msra.mxu0 0
        %1550 = vmatprep.subr.bf16.mxu0 0
        %1551 = vmatpush1.bf16.xpose.msra.mxu0 0
        %1552 = vmatprep.subr.bf16.mxu0 0
        %1553 = vmatpush1.bf16.xpose.msra.mxu0 0
        %1554 = vmatprep.subr.bf16.mxu0 0
        %1555 = vmatpush1.bf16.xpose.msra.mxu0 %v1538
        %1556 = vmatprep.subr.bf16.mxu0 0
        %1557 = vmatpush2.bf16.xpose.msra.mxu0 0
        %1558 = vmatprep.subr.bf16.mxu0 0
        %1559 = vmatpush2.bf16.xpose.msra.mxu0 0
        %1560 = vmatprep.subr.bf16.mxu0 0
        %1561 = vmatpush2.bf16.xpose.msra.mxu0 0
        %1562 = vmatprep.subr.bf16.mxu0 0
        %1563 = vmatpush2.bf16.xpose.msra.mxu0 0
        %1564 = vmatprep.subr.bf16.mxu0 0
        %1565 = vmatpush2.bf16.xpose.msra.mxu0 0
        %1566 = vmatprep.subr.bf16.mxu0 0
        %1567 = vmatpush2.bf16.xpose.msra.mxu0 0
        %1568 = vmatprep.subr.bf16.mxu0 0
        %1569 = vmatpush2.bf16.xpose.msra.mxu0 0
        %1570 = vmatprep.subr.bf16.mxu0 0
        %1571 = vmatpush2.bf16.xpose.msra.mxu0 0
        %1572 = vmatprep.mubr.bf16.mxu0 0
        %1573 = vmatmul.mubr.bf16.gmra.mxu0 %v1535
        %v1574 = vpop.f32.mrf.mxu0
        %v1575 = vadd.f32 0.0, %v1574
        %v1576 = vpop.f32.mrf.mxu0
        %v1577 = vpop.f32.mrf.mxu0
        %v1578 = vadd.f32 0.0, %v1577
        %v1579 = vpop.f32.mrf.mxu0
        %1580 = vdwg.mxu0
        %v1582 = vsel %vm1486, %v1065, 0
        %v1585 = vsel %vm1486, %v1257, 0
        %1587 = vmatprep.subr.bf16.mxu0 0
        %1588 = vmatpush1.bf16.xpose.msra.mxu0 0
        %1589 = vmatprep.subr.bf16.mxu0 0
        %1590 = vmatpush1.bf16.xpose.msra.mxu0 0
        %1591 = vmatprep.subr.bf16.mxu0 0
        %1592 = vmatpush1.bf16.xpose.msra.mxu0 0
        %1593 = vmatprep.subr.bf16.mxu0 0
        %1594 = vmatpush1.bf16.xpose.msra.mxu0 0
        %1595 = vmatprep.subr.bf16.mxu0 0
        %1596 = vmatpush1.bf16.xpose.msra.mxu0 0
        %1597 = vmatprep.subr.bf16.mxu0 0
        %1598 = vmatpush1.bf16.xpose.msra.mxu0 0
        %1599 = vmatprep.subr.bf16.mxu0 0
        %1600 = vmatpush1.bf16.xpose.msra.mxu0 0
        %1601 = vmatprep.subr.bf16.mxu0 0
        %1602 = vmatpush1.bf16.xpose.msra.mxu0 %v1585
        %1603 = vmatprep.subr.bf16.mxu0 0
        %1604 = vmatpush2.bf16.xpose.msra.mxu0 0
        %1605 = vmatprep.subr.bf16.mxu0 0
        %1606 = vmatpush2.bf16.xpose.msra.mxu0 0
        %1607 = vmatprep.subr.bf16.mxu0 0
        %1608 = vmatpush2.bf16.xpose.msra.mxu0 0
        %1609 = vmatprep.subr.bf16.mxu0 0
        %1610 = vmatpush2.bf16.xpose.msra.mxu0 0
        %1611 = vmatprep.subr.bf16.mxu0 0
        %1612 = vmatpush2.bf16.xpose.msra.mxu0 0
        %1613 = vmatprep.subr.bf16.mxu0 0
        %1614 = vmatpush2.bf16.xpose.msra.mxu0 0
        %1615 = vmatprep.subr.bf16.mxu0 0
        %1616 = vmatpush2.bf16.xpose.msra.mxu0 0
        %1617 = vmatprep.subr.bf16.mxu0 0
        %1618 = vmatpush2.bf16.xpose.msra.mxu0 0
        %1619 = vmatprep.mubr.bf16.mxu0 0
        %1620 = vmatmul.mubr.bf16.gmra.mxu0 %v1582
        %v1621 = vpop.f32.mrf.mxu0
        %v1622 = vadd.f32 0.0, %v1621
        %v1623 = vpop.f32.mrf.mxu0
        %v1624 = vpop.f32.mrf.mxu0
        %v1625 = vadd.f32 0.0, %v1624
        %v1626 = vpop.f32.mrf.mxu0
        %1627 = vdwg.mxu0
        %v1629 = vsel %vm1486, %v1066, 0
        %v1632 = vsel %vm1486, %v1258, 0
        %1634 = vmatprep.subr.bf16.mxu0 0
        %1635 = vmatpush1.bf16.xpose.msra.mxu0 0
        %1636 = vmatprep.subr.bf16.mxu0 0
        %1637 = vmatpush1.bf16.xpose.msra.mxu0 0
        %1638 = vmatprep.subr.bf16.mxu0 0
        %1639 = vmatpush1.bf16.xpose.msra.mxu0 0
        %1640 = vmatprep.subr.bf16.mxu0 0
        %1641 = vmatpush1.bf16.xpose.msra.mxu0 0
        %1642 = vmatprep.subr.bf16.mxu0 0
        %1643 = vmatpush1.bf16.xpose.msra.mxu0 0
        %1644 = vmatprep.subr.bf16.mxu0 0
        %1645 = vmatpush1.bf16.xpose.msra.mxu0 0
        %1646 = vmatprep.subr.bf16.mxu0 0
        %1647 = vmatpush1.bf16.xpose.msra.mxu0 0
        %1648 = vmatprep.subr.bf16.mxu0 0
        %1649 = vmatpush1.bf16.xpose.msra.mxu0 %v1632
        %1650 = vmatprep.subr.bf16.mxu0 0
        %1651 = vmatpush2.bf16.xpose.msra.mxu0 0
        %1652 = vmatprep.subr.bf16.mxu0 0
        %1653 = vmatpush2.bf16.xpose.msra.mxu0 0
        %1654 = vmatprep.subr.bf16.mxu0 0
        %1655 = vmatpush2.bf16.xpose.msra.mxu0 0
        %1656 = vmatprep.subr.bf16.mxu0 0
        %1657 = vmatpush2.bf16.xpose.msra.mxu0 0
        %1658 = vmatprep.subr.bf16.mxu0 0
        %1659 = vmatpush2.bf16.xpose.msra.mxu0 0
        %1660 = vmatprep.subr.bf16.mxu0 0
        %1661 = vmatpush2.bf16.xpose.msra.mxu0 0
        %1662 = vmatprep.subr.bf16.mxu0 0
        %1663 = vmatpush2.bf16.xpose.msra.mxu0 0
        %1664 = vmatprep.subr.bf16.mxu0 0
        %1665 = vmatpush2.bf16.xpose.msra.mxu0 0
        %1666 = vmatprep.mubr.bf16.mxu0 0
        %1667 = vmatmul.mubr.bf16.gmra.mxu0 %v1629
        %v1668 = vpop.f32.mrf.mxu0
        %v1669 = vadd.f32 0.0, %v1668
        %v1670 = vpop.f32.mrf.mxu0
        %v1671 = vpop.f32.mrf.mxu0
        %v1672 = vadd.f32 0.0, %v1671
        %v1673 = vpop.f32.mrf.mxu0
        %1674 = vdwg.mxu0
        %v1676 = vsel %vm1486, %v1067, 0
        %v1679 = vsel %vm1486, %v1259, 0
        %1681 = vmatprep.subr.bf16.mxu0 0
        %1682 = vmatpush1.bf16.xpose.msra.mxu0 0
        %1683 = vmatprep.subr.bf16.mxu0 0
        %1684 = vmatpush1.bf16.xpose.msra.mxu0 0
        %1685 = vmatprep.subr.bf16.mxu0 0
        %1686 = vmatpush1.bf16.xpose.msra.mxu0 0
        %1687 = vmatprep.subr.bf16.mxu0 0
        %1688 = vmatpush1.bf16.xpose.msra.mxu0 0
        %1689 = vmatprep.subr.bf16.mxu0 0
        %1690 = vmatpush1.bf16.xpose.msra.mxu0 0
        %1691 = vmatprep.subr.bf16.mxu0 0
        %1692 = vmatpush1.bf16.xpose.msra.mxu0 0
        %1693 = vmatprep.subr.bf16.mxu0 0
        %1694 = vmatpush1.bf16.xpose.msra.mxu0 0
        %1695 = vmatprep.subr.bf16.mxu0 0
        %1696 = vmatpush1.bf16.xpose.msra.mxu0 %v1679
        %1697 = vmatprep.subr.bf16.mxu0 0
        %1698 = vmatpush2.bf16.xpose.msra.mxu0 0
        %1699 = vmatprep.subr.bf16.mxu0 0
        %1700 = vmatpush2.bf16.xpose.msra.mxu0 0
        %1701 = vmatprep.subr.bf16.mxu0 0
        %1702 = vmatpush2.bf16.xpose.msra.mxu0 0
        %1703 = vmatprep.subr.bf16.mxu0 0
        %1704 = vmatpush2.bf16.xpose.msra.mxu0 0
        %1705 = vmatprep.subr.bf16.mxu0 0
        %1706 = vmatpush2.bf16.xpose.msra.mxu0 0
        %1707 = vmatprep.subr.bf16.mxu0 0
        %1708 = vmatpush2.bf16.xpose.msra.mxu0 0
        %1709 = vmatprep.subr.bf16.mxu0 0
        %1710 = vmatpush2.bf16.xpose.msra.mxu0 0
        %1711 = vmatprep.subr.bf16.mxu0 0
        %1712 = vmatpush2.bf16.xpose.msra.mxu0 0
        %1713 = vmatprep.mubr.bf16.mxu0 0
        %1714 = vmatmul.mubr.bf16.gmra.mxu0 %v1676
        %v1715 = vpop.f32.mrf.mxu0
        %v1716 = vadd.f32 0.0, %v1715
        %v1717 = vpop.f32.mrf.mxu0
        %v1718 = vpop.f32.mrf.mxu0
        %v1719 = vadd.f32 0.0, %v1718
        %v1720 = vpop.f32.mrf.mxu0
        %1721 = vdwg.mxu0
        %v1723 = vsel %vm1486, %v1068, 0
        %v1726 = vsel %vm1486, %v1260, 0
        %1728 = vmatprep.subr.bf16.mxu0 0
        %1729 = vmatpush1.bf16.xpose.msra.mxu0 0
        %1730 = vmatprep.subr.bf16.mxu0 0
        %1731 = vmatpush1.bf16.xpose.msra.mxu0 0
        %1732 = vmatprep.subr.bf16.mxu0 0
        %1733 = vmatpush1.bf16.xpose.msra.mxu0 0
        %1734 = vmatprep.subr.bf16.mxu0 0
        %1735 = vmatpush1.bf16.xpose.msra.mxu0 0
        %1736 = vmatprep.subr.bf16.mxu0 0
        %1737 = vmatpush1.bf16.xpose.msra.mxu0 0
        %1738 = vmatprep.subr.bf16.mxu0 0
        %1739 = vmatpush1.bf16.xpose.msra.mxu0 0
        %1740 = vmatprep.subr.bf16.mxu0 0
        %1741 = vmatpush1.bf16.xpose.msra.mxu0 0
        %1742 = vmatprep.subr.bf16.mxu0 0
        %1743 = vmatpush1.bf16.xpose.msra.mxu0 %v1726
        %1744 = vmatprep.subr.bf16.mxu0 0
        %1745 = vmatpush2.bf16.xpose.msra.mxu0 0
        %1746 = vmatprep.subr.bf16.mxu0 0
        %1747 = vmatpush2.bf16.xpose.msra.mxu0 0
        %1748 = vmatprep.subr.bf16.mxu0 0
        %1749 = vmatpush2.bf16.xpose.msra.mxu0 0
        %1750 = vmatprep.subr.bf16.mxu0 0
        %1751 = vmatpush2.bf16.xpose.msra.mxu0 0
        %1752 = vmatprep.subr.bf16.mxu0 0
        %1753 = vmatpush2.bf16.xpose.msra.mxu0 0
        %1754 = vmatprep.subr.bf16.mxu0 0
        %1755 = vmatpush2.bf16.xpose.msra.mxu0 0
        %1756 = vmatprep.subr.bf16.mxu0 0
        %1757 = vmatpush2.bf16.xpose.msra.mxu0 0
        %1758 = vmatprep.subr.bf16.mxu0 0
        %1759 = vmatpush2.bf16.xpose.msra.mxu0 0
        %1760 = vmatprep.mubr.bf16.mxu0 0
        %1761 = vmatmul.mubr.bf16.gmra.mxu0 %v1723
        %v1762 = vpop.f32.mrf.mxu0
        %v1763 = vadd.f32 0.0, %v1762
        %v1764 = vpop.f32.mrf.mxu0
        %v1765 = vpop.f32.mrf.mxu0
        %v1766 = vadd.f32 0.0, %v1765
        %v1767 = vpop.f32.mrf.mxu0
        %1768 = vdwg.mxu0
        %v1770 = vsel %vm1486, %v1069, 0
        %v1773 = vsel %vm1486, %v1261, 0
        %1775 = vmatprep.subr.bf16.mxu0 0
        %1776 = vmatpush1.bf16.xpose.msra.mxu0 0
        %1777 = vmatprep.subr.bf16.mxu0 0
        %1778 = vmatpush1.bf16.xpose.msra.mxu0 0
        %1779 = vmatprep.subr.bf16.mxu0 0
        %1780 = vmatpush1.bf16.xpose.msra.mxu0 0
        %1781 = vmatprep.subr.bf16.mxu0 0
        %1782 = vmatpush1.bf16.xpose.msra.mxu0 0
        %1783 = vmatprep.subr.bf16.mxu0 0
        %1784 = vmatpush1.bf16.xpose.msra.mxu0 0
        %1785 = vmatprep.subr.bf16.mxu0 0
        %1786 = vmatpush1.bf16.xpose.msra.mxu0 0
        %1787 = vmatprep.subr.bf16.mxu0 0
        %1788 = vmatpush1.bf16.xpose.msra.mxu0 0
        %1789 = vmatprep.subr.bf16.mxu0 0
        %1790 = vmatpush1.bf16.xpose.msra.mxu0 %v1773
        %1791 = vmatprep.subr.bf16.mxu0 0
        %1792 = vmatpush2.bf16.xpose.msra.mxu0 0
        %1793 = vmatprep.subr.bf16.mxu0 0
        %1794 = vmatpush2.bf16.xpose.msra.mxu0 0
        %1795 = vmatprep.subr.bf16.mxu0 0
        %1796 = vmatpush2.bf16.xpose.msra.mxu0 0
        %1797 = vmatprep.subr.bf16.mxu0 0
        %1798 = vmatpush2.bf16.xpose.msra.mxu0 0
        %1799 = vmatprep.subr.bf16.mxu0 0
        %1800 = vmatpush2.bf16.xpose.msra.mxu0 0
        %1801 = vmatprep.subr.bf16.mxu0 0
        %1802 = vmatpush2.bf16.xpose.msra.mxu0 0
        %1803 = vmatprep.subr.bf16.mxu0 0
        %1804 = vmatpush2.bf16.xpose.msra.mxu0 0
        %1805 = vmatprep.subr.bf16.mxu0 0
        %1806 = vmatpush2.bf16.xpose.msra.mxu0 0
        %1807 = vmatprep.mubr.bf16.mxu0 0
        %1808 = vmatmul.mubr.bf16.gmra.mxu0 %v1770
        %v1809 = vpop.f32.mrf.mxu0
        %v1810 = vadd.f32 0.0, %v1809
        %v1811 = vpop.f32.mrf.mxu0
        %v1812 = vpop.f32.mrf.mxu0
        %v1813 = vadd.f32 0.0, %v1812
        %v1814 = vpop.f32.mrf.mxu0
        %1815 = vdwg.mxu0
        %v1817 = vsel %vm1486, %v1070, 0
        %v1820 = vsel %vm1486, %v1262, 0
        %1822 = vmatprep.subr.bf16.mxu0 0
        %1823 = vmatpush1.bf16.xpose.msra.mxu0 0
        %1824 = vmatprep.subr.bf16.mxu0 0
        %1825 = vmatpush1.bf16.xpose.msra.mxu0 0
        %1826 = vmatprep.subr.bf16.mxu0 0
        %1827 = vmatpush1.bf16.xpose.msra.mxu0 0
        %1828 = vmatprep.subr.bf16.mxu0 0
        %1829 = vmatpush1.bf16.xpose.msra.mxu0 0
        %1830 = vmatprep.subr.bf16.mxu0 0
        %1831 = vmatpush1.bf16.xpose.msra.mxu0 0
        %1832 = vmatprep.subr.bf16.mxu0 0
        %1833 = vmatpush1.bf16.xpose.msra.mxu0 0
        %1834 = vmatprep.subr.bf16.mxu0 0
        %1835 = vmatpush1.bf16.xpose.msra.mxu0 0
        %1836 = vmatprep.subr.bf16.mxu0 0
        %1837 = vmatpush1.bf16.xpose.msra.mxu0 %v1820
        %1838 = vmatprep.subr.bf16.mxu0 0
        %1839 = vmatpush2.bf16.xpose.msra.mxu0 0
        %1840 = vmatprep.subr.bf16.mxu0 0
        %1841 = vmatpush2.bf16.xpose.msra.mxu0 0
        %1842 = vmatprep.subr.bf16.mxu0 0
        %1843 = vmatpush2.bf16.xpose.msra.mxu0 0
        %1844 = vmatprep.subr.bf16.mxu0 0
        %1845 = vmatpush2.bf16.xpose.msra.mxu0 0
        %1846 = vmatprep.subr.bf16.mxu0 0
        %1847 = vmatpush2.bf16.xpose.msra.mxu0 0
        %1848 = vmatprep.subr.bf16.mxu0 0
        %1849 = vmatpush2.bf16.xpose.msra.mxu0 0
        %1850 = vmatprep.subr.bf16.mxu0 0
        %1851 = vmatpush2.bf16.xpose.msra.mxu0 0
        %1852 = vmatprep.subr.bf16.mxu0 0
        %1853 = vmatpush2.bf16.xpose.msra.mxu0 0
        %1854 = vmatprep.mubr.bf16.mxu0 0
        %1855 = vmatmul.mubr.bf16.gmra.mxu0 %v1817
        %v1856 = vpop.f32.mrf.mxu0
        %v1857 = vadd.f32 0.0, %v1856
        %v1858 = vpop.f32.mrf.mxu0
        %v1859 = vpop.f32.mrf.mxu0
        %v1860 = vadd.f32 0.0, %v1859
        %v1861 = vpop.f32.mrf.mxu0
        %1862 = vdwg.mxu0
        %v1864 = vsel %vm1486, %v1071, 0
        %v1867 = vsel %vm1486, %v1263, 0
        %1869 = vmatprep.subr.bf16.mxu0 0
        %1870 = vmatpush1.bf16.xpose.msra.mxu0 0
        %1871 = vmatprep.subr.bf16.mxu0 0
        %1872 = vmatpush1.bf16.xpose.msra.mxu0 0
        %1873 = vmatprep.subr.bf16.mxu0 0
        %1874 = vmatpush1.bf16.xpose.msra.mxu0 0
        %1875 = vmatprep.subr.bf16.mxu0 0
        %1876 = vmatpush1.bf16.xpose.msra.mxu0 0
        %1877 = vmatprep.subr.bf16.mxu0 0
        %1878 = vmatpush1.bf16.xpose.msra.mxu0 0
        %1879 = vmatprep.subr.bf16.mxu0 0
        %1880 = vmatpush1.bf16.xpose.msra.mxu0 0
        %1881 = vmatprep.subr.bf16.mxu0 0
        %1882 = vmatpush1.bf16.xpose.msra.mxu0 0
        %1883 = vmatprep.subr.bf16.mxu0 0
        %1884 = vmatpush1.bf16.xpose.msra.mxu0 %v1867
        %1885 = vmatprep.subr.bf16.mxu0 0
        %1886 = vmatpush2.bf16.xpose.msra.mxu0 0
        %1887 = vmatprep.subr.bf16.mxu0 0
        %1888 = vmatpush2.bf16.xpose.msra.mxu0 0
        %1889 = vmatprep.subr.bf16.mxu0 0
        %1890 = vmatpush2.bf16.xpose.msra.mxu0 0
        %1891 = vmatprep.subr.bf16.mxu0 0
        %1892 = vmatpush2.bf16.xpose.msra.mxu0 0
        %1893 = vmatprep.subr.bf16.mxu0 0
        %1894 = vmatpush2.bf16.xpose.msra.mxu0 0
        %1895 = vmatprep.subr.bf16.mxu0 0
        %1896 = vmatpush2.bf16.xpose.msra.mxu0 0
        %1897 = vmatprep.subr.bf16.mxu0 0
        %1898 = vmatpush2.bf16.xpose.msra.mxu0 0
        %1899 = vmatprep.subr.bf16.mxu0 0
        %1900 = vmatpush2.bf16.xpose.msra.mxu0 0
        %1901 = vmatprep.mubr.bf16.mxu0 0
        %1902 = vmatmul.mubr.bf16.gmra.mxu0 %v1864
        %v1903 = vpop.f32.mrf.mxu0
        %v1904 = vadd.f32 0.0, %v1903
        %v1905 = vpop.f32.mrf.mxu0
        %v1906 = vpop.f32.mrf.mxu0
        %v1907 = vadd.f32 0.0, %v1906
        %v1908 = vpop.f32.mrf.mxu0
        %1909 = vdwg.mxu0
        %v1911 = vsel %vm1486, %v1072, 0
        %v1914 = vsel %vm1486, %v1264, 0
        %1916 = vmatprep.subr.bf16.mxu0 0
        %1917 = vmatpush1.bf16.xpose.msra.mxu0 0
        %1918 = vmatprep.subr.bf16.mxu0 0
        %1919 = vmatpush1.bf16.xpose.msra.mxu0 0
        %1920 = vmatprep.subr.bf16.mxu0 0
        %1921 = vmatpush1.bf16.xpose.msra.mxu0 0
        %1922 = vmatprep.subr.bf16.mxu0 0
        %1923 = vmatpush1.bf16.xpose.msra.mxu0 0
        %1924 = vmatprep.subr.bf16.mxu0 0
        %1925 = vmatpush1.bf16.xpose.msra.mxu0 0
        %1926 = vmatprep.subr.bf16.mxu0 0
        %1927 = vmatpush1.bf16.xpose.msra.mxu0 0
        %1928 = vmatprep.subr.bf16.mxu0 0
        %1929 = vmatpush1.bf16.xpose.msra.mxu0 0
        %1930 = vmatprep.subr.bf16.mxu0 0
        %1931 = vmatpush1.bf16.xpose.msra.mxu0 %v1914
        %1932 = vmatprep.subr.bf16.mxu0 0
        %1933 = vmatpush2.bf16.xpose.msra.mxu0 0
        %1934 = vmatprep.subr.bf16.mxu0 0
        %1935 = vmatpush2.bf16.xpose.msra.mxu0 0
        %1936 = vmatprep.subr.bf16.mxu0 0
        %1937 = vmatpush2.bf16.xpose.msra.mxu0 0
        %1938 = vmatprep.subr.bf16.mxu0 0
        %1939 = vmatpush2.bf16.xpose.msra.mxu0 0
        %1940 = vmatprep.subr.bf16.mxu0 0
        %1941 = vmatpush2.bf16.xpose.msra.mxu0 0
        %1942 = vmatprep.subr.bf16.mxu0 0
        %1943 = vmatpush2.bf16.xpose.msra.mxu0 0
        %1944 = vmatprep.subr.bf16.mxu0 0
        %1945 = vmatpush2.bf16.xpose.msra.mxu0 0
        %1946 = vmatprep.subr.bf16.mxu0 0
        %1947 = vmatpush2.bf16.xpose.msra.mxu0 0
        %1948 = vmatprep.mubr.bf16.mxu0 0
        %1949 = vmatmul.mubr.bf16.gmra.mxu0 %v1911
        %v1950 = vpop.f32.mrf.mxu0
        %v1951 = vadd.f32 0.0, %v1950
        %v1952 = vpop.f32.mrf.mxu0
        %v1953 = vpop.f32.mrf.mxu0
        %v1954 = vadd.f32 0.0, %v1953
        %v1955 = vpop.f32.mrf.mxu0
        %1956 = vdwg.mxu0
        %v1958 = vsel %vm1486, %v1073, 0
        %v1961 = vsel %vm1486, %v1265, 0
        %1963 = vmatprep.subr.bf16.mxu0 0
        %1964 = vmatpush1.bf16.xpose.msra.mxu0 0
        %1965 = vmatprep.subr.bf16.mxu0 0
        %1966 = vmatpush1.bf16.xpose.msra.mxu0 0
        %1967 = vmatprep.subr.bf16.mxu0 0
        %1968 = vmatpush1.bf16.xpose.msra.mxu0 0
        %1969 = vmatprep.subr.bf16.mxu0 0
        %1970 = vmatpush1.bf16.xpose.msra.mxu0 0
        %1971 = vmatprep.subr.bf16.mxu0 0
        %1972 = vmatpush1.bf16.xpose.msra.mxu0 0
        %1973 = vmatprep.subr.bf16.mxu0 0
        %1974 = vmatpush1.bf16.xpose.msra.mxu0 0
        %1975 = vmatprep.subr.bf16.mxu0 0
        %1976 = vmatpush1.bf16.xpose.msra.mxu0 0
        %1977 = vmatprep.subr.bf16.mxu0 0
        %1978 = vmatpush1.bf16.xpose.msra.mxu0 %v1961
        %1979 = vmatprep.subr.bf16.mxu0 0
        %1980 = vmatpush2.bf16.xpose.msra.mxu0 0
        %1981 = vmatprep.subr.bf16.mxu0 0
        %1982 = vmatpush2.bf16.xpose.msra.mxu0 0
        %1983 = vmatprep.subr.bf16.mxu0 0
        %1984 = vmatpush2.bf16.xpose.msra.mxu0 0
        %1985 = vmatprep.subr.bf16.mxu0 0
        %1986 = vmatpush2.bf16.xpose.msra.mxu0 0
        %1987 = vmatprep.subr.bf16.mxu0 0
        %1988 = vmatpush2.bf16.xpose.msra.mxu0 0
        %1989 = vmatprep.subr.bf16.mxu0 0
        %1990 = vmatpush2.bf16.xpose.msra.mxu0 0
        %1991 = vmatprep.subr.bf16.mxu0 0
        %1992 = vmatpush2.bf16.xpose.msra.mxu0 0
        %1993 = vmatprep.subr.bf16.mxu0 0
        %1994 = vmatpush2.bf16.xpose.msra.mxu0 0
        %1995 = vmatprep.mubr.bf16.mxu0 0
        %1996 = vmatmul.mubr.bf16.gmra.mxu0 %v1958
        %v1997 = vpop.f32.mrf.mxu0
        %v1998 = vadd.f32 0.0, %v1997
        %v1999 = vpop.f32.mrf.mxu0
        %v2000 = vpop.f32.mrf.mxu0
        %v2001 = vadd.f32 0.0, %v2000
        %v2002 = vpop.f32.mrf.mxu0
        %2003 = vdwg.mxu0
        %v2005 = vsel %vm1486, %v1074, 0
        %v2008 = vsel %vm1486, %v1266, 0
        %2010 = vmatprep.subr.bf16.mxu0 0
        %2011 = vmatpush1.bf16.xpose.msra.mxu0 0
        %2012 = vmatprep.subr.bf16.mxu0 0
        %2013 = vmatpush1.bf16.xpose.msra.mxu0 0
        %2014 = vmatprep.subr.bf16.mxu0 0
        %2015 = vmatpush1.bf16.xpose.msra.mxu0 0
        %2016 = vmatprep.subr.bf16.mxu0 0
        %2017 = vmatpush1.bf16.xpose.msra.mxu0 0
        %2018 = vmatprep.subr.bf16.mxu0 0
        %2019 = vmatpush1.bf16.xpose.msra.mxu0 0
        %2020 = vmatprep.subr.bf16.mxu0 0
        %2021 = vmatpush1.bf16.xpose.msra.mxu0 0
        %2022 = vmatprep.subr.bf16.mxu0 0
        %2023 = vmatpush1.bf16.xpose.msra.mxu0 0
        %2024 = vmatprep.subr.bf16.mxu0 0
        %2025 = vmatpush1.bf16.xpose.msra.mxu0 %v2008
        %2026 = vmatprep.subr.bf16.mxu0 0
        %2027 = vmatpush2.bf16.xpose.msra.mxu0 0
        %2028 = vmatprep.subr.bf16.mxu0 0
        %2029 = vmatpush2.bf16.xpose.msra.mxu0 0
        %2030 = vmatprep.subr.bf16.mxu0 0
        %2031 = vmatpush2.bf16.xpose.msra.mxu0 0
        %2032 = vmatprep.subr.bf16.mxu0 0
        %2033 = vmatpush2.bf16.xpose.msra.mxu0 0
        %2034 = vmatprep.subr.bf16.mxu0 0
        %2035 = vmatpush2.bf16.xpose.msra.mxu0 0
        %2036 = vmatprep.subr.bf16.mxu0 0
        %2037 = vmatpush2.bf16.xpose.msra.mxu0 0
        %2038 = vmatprep.subr.bf16.mxu0 0
        %2039 = vmatpush2.bf16.xpose.msra.mxu0 0
        %2040 = vmatprep.subr.bf16.mxu0 0
        %2041 = vmatpush2.bf16.xpose.msra.mxu0 0
        %2042 = vmatprep.mubr.bf16.mxu0 0
        %2043 = vmatmul.mubr.bf16.gmra.mxu0 %v2005
        %v2044 = vpop.f32.mrf.mxu0
        %v2045 = vadd.f32 0.0, %v2044
        %v2046 = vpop.f32.mrf.mxu0
        %v2047 = vpop.f32.mrf.mxu0
        %v2048 = vadd.f32 0.0, %v2047
        %v2049 = vpop.f32.mrf.mxu0
        %2050 = vdwg.mxu0
        %v2052 = vsel %vm1486, %v1075, 0
        %v2055 = vsel %vm1486, %v1267, 0
        %2057 = vmatprep.subr.bf16.mxu0 0
        %2058 = vmatpush1.bf16.xpose.msra.mxu0 0
        %2059 = vmatprep.subr.bf16.mxu0 0
        %2060 = vmatpush1.bf16.xpose.msra.mxu0 0
        %2061 = vmatprep.subr.bf16.mxu0 0
        %2062 = vmatpush1.bf16.xpose.msra.mxu0 0
        %2063 = vmatprep.subr.bf16.mxu0 0
        %2064 = vmatpush1.bf16.xpose.msra.mxu0 0
        %2065 = vmatprep.subr.bf16.mxu0 0
        %2066 = vmatpush1.bf16.xpose.msra.mxu0 0
        %2067 = vmatprep.subr.bf16.mxu0 0
        %2068 = vmatpush1.bf16.xpose.msra.mxu0 0
        %2069 = vmatprep.subr.bf16.mxu0 0
        %2070 = vmatpush1.bf16.xpose.msra.mxu0 0
        %2071 = vmatprep.subr.bf16.mxu0 0
        %2072 = vmatpush1.bf16.xpose.msra.mxu0 %v2055
        %2073 = vmatprep.subr.bf16.mxu0 0
        %2074 = vmatpush2.bf16.xpose.msra.mxu0 0
        %2075 = vmatprep.subr.bf16.mxu0 0
        %2076 = vmatpush2.bf16.xpose.msra.mxu0 0
        %2077 = vmatprep.subr.bf16.mxu0 0
        %2078 = vmatpush2.bf16.xpose.msra.mxu0 0
        %2079 = vmatprep.subr.bf16.mxu0 0
        %2080 = vmatpush2.bf16.xpose.msra.mxu0 0
        %2081 = vmatprep.subr.bf16.mxu0 0
        %2082 = vmatpush2.bf16.xpose.msra.mxu0 0
        %2083 = vmatprep.subr.bf16.mxu0 0
        %2084 = vmatpush2.bf16.xpose.msra.mxu0 0
        %2085 = vmatprep.subr.bf16.mxu0 0
        %2086 = vmatpush2.bf16.xpose.msra.mxu0 0
        %2087 = vmatprep.subr.bf16.mxu0 0
        %2088 = vmatpush2.bf16.xpose.msra.mxu0 0
        %2089 = vmatprep.mubr.bf16.mxu0 0
        %2090 = vmatmul.mubr.bf16.gmra.mxu0 %v2052
        %v2091 = vpop.f32.mrf.mxu0
        %v2092 = vadd.f32 0.0, %v2091
        %v2093 = vpop.f32.mrf.mxu0
        %v2094 = vpop.f32.mrf.mxu0
        %v2095 = vadd.f32 0.0, %v2094
        %v2096 = vpop.f32.mrf.mxu0
        %2097 = vdwg.mxu0
        %v2099 = vsel %vm1486, %v1076, 0
        %v2102 = vsel %vm1486, %v1268, 0
        %2104 = vmatprep.subr.bf16.mxu0 0
        %2105 = vmatpush1.bf16.xpose.msra.mxu0 0
        %2106 = vmatprep.subr.bf16.mxu0 0
        %2107 = vmatpush1.bf16.xpose.msra.mxu0 0
        %2108 = vmatprep.subr.bf16.mxu0 0
        %2109 = vmatpush1.bf16.xpose.msra.mxu0 0
        %2110 = vmatprep.subr.bf16.mxu0 0
        %2111 = vmatpush1.bf16.xpose.msra.mxu0 0
        %2112 = vmatprep.subr.bf16.mxu0 0
        %2113 = vmatpush1.bf16.xpose.msra.mxu0 0
        %2114 = vmatprep.subr.bf16.mxu0 0
        %2115 = vmatpush1.bf16.xpose.msra.mxu0 0
        %2116 = vmatprep.subr.bf16.mxu0 0
        %2117 = vmatpush1.bf16.xpose.msra.mxu0 0
        %2118 = vmatprep.subr.bf16.mxu0 0
        %2119 = vmatpush1.bf16.xpose.msra.mxu0 %v2102
        %2120 = vmatprep.subr.bf16.mxu0 0
        %2121 = vmatpush2.bf16.xpose.msra.mxu0 0
        %2122 = vmatprep.subr.bf16.mxu0 0
        %2123 = vmatpush2.bf16.xpose.msra.mxu0 0
        %2124 = vmatprep.subr.bf16.mxu0 0
        %2125 = vmatpush2.bf16.xpose.msra.mxu0 0
        %2126 = vmatprep.subr.bf16.mxu0 0
        %2127 = vmatpush2.bf16.xpose.msra.mxu0 0
        %2128 = vmatprep.subr.bf16.mxu0 0
        %2129 = vmatpush2.bf16.xpose.msra.mxu0 0
        %2130 = vmatprep.subr.bf16.mxu0 0
        %2131 = vmatpush2.bf16.xpose.msra.mxu0 0
        %2132 = vmatprep.subr.bf16.mxu0 0
        %2133 = vmatpush2.bf16.xpose.msra.mxu0 0
        %2134 = vmatprep.subr.bf16.mxu0 0
        %2135 = vmatpush2.bf16.xpose.msra.mxu0 0
        %2136 = vmatprep.mubr.bf16.mxu0 0
        %2137 = vmatmul.mubr.bf16.gmra.mxu0 %v2099
        %v2138 = vpop.f32.mrf.mxu0
        %v2139 = vadd.f32 0.0, %v2138
        %v2140 = vpop.f32.mrf.mxu0
        %v2141 = vpop.f32.mrf.mxu0
        %v2142 = vadd.f32 0.0, %v2141
        %v2143 = vpop.f32.mrf.mxu0
        %2144 = vdwg.mxu0
        %v2146 = vsel %vm1486, %v1077, 0
        %v2149 = vsel %vm1486, %v1269, 0
        %2151 = vmatprep.subr.bf16.mxu0 0
        %2152 = vmatpush1.bf16.xpose.msra.mxu0 0
        %2153 = vmatprep.subr.bf16.mxu0 0
        %2154 = vmatpush1.bf16.xpose.msra.mxu0 0
        %2155 = vmatprep.subr.bf16.mxu0 0
        %2156 = vmatpush1.bf16.xpose.msra.mxu0 0
        %2157 = vmatprep.subr.bf16.mxu0 0
        %2158 = vmatpush1.bf16.xpose.msra.mxu0 0
        %2159 = vmatprep.subr.bf16.mxu0 0
        %2160 = vmatpush1.bf16.xpose.msra.mxu0 0
        %2161 = vmatprep.subr.bf16.mxu0 0
        %2162 = vmatpush1.bf16.xpose.msra.mxu0 0
        %2163 = vmatprep.subr.bf16.mxu0 0
        %2164 = vmatpush1.bf16.xpose.msra.mxu0 0
        %2165 = vmatprep.subr.bf16.mxu0 0
        %2166 = vmatpush1.bf16.xpose.msra.mxu0 %v2149
        %2167 = vmatprep.subr.bf16.mxu0 0
        %2168 = vmatpush2.bf16.xpose.msra.mxu0 0
        %2169 = vmatprep.subr.bf16.mxu0 0
        %2170 = vmatpush2.bf16.xpose.msra.mxu0 0
        %2171 = vmatprep.subr.bf16.mxu0 0
        %2172 = vmatpush2.bf16.xpose.msra.mxu0 0
        %2173 = vmatprep.subr.bf16.mxu0 0
        %2174 = vmatpush2.bf16.xpose.msra.mxu0 0
        %2175 = vmatprep.subr.bf16.mxu0 0
        %2176 = vmatpush2.bf16.xpose.msra.mxu0 0
        %2177 = vmatprep.subr.bf16.mxu0 0
        %2178 = vmatpush2.bf16.xpose.msra.mxu0 0
        %2179 = vmatprep.subr.bf16.mxu0 0
        %2180 = vmatpush2.bf16.xpose.msra.mxu0 0
        %2181 = vmatprep.subr.bf16.mxu0 0
        %2182 = vmatpush2.bf16.xpose.msra.mxu0 0
        %2183 = vmatprep.mubr.bf16.mxu0 0
        %2184 = vmatmul.mubr.bf16.gmra.mxu0 %v2146
        %v2185 = vpop.f32.mrf.mxu0
        %v2186 = vadd.f32 0.0, %v2185
        %v2187 = vpop.f32.mrf.mxu0
        %v2188 = vpop.f32.mrf.mxu0
        %v2189 = vadd.f32 0.0, %v2188
        %v2190 = vpop.f32.mrf.mxu0
        %2191 = vdwg.mxu0
        %v2193 = vsel %vm1486, %v1078, 0
        %v2196 = vsel %vm1486, %v1270, 0
        %2198 = vmatprep.subr.bf16.mxu0 0
        %2199 = vmatpush1.bf16.xpose.msra.mxu0 0
        %2200 = vmatprep.subr.bf16.mxu0 0
        %2201 = vmatpush1.bf16.xpose.msra.mxu0 0
        %2202 = vmatprep.subr.bf16.mxu0 0
        %2203 = vmatpush1.bf16.xpose.msra.mxu0 0
        %2204 = vmatprep.subr.bf16.mxu0 0
        %2205 = vmatpush1.bf16.xpose.msra.mxu0 0
        %2206 = vmatprep.subr.bf16.mxu0 0
        %2207 = vmatpush1.bf16.xpose.msra.mxu0 0
        %2208 = vmatprep.subr.bf16.mxu0 0
        %2209 = vmatpush1.bf16.xpose.msra.mxu0 0
        %2210 = vmatprep.subr.bf16.mxu0 0
        %2211 = vmatpush1.bf16.xpose.msra.mxu0 0
        %2212 = vmatprep.subr.bf16.mxu0 0
        %2213 = vmatpush1.bf16.xpose.msra.mxu0 %v2196
        %2214 = vmatprep.subr.bf16.mxu0 0
        %2215 = vmatpush2.bf16.xpose.msra.mxu0 0
        %2216 = vmatprep.subr.bf16.mxu0 0
        %2217 = vmatpush2.bf16.xpose.msra.mxu0 0
        %2218 = vmatprep.subr.bf16.mxu0 0
        %2219 = vmatpush2.bf16.xpose.msra.mxu0 0
        %2220 = vmatprep.subr.bf16.mxu0 0
        %2221 = vmatpush2.bf16.xpose.msra.mxu0 0
        %2222 = vmatprep.subr.bf16.mxu0 0
        %2223 = vmatpush2.bf16.xpose.msra.mxu0 0
        %2224 = vmatprep.subr.bf16.mxu0 0
        %2225 = vmatpush2.bf16.xpose.msra.mxu0 0
        %2226 = vmatprep.subr.bf16.mxu0 0
        %2227 = vmatpush2.bf16.xpose.msra.mxu0 0
        %2228 = vmatprep.subr.bf16.mxu0 0
        %2229 = vmatpush2.bf16.xpose.msra.mxu0 0
        %2230 = vmatprep.mubr.bf16.mxu0 0
        %2231 = vmatmul.mubr.bf16.gmra.mxu0 %v2193
        %v2232 = vpop.f32.mrf.mxu0
        %v2233 = vadd.f32 0.0, %v2232
        %v2234 = vpop.f32.mrf.mxu0
        %v2235 = vpop.f32.mrf.mxu0
        %v2236 = vadd.f32 0.0, %v2235
        %v2237 = vpop.f32.mrf.mxu0
        %2238 = vdwg.mxu0
        %v2240 = vsel %vm1486, %v1079, 0
        %v2243 = vsel %vm1486, %v1271, 0
        %2245 = vmatprep.subr.bf16.mxu0 0
        %2246 = vmatpush1.bf16.xpose.msra.mxu0 0
        %2247 = vmatprep.subr.bf16.mxu0 0
        %2248 = vmatpush1.bf16.xpose.msra.mxu0 0
        %2249 = vmatprep.subr.bf16.mxu0 0
        %2250 = vmatpush1.bf16.xpose.msra.mxu0 0
        %2251 = vmatprep.subr.bf16.mxu0 0
        %2252 = vmatpush1.bf16.xpose.msra.mxu0 0
        %2253 = vmatprep.subr.bf16.mxu0 0
        %2254 = vmatpush1.bf16.xpose.msra.mxu0 0
        %2255 = vmatprep.subr.bf16.mxu0 0
        %2256 = vmatpush1.bf16.xpose.msra.mxu0 0
        %2257 = vmatprep.subr.bf16.mxu0 0
        %2258 = vmatpush1.bf16.xpose.msra.mxu0 0
        %2259 = vmatprep.subr.bf16.mxu0 0
        %2260 = vmatpush1.bf16.xpose.msra.mxu0 %v2243
        %2261 = vmatprep.subr.bf16.mxu0 0
        %2262 = vmatpush2.bf16.xpose.msra.mxu0 0
        %2263 = vmatprep.subr.bf16.mxu0 0
        %2264 = vmatpush2.bf16.xpose.msra.mxu0 0
        %2265 = vmatprep.subr.bf16.mxu0 0
        %2266 = vmatpush2.bf16.xpose.msra.mxu0 0
        %2267 = vmatprep.subr.bf16.mxu0 0
        %2268 = vmatpush2.bf16.xpose.msra.mxu0 0
        %2269 = vmatprep.subr.bf16.mxu0 0
        %2270 = vmatpush2.bf16.xpose.msra.mxu0 0
        %2271 = vmatprep.subr.bf16.mxu0 0
        %2272 = vmatpush2.bf16.xpose.msra.mxu0 0
        %2273 = vmatprep.subr.bf16.mxu0 0
        %2274 = vmatpush2.bf16.xpose.msra.mxu0 0
        %2275 = vmatprep.subr.bf16.mxu0 0
        %2276 = vmatpush2.bf16.xpose.msra.mxu0 0
        %2277 = vmatprep.mubr.bf16.mxu0 0
        %2278 = vmatmul.mubr.bf16.gmra.mxu0 %v2240
        %v2279 = vpop.f32.mrf.mxu0
        %v2280 = vadd.f32 0.0, %v2279
        %v2281 = vpop.f32.mrf.mxu0
        %v2282 = vpop.f32.mrf.mxu0
        %v2283 = vadd.f32 0.0, %v2282
        %v2284 = vpop.f32.mrf.mxu0
        %2285 = vdwg.mxu0
        %v2287 = vsel %vm1486, %v1080, 0
        %v2290 = vsel %vm1486, %v1272, 0
        %2292 = vmatprep.subr.bf16.mxu0 0
        %2293 = vmatpush1.bf16.xpose.msra.mxu0 0
        %2294 = vmatprep.subr.bf16.mxu0 0
        %2295 = vmatpush1.bf16.xpose.msra.mxu0 0
        %2296 = vmatprep.subr.bf16.mxu0 0
        %2297 = vmatpush1.bf16.xpose.msra.mxu0 0
        %2298 = vmatprep.subr.bf16.mxu0 0
        %2299 = vmatpush1.bf16.xpose.msra.mxu0 0
        %2300 = vmatprep.subr.bf16.mxu0 0
        %2301 = vmatpush1.bf16.xpose.msra.mxu0 0
        %2302 = vmatprep.subr.bf16.mxu0 0
        %2303 = vmatpush1.bf16.xpose.msra.mxu0 0
        %2304 = vmatprep.subr.bf16.mxu0 0
        %2305 = vmatpush1.bf16.xpose.msra.mxu0 0
        %2306 = vmatprep.subr.bf16.mxu0 0
        %2307 = vmatpush1.bf16.xpose.msra.mxu0 %v2290
        %2308 = vmatprep.subr.bf16.mxu0 0
        %2309 = vmatpush2.bf16.xpose.msra.mxu0 0
        %2310 = vmatprep.subr.bf16.mxu0 0
        %2311 = vmatpush2.bf16.xpose.msra.mxu0 0
        %2312 = vmatprep.subr.bf16.mxu0 0
        %2313 = vmatpush2.bf16.xpose.msra.mxu0 0
        %2314 = vmatprep.subr.bf16.mxu0 0
        %2315 = vmatpush2.bf16.xpose.msra.mxu0 0
        %2316 = vmatprep.subr.bf16.mxu0 0
        %2317 = vmatpush2.bf16.xpose.msra.mxu0 0
        %2318 = vmatprep.subr.bf16.mxu0 0
        %2319 = vmatpush2.bf16.xpose.msra.mxu0 0
        %2320 = vmatprep.subr.bf16.mxu0 0
        %2321 = vmatpush2.bf16.xpose.msra.mxu0 0
        %2322 = vmatprep.subr.bf16.mxu0 0
        %2323 = vmatpush2.bf16.xpose.msra.mxu0 0
        %2324 = vmatprep.mubr.bf16.mxu0 0
        %2325 = vmatmul.mubr.bf16.gmra.mxu0 %v2287
        %v2326 = vpop.f32.mrf.mxu0
        %v2327 = vadd.f32 0.0, %v2326
        %v2328 = vpop.f32.mrf.mxu0
        %v2329 = vpop.f32.mrf.mxu0
        %v2330 = vadd.f32 0.0, %v2329
        %v2331 = vpop.f32.mrf.mxu0
        %2332 = vdwg.mxu0
        %v2334 = vsel %vm1486, %v1081, 0
        %v2337 = vsel %vm1486, %v1273, 0
        %2339 = vmatprep.subr.bf16.mxu0 0
        %2340 = vmatpush1.bf16.xpose.msra.mxu0 0
        %2341 = vmatprep.subr.bf16.mxu0 0
        %2342 = vmatpush1.bf16.xpose.msra.mxu0 0
        %2343 = vmatprep.subr.bf16.mxu0 0
        %2344 = vmatpush1.bf16.xpose.msra.mxu0 0
        %2345 = vmatprep.subr.bf16.mxu0 0
        %2346 = vmatpush1.bf16.xpose.msra.mxu0 0
        %2347 = vmatprep.subr.bf16.mxu0 0
        %2348 = vmatpush1.bf16.xpose.msra.mxu0 0
        %2349 = vmatprep.subr.bf16.mxu0 0
        %2350 = vmatpush1.bf16.xpose.msra.mxu0 0
        %2351 = vmatprep.subr.bf16.mxu0 0
        %2352 = vmatpush1.bf16.xpose.msra.mxu0 0
        %2353 = vmatprep.subr.bf16.mxu0 0
        %2354 = vmatpush1.bf16.xpose.msra.mxu0 %v2337
        %2355 = vmatprep.subr.bf16.mxu0 0
        %2356 = vmatpush2.bf16.xpose.msra.mxu0 0
        %2357 = vmatprep.subr.bf16.mxu0 0
        %2358 = vmatpush2.bf16.xpose.msra.mxu0 0
        %2359 = vmatprep.subr.bf16.mxu0 0
        %2360 = vmatpush2.bf16.xpose.msra.mxu0 0
        %2361 = vmatprep.subr.bf16.mxu0 0
        %2362 = vmatpush2.bf16.xpose.msra.mxu0 0
        %2363 = vmatprep.subr.bf16.mxu0 0
        %2364 = vmatpush2.bf16.xpose.msra.mxu0 0
        %2365 = vmatprep.subr.bf16.mxu0 0
        %2366 = vmatpush2.bf16.xpose.msra.mxu0 0
        %2367 = vmatprep.subr.bf16.mxu0 0
        %2368 = vmatpush2.bf16.xpose.msra.mxu0 0
        %2369 = vmatprep.subr.bf16.mxu0 0
        %2370 = vmatpush2.bf16.xpose.msra.mxu0 0
        %2371 = vmatprep.mubr.bf16.mxu0 0
        %2372 = vmatmul.mubr.bf16.gmra.mxu0 %v2334
        %v2373 = vpop.f32.mrf.mxu0
        %v2374 = vadd.f32 0.0, %v2373
        %v2375 = vpop.f32.mrf.mxu0
        %v2376 = vpop.f32.mrf.mxu0
        %v2377 = vadd.f32 0.0, %v2376
        %v2378 = vpop.f32.mrf.mxu0
        %2379 = vdwg.mxu0
        %v2381 = vsel %vm1486, %v1082, 0
        %v2384 = vsel %vm1486, %v1274, 0
        %2386 = vmatprep.subr.bf16.mxu0 0
        %2387 = vmatpush1.bf16.xpose.msra.mxu0 0
        %2388 = vmatprep.subr.bf16.mxu0 0
        %2389 = vmatpush1.bf16.xpose.msra.mxu0 0
        %2390 = vmatprep.subr.bf16.mxu0 0
        %2391 = vmatpush1.bf16.xpose.msra.mxu0 0
        %2392 = vmatprep.subr.bf16.mxu0 0
        %2393 = vmatpush1.bf16.xpose.msra.mxu0 0
        %2394 = vmatprep.subr.bf16.mxu0 0
        %2395 = vmatpush1.bf16.xpose.msra.mxu0 0
        %2396 = vmatprep.subr.bf16.mxu0 0
        %2397 = vmatpush1.bf16.xpose.msra.mxu0 0
        %2398 = vmatprep.subr.bf16.mxu0 0
        %2399 = vmatpush1.bf16.xpose.msra.mxu0 0
        %2400 = vmatprep.subr.bf16.mxu0 0
        %2401 = vmatpush1.bf16.xpose.msra.mxu0 %v2384
        %2402 = vmatprep.subr.bf16.mxu0 0
        %2403 = vmatpush2.bf16.xpose.msra.mxu0 0
        %2404 = vmatprep.subr.bf16.mxu0 0
        %2405 = vmatpush2.bf16.xpose.msra.mxu0 0
        %2406 = vmatprep.subr.bf16.mxu0 0
        %2407 = vmatpush2.bf16.xpose.msra.mxu0 0
        %2408 = vmatprep.subr.bf16.mxu0 0
        %2409 = vmatpush2.bf16.xpose.msra.mxu0 0
        %2410 = vmatprep.subr.bf16.mxu0 0
        %2411 = vmatpush2.bf16.xpose.msra.mxu0 0
        %2412 = vmatprep.subr.bf16.mxu0 0
        %2413 = vmatpush2.bf16.xpose.msra.mxu0 0
        %2414 = vmatprep.subr.bf16.mxu0 0
        %2415 = vmatpush2.bf16.xpose.msra.mxu0 0
        %2416 = vmatprep.subr.bf16.mxu0 0
        %2417 = vmatpush2.bf16.xpose.msra.mxu0 0
        %2418 = vmatprep.mubr.bf16.mxu0 0
        %2419 = vmatmul.mubr.bf16.gmra.mxu0 %v2381
        %v2420 = vpop.f32.mrf.mxu0
        %v2421 = vadd.f32 0.0, %v2420
        %v2422 = vpop.f32.mrf.mxu0
        %v2423 = vpop.f32.mrf.mxu0
        %v2424 = vadd.f32 0.0, %v2423
        %v2425 = vpop.f32.mrf.mxu0
        %2426 = vdwg.mxu0
        %v2428 = vsel %vm1486, %v1083, 0
        %v2431 = vsel %vm1486, %v1275, 0
        %2433 = vmatprep.subr.bf16.mxu0 0
        %2434 = vmatpush1.bf16.xpose.msra.mxu0 0
        %2435 = vmatprep.subr.bf16.mxu0 0
        %2436 = vmatpush1.bf16.xpose.msra.mxu0 0
        %2437 = vmatprep.subr.bf16.mxu0 0
        %2438 = vmatpush1.bf16.xpose.msra.mxu0 0
        %2439 = vmatprep.subr.bf16.mxu0 0
        %2440 = vmatpush1.bf16.xpose.msra.mxu0 0
        %2441 = vmatprep.subr.bf16.mxu0 0
        %2442 = vmatpush1.bf16.xpose.msra.mxu0 0
        %2443 = vmatprep.subr.bf16.mxu0 0
        %2444 = vmatpush1.bf16.xpose.msra.mxu0 0
        %2445 = vmatprep.subr.bf16.mxu0 0
        %2446 = vmatpush1.bf16.xpose.msra.mxu0 0
        %2447 = vmatprep.subr.bf16.mxu0 0
        %2448 = vmatpush1.bf16.xpose.msra.mxu0 %v2431
        %2449 = vmatprep.subr.bf16.mxu0 0
        %2450 = vmatpush2.bf16.xpose.msra.mxu0 0
        %2451 = vmatprep.subr.bf16.mxu0 0
        %2452 = vmatpush2.bf16.xpose.msra.mxu0 0
        %2453 = vmatprep.subr.bf16.mxu0 0
        %2454 = vmatpush2.bf16.xpose.msra.mxu0 0
        %2455 = vmatprep.subr.bf16.mxu0 0
        %2456 = vmatpush2.bf16.xpose.msra.mxu0 0
        %2457 = vmatprep.subr.bf16.mxu0 0
        %2458 = vmatpush2.bf16.xpose.msra.mxu0 0
        %2459 = vmatprep.subr.bf16.mxu0 0
        %2460 = vmatpush2.bf16.xpose.msra.mxu0 0
        %2461 = vmatprep.subr.bf16.mxu0 0
        %2462 = vmatpush2.bf16.xpose.msra.mxu0 0
        %2463 = vmatprep.subr.bf16.mxu0 0
        %2464 = vmatpush2.bf16.xpose.msra.mxu0 0
        %2465 = vmatprep.mubr.bf16.mxu0 0
        %2466 = vmatmul.mubr.bf16.gmra.mxu0 %v2428
        %v2467 = vpop.f32.mrf.mxu0
        %v2468 = vadd.f32 0.0, %v2467
        %v2469 = vpop.f32.mrf.mxu0
        %v2470 = vpop.f32.mrf.mxu0
        %v2471 = vadd.f32 0.0, %v2470
        %v2472 = vpop.f32.mrf.mxu0
        %2473 = vdwg.mxu0
        %v2475 = vsel %vm1486, %v1084, 0
        %v2478 = vsel %vm1486, %v1276, 0
        %2480 = vmatprep.subr.bf16.mxu0 0
        %2481 = vmatpush1.bf16.xpose.msra.mxu0 0
        %2482 = vmatprep.subr.bf16.mxu0 0
        %2483 = vmatpush1.bf16.xpose.msra.mxu0 0
        %2484 = vmatprep.subr.bf16.mxu0 0
        %2485 = vmatpush1.bf16.xpose.msra.mxu0 0
        %2486 = vmatprep.subr.bf16.mxu0 0
        %2487 = vmatpush1.bf16.xpose.msra.mxu0 0
        %2488 = vmatprep.subr.bf16.mxu0 0
        %2489 = vmatpush1.bf16.xpose.msra.mxu0 0
        %2490 = vmatprep.subr.bf16.mxu0 0
        %2491 = vmatpush1.bf16.xpose.msra.mxu0 0
        %2492 = vmatprep.subr.bf16.mxu0 0
        %2493 = vmatpush1.bf16.xpose.msra.mxu0 0
        %2494 = vmatprep.subr.bf16.mxu0 0
        %2495 = vmatpush1.bf16.xpose.msra.mxu0 %v2478
        %2496 = vmatprep.subr.bf16.mxu0 0
        %2497 = vmatpush2.bf16.xpose.msra.mxu0 0
        %2498 = vmatprep.subr.bf16.mxu0 0
        %2499 = vmatpush2.bf16.xpose.msra.mxu0 0
        %2500 = vmatprep.subr.bf16.mxu0 0
        %2501 = vmatpush2.bf16.xpose.msra.mxu0 0
        %2502 = vmatprep.subr.bf16.mxu0 0
        %2503 = vmatpush2.bf16.xpose.msra.mxu0 0
        %2504 = vmatprep.subr.bf16.mxu0 0
        %2505 = vmatpush2.bf16.xpose.msra.mxu0 0
        %2506 = vmatprep.subr.bf16.mxu0 0
        %2507 = vmatpush2.bf16.xpose.msra.mxu0 0
        %2508 = vmatprep.subr.bf16.mxu0 0
        %2509 = vmatpush2.bf16.xpose.msra.mxu0 0
        %2510 = vmatprep.subr.bf16.mxu0 0
        %2511 = vmatpush2.bf16.xpose.msra.mxu0 0
        %2512 = vmatprep.mubr.bf16.mxu0 0
        %2513 = vmatmul.mubr.bf16.gmra.mxu0 %v2475
        %v2514 = vpop.f32.mrf.mxu0
        %v2515 = vadd.f32 0.0, %v2514
        %v2516 = vpop.f32.mrf.mxu0
        %v2517 = vpop.f32.mrf.mxu0
        %v2518 = vadd.f32 0.0, %v2517
        %v2519 = vpop.f32.mrf.mxu0
        %2520 = vdwg.mxu0
        %v2522 = vsel %vm1486, %v1085, 0
        %v2525 = vsel %vm1486, %v1277, 0
        %2527 = vmatprep.subr.bf16.mxu0 0
        %2528 = vmatpush1.bf16.xpose.msra.mxu0 0
        %2529 = vmatprep.subr.bf16.mxu0 0
        %2530 = vmatpush1.bf16.xpose.msra.mxu0 0
        %2531 = vmatprep.subr.bf16.mxu0 0
        %2532 = vmatpush1.bf16.xpose.msra.mxu0 0
        %2533 = vmatprep.subr.bf16.mxu0 0
        %2534 = vmatpush1.bf16.xpose.msra.mxu0 0
        %2535 = vmatprep.subr.bf16.mxu0 0
        %2536 = vmatpush1.bf16.xpose.msra.mxu0 0
        %2537 = vmatprep.subr.bf16.mxu0 0
        %2538 = vmatpush1.bf16.xpose.msra.mxu0 0
        %2539 = vmatprep.subr.bf16.mxu0 0
        %2540 = vmatpush1.bf16.xpose.msra.mxu0 0
        %2541 = vmatprep.subr.bf16.mxu0 0
        %2542 = vmatpush1.bf16.xpose.msra.mxu0 %v2525
        %2543 = vmatprep.subr.bf16.mxu0 0
        %2544 = vmatpush2.bf16.xpose.msra.mxu0 0
        %2545 = vmatprep.subr.bf16.mxu0 0
        %2546 = vmatpush2.bf16.xpose.msra.mxu0 0
        %2547 = vmatprep.subr.bf16.mxu0 0
        %2548 = vmatpush2.bf16.xpose.msra.mxu0 0
        %2549 = vmatprep.subr.bf16.mxu0 0
        %2550 = vmatpush2.bf16.xpose.msra.mxu0 0
        %2551 = vmatprep.subr.bf16.mxu0 0
        %2552 = vmatpush2.bf16.xpose.msra.mxu0 0
        %2553 = vmatprep.subr.bf16.mxu0 0
        %2554 = vmatpush2.bf16.xpose.msra.mxu0 0
        %2555 = vmatprep.subr.bf16.mxu0 0
        %2556 = vmatpush2.bf16.xpose.msra.mxu0 0
        %2557 = vmatprep.subr.bf16.mxu0 0
        %2558 = vmatpush2.bf16.xpose.msra.mxu0 0
        %2559 = vmatprep.mubr.bf16.mxu0 0
        %2560 = vmatmul.mubr.bf16.gmra.mxu0 %v2522
        %v2561 = vpop.f32.mrf.mxu0
        %v2562 = vadd.f32 0.0, %v2561
        %v2563 = vpop.f32.mrf.mxu0
        %v2564 = vpop.f32.mrf.mxu0
        %v2565 = vadd.f32 0.0, %v2564
        %v2566 = vpop.f32.mrf.mxu0
        %2567 = vdwg.mxu0
        %v2569 = vsel %vm1486, %v1086, 0
        %v2572 = vsel %vm1486, %v1278, 0
        %2574 = vmatprep.subr.bf16.mxu0 0
        %2575 = vmatpush1.bf16.xpose.msra.mxu0 0
        %2576 = vmatprep.subr.bf16.mxu0 0
        %2577 = vmatpush1.bf16.xpose.msra.mxu0 0
        %2578 = vmatprep.subr.bf16.mxu0 0
        %2579 = vmatpush1.bf16.xpose.msra.mxu0 0
        %2580 = vmatprep.subr.bf16.mxu0 0
        %2581 = vmatpush1.bf16.xpose.msra.mxu0 0
        %2582 = vmatprep.subr.bf16.mxu0 0
        %2583 = vmatpush1.bf16.xpose.msra.mxu0 0
        %2584 = vmatprep.subr.bf16.mxu0 0
        %2585 = vmatpush1.bf16.xpose.msra.mxu0 0
        %2586 = vmatprep.subr.bf16.mxu0 0
        %2587 = vmatpush1.bf16.xpose.msra.mxu0 0
        %2588 = vmatprep.subr.bf16.mxu0 0
        %2589 = vmatpush1.bf16.xpose.msra.mxu0 %v2572
        %2590 = vmatprep.subr.bf16.mxu0 0
        %2591 = vmatpush2.bf16.xpose.msra.mxu0 0
        %2592 = vmatprep.subr.bf16.mxu0 0
        %2593 = vmatpush2.bf16.xpose.msra.mxu0 0
        %2594 = vmatprep.subr.bf16.mxu0 0
        %2595 = vmatpush2.bf16.xpose.msra.mxu0 0
        %2596 = vmatprep.subr.bf16.mxu0 0
        %2597 = vmatpush2.bf16.xpose.msra.mxu0 0
        %2598 = vmatprep.subr.bf16.mxu0 0
        %2599 = vmatpush2.bf16.xpose.msra.mxu0 0
        %2600 = vmatprep.subr.bf16.mxu0 0
        %2601 = vmatpush2.bf16.xpose.msra.mxu0 0
        %2602 = vmatprep.subr.bf16.mxu0 0
        %2603 = vmatpush2.bf16.xpose.msra.mxu0 0
        %2604 = vmatprep.subr.bf16.mxu0 0
        %2605 = vmatpush2.bf16.xpose.msra.mxu0 0
        %2606 = vmatprep.mubr.bf16.mxu0 0
        %2607 = vmatmul.mubr.bf16.gmra.mxu0 %v2569
        %v2608 = vpop.f32.mrf.mxu0
        %v2609 = vadd.f32 0.0, %v2608
        %v2610 = vpop.f32.mrf.mxu0
        %v2611 = vpop.f32.mrf.mxu0
        %v2612 = vadd.f32 0.0, %v2611
        %v2613 = vpop.f32.mrf.mxu0
        %2614 = vdwg.mxu0
        %v2616 = vsel %vm1486, %v1087, 0
        %v2619 = vsel %vm1486, %v1279, 0
        %2621 = vmatprep.subr.bf16.mxu0 0
        %2622 = vmatpush1.bf16.xpose.msra.mxu0 0
        %2623 = vmatprep.subr.bf16.mxu0 0
        %2624 = vmatpush1.bf16.xpose.msra.mxu0 0
        %2625 = vmatprep.subr.bf16.mxu0 0
        %2626 = vmatpush1.bf16.xpose.msra.mxu0 0
        %2627 = vmatprep.subr.bf16.mxu0 0
        %2628 = vmatpush1.bf16.xpose.msra.mxu0 0
        %2629 = vmatprep.subr.bf16.mxu0 0
        %2630 = vmatpush1.bf16.xpose.msra.mxu0 0
        %2631 = vmatprep.subr.bf16.mxu0 0
        %2632 = vmatpush1.bf16.xpose.msra.mxu0 0
        %2633 = vmatprep.subr.bf16.mxu0 0
        %2634 = vmatpush1.bf16.xpose.msra.mxu0 0
        %2635 = vmatprep.subr.bf16.mxu0 0
        %2636 = vmatpush1.bf16.xpose.msra.mxu0 %v2619
        %2637 = vmatprep.subr.bf16.mxu0 0
        %2638 = vmatpush2.bf16.xpose.msra.mxu0 0
        %2639 = vmatprep.subr.bf16.mxu0 0
        %2640 = vmatpush2.bf16.xpose.msra.mxu0 0
        %2641 = vmatprep.subr.bf16.mxu0 0
        %2642 = vmatpush2.bf16.xpose.msra.mxu0 0
        %2643 = vmatprep.subr.bf16.mxu0 0
        %2644 = vmatpush2.bf16.xpose.msra.mxu0 0
        %2645 = vmatprep.subr.bf16.mxu0 0
        %2646 = vmatpush2.bf16.xpose.msra.mxu0 0
        %2647 = vmatprep.subr.bf16.mxu0 0
        %2648 = vmatpush2.bf16.xpose.msra.mxu0 0
        %2649 = vmatprep.subr.bf16.mxu0 0
        %2650 = vmatpush2.bf16.xpose.msra.mxu0 0
        %2651 = vmatprep.subr.bf16.mxu0 0
        %2652 = vmatpush2.bf16.xpose.msra.mxu0 0
        %2653 = vmatprep.mubr.bf16.mxu0 0
        %2654 = vmatmul.mubr.bf16.gmra.mxu0 %v2616
        %v2655 = vpop.f32.mrf.mxu0
        %v2656 = vadd.f32 0.0, %v2655
        %v2657 = vpop.f32.mrf.mxu0
        %v2658 = vpop.f32.mrf.mxu0
        %v2659 = vadd.f32 0.0, %v2658
        %v2660 = vpop.f32.mrf.mxu0
        %2661 = vdwg.mxu0
        %v2663 = vsel %vm1486, %v1088, 0
        %v2666 = vsel %vm1486, %v1280, 0
        %2668 = vmatprep.subr.bf16.mxu0 0
        %2669 = vmatpush1.bf16.xpose.msra.mxu0 0
        %2670 = vmatprep.subr.bf16.mxu0 0
        %2671 = vmatpush1.bf16.xpose.msra.mxu0 0
        %2672 = vmatprep.subr.bf16.mxu0 0
        %2673 = vmatpush1.bf16.xpose.msra.mxu0 0
        %2674 = vmatprep.subr.bf16.mxu0 0
        %2675 = vmatpush1.bf16.xpose.msra.mxu0 0
        %2676 = vmatprep.subr.bf16.mxu0 0
        %2677 = vmatpush1.bf16.xpose.msra.mxu0 0
        %2678 = vmatprep.subr.bf16.mxu0 0
        %2679 = vmatpush1.bf16.xpose.msra.mxu0 0
        %2680 = vmatprep.subr.bf16.mxu0 0
        %2681 = vmatpush1.bf16.xpose.msra.mxu0 0
        %2682 = vmatprep.subr.bf16.mxu0 0
        %2683 = vmatpush1.bf16.xpose.msra.mxu0 %v2666
        %2684 = vmatprep.subr.bf16.mxu0 0
        %2685 = vmatpush2.bf16.xpose.msra.mxu0 0
        %2686 = vmatprep.subr.bf16.mxu0 0
        %2687 = vmatpush2.bf16.xpose.msra.mxu0 0
        %2688 = vmatprep.subr.bf16.mxu0 0
        %2689 = vmatpush2.bf16.xpose.msra.mxu0 0
        %2690 = vmatprep.subr.bf16.mxu0 0
        %2691 = vmatpush2.bf16.xpose.msra.mxu0 0
        %2692 = vmatprep.subr.bf16.mxu0 0
        %2693 = vmatpush2.bf16.xpose.msra.mxu0 0
        %2694 = vmatprep.subr.bf16.mxu0 0
        %2695 = vmatpush2.bf16.xpose.msra.mxu0 0
        %2696 = vmatprep.subr.bf16.mxu0 0
        %2697 = vmatpush2.bf16.xpose.msra.mxu0 0
        %2698 = vmatprep.subr.bf16.mxu0 0
        %2699 = vmatpush2.bf16.xpose.msra.mxu0 0
        %2700 = vmatprep.mubr.bf16.mxu0 0
        %2701 = vmatmul.mubr.bf16.gmra.mxu0 %v2663
        %v2702 = vpop.f32.mrf.mxu0
        %v2703 = vadd.f32 0.0, %v2702
        %v2704 = vpop.f32.mrf.mxu0
        %v2705 = vpop.f32.mrf.mxu0
        %v2706 = vadd.f32 0.0, %v2705
        %v2707 = vpop.f32.mrf.mxu0
        %2708 = vdwg.mxu0
        %v2710 = vsel %vm1486, %v1089, 0
        %v2713 = vsel %vm1486, %v1281, 0
        %2715 = vmatprep.subr.bf16.mxu0 0
        %2716 = vmatpush1.bf16.xpose.msra.mxu0 0
        %2717 = vmatprep.subr.bf16.mxu0 0
        %2718 = vmatpush1.bf16.xpose.msra.mxu0 0
        %2719 = vmatprep.subr.bf16.mxu0 0
        %2720 = vmatpush1.bf16.xpose.msra.mxu0 0
        %2721 = vmatprep.subr.bf16.mxu0 0
        %2722 = vmatpush1.bf16.xpose.msra.mxu0 0
        %2723 = vmatprep.subr.bf16.mxu0 0
        %2724 = vmatpush1.bf16.xpose.msra.mxu0 0
        %2725 = vmatprep.subr.bf16.mxu0 0
        %2726 = vmatpush1.bf16.xpose.msra.mxu0 0
        %2727 = vmatprep.subr.bf16.mxu0 0
        %2728 = vmatpush1.bf16.xpose.msra.mxu0 0
        %2729 = vmatprep.subr.bf16.mxu0 0
        %2730 = vmatpush1.bf16.xpose.msra.mxu0 %v2713
        %2731 = vmatprep.subr.bf16.mxu0 0
        %2732 = vmatpush2.bf16.xpose.msra.mxu0 0
        %2733 = vmatprep.subr.bf16.mxu0 0
        %2734 = vmatpush2.bf16.xpose.msra.mxu0 0
        %2735 = vmatprep.subr.bf16.mxu0 0
        %2736 = vmatpush2.bf16.xpose.msra.mxu0 0
        %2737 = vmatprep.subr.bf16.mxu0 0
        %2738 = vmatpush2.bf16.xpose.msra.mxu0 0
        %2739 = vmatprep.subr.bf16.mxu0 0
        %2740 = vmatpush2.bf16.xpose.msra.mxu0 0
        %2741 = vmatprep.subr.bf16.mxu0 0
        %2742 = vmatpush2.bf16.xpose.msra.mxu0 0
        %2743 = vmatprep.subr.bf16.mxu0 0
        %2744 = vmatpush2.bf16.xpose.msra.mxu0 0
        %2745 = vmatprep.subr.bf16.mxu0 0
        %2746 = vmatpush2.bf16.xpose.msra.mxu0 0
        %2747 = vmatprep.mubr.bf16.mxu0 0
        %2748 = vmatmul.mubr.bf16.gmra.mxu0 %v2710
        %v2749 = vpop.f32.mrf.mxu0
        %v2750 = vadd.f32 0.0, %v2749
        %v2751 = vpop.f32.mrf.mxu0
        %v2752 = vpop.f32.mrf.mxu0
        %v2753 = vadd.f32 0.0, %v2752
        %v2754 = vpop.f32.mrf.mxu0
        %2755 = vdwg.mxu0
        %v2757 = vsel %vm1486, %v1090, 0
        %v2760 = vsel %vm1486, %v1282, 0
        %2762 = vmatprep.subr.bf16.mxu0 0
        %2763 = vmatpush1.bf16.xpose.msra.mxu0 0
        %2764 = vmatprep.subr.bf16.mxu0 0
        %2765 = vmatpush1.bf16.xpose.msra.mxu0 0
        %2766 = vmatprep.subr.bf16.mxu0 0
        %2767 = vmatpush1.bf16.xpose.msra.mxu0 0
        %2768 = vmatprep.subr.bf16.mxu0 0
        %2769 = vmatpush1.bf16.xpose.msra.mxu0 0
        %2770 = vmatprep.subr.bf16.mxu0 0
        %2771 = vmatpush1.bf16.xpose.msra.mxu0 0
        %2772 = vmatprep.subr.bf16.mxu0 0
        %2773 = vmatpush1.bf16.xpose.msra.mxu0 0
        %2774 = vmatprep.subr.bf16.mxu0 0
        %2775 = vmatpush1.bf16.xpose.msra.mxu0 0
        %2776 = vmatprep.subr.bf16.mxu0 0
        %2777 = vmatpush1.bf16.xpose.msra.mxu0 %v2760
        %2778 = vmatprep.subr.bf16.mxu0 0
        %2779 = vmatpush2.bf16.xpose.msra.mxu0 0
        %2780 = vmatprep.subr.bf16.mxu0 0
        %2781 = vmatpush2.bf16.xpose.msra.mxu0 0
        %2782 = vmatprep.subr.bf16.mxu0 0
        %2783 = vmatpush2.bf16.xpose.msra.mxu0 0
        %2784 = vmatprep.subr.bf16.mxu0 0
        %2785 = vmatpush2.bf16.xpose.msra.mxu0 0
        %2786 = vmatprep.subr.bf16.mxu0 0
        %2787 = vmatpush2.bf16.xpose.msra.mxu0 0
        %2788 = vmatprep.subr.bf16.mxu0 0
        %2789 = vmatpush2.bf16.xpose.msra.mxu0 0
        %2790 = vmatprep.subr.bf16.mxu0 0
        %2791 = vmatpush2.bf16.xpose.msra.mxu0 0
        %2792 = vmatprep.subr.bf16.mxu0 0
        %2793 = vmatpush2.bf16.xpose.msra.mxu0 0
        %2794 = vmatprep.mubr.bf16.mxu0 0
        %2795 = vmatmul.mubr.bf16.gmra.mxu0 %v2757
        %v2796 = vpop.f32.mrf.mxu0
        %v2797 = vadd.f32 0.0, %v2796
        %v2798 = vpop.f32.mrf.mxu0
        %v2799 = vpop.f32.mrf.mxu0
        %v2800 = vadd.f32 0.0, %v2799
        %v2801 = vpop.f32.mrf.mxu0
        %2802 = vdwg.mxu0
        %v2804 = vsel %vm1486, %v1091, 0
        %v2807 = vsel %vm1486, %v1283, 0
        %2809 = vmatprep.subr.bf16.mxu0 0
        %2810 = vmatpush1.bf16.xpose.msra.mxu0 0
        %2811 = vmatprep.subr.bf16.mxu0 0
        %2812 = vmatpush1.bf16.xpose.msra.mxu0 0
        %2813 = vmatprep.subr.bf16.mxu0 0
        %2814 = vmatpush1.bf16.xpose.msra.mxu0 0
        %2815 = vmatprep.subr.bf16.mxu0 0
        %2816 = vmatpush1.bf16.xpose.msra.mxu0 0
        %2817 = vmatprep.subr.bf16.mxu0 0
        %2818 = vmatpush1.bf16.xpose.msra.mxu0 0
        %2819 = vmatprep.subr.bf16.mxu0 0
        %2820 = vmatpush1.bf16.xpose.msra.mxu0 0
        %2821 = vmatprep.subr.bf16.mxu0 0
        %2822 = vmatpush1.bf16.xpose.msra.mxu0 0
        %2823 = vmatprep.subr.bf16.mxu0 0
        %2824 = vmatpush1.bf16.xpose.msra.mxu0 %v2807
        %2825 = vmatprep.subr.bf16.mxu0 0
        %2826 = vmatpush2.bf16.xpose.msra.mxu0 0
        %2827 = vmatprep.subr.bf16.mxu0 0
        %2828 = vmatpush2.bf16.xpose.msra.mxu0 0
        %2829 = vmatprep.subr.bf16.mxu0 0
        %2830 = vmatpush2.bf16.xpose.msra.mxu0 0
        %2831 = vmatprep.subr.bf16.mxu0 0
        %2832 = vmatpush2.bf16.xpose.msra.mxu0 0
        %2833 = vmatprep.subr.bf16.mxu0 0
        %2834 = vmatpush2.bf16.xpose.msra.mxu0 0
        %2835 = vmatprep.subr.bf16.mxu0 0
        %2836 = vmatpush2.bf16.xpose.msra.mxu0 0
        %2837 = vmatprep.subr.bf16.mxu0 0
        %2838 = vmatpush2.bf16.xpose.msra.mxu0 0
        %2839 = vmatprep.subr.bf16.mxu0 0
        %2840 = vmatpush2.bf16.xpose.msra.mxu0 0
        %2841 = vmatprep.mubr.bf16.mxu0 0
        %2842 = vmatmul.mubr.bf16.gmra.mxu0 %v2804
        %v2843 = vpop.f32.mrf.mxu0
        %v2844 = vadd.f32 0.0, %v2843
        %v2845 = vpop.f32.mrf.mxu0
        %v2846 = vpop.f32.mrf.mxu0
        %v2847 = vadd.f32 0.0, %v2846
        %v2848 = vpop.f32.mrf.mxu0
        %2849 = vdwg.mxu0
        %v2851 = vsel %vm1486, %v1092, 0
        %v2854 = vsel %vm1486, %v1284, 0
        %2856 = vmatprep.subr.bf16.mxu0 0
        %2857 = vmatpush1.bf16.xpose.msra.mxu0 0
        %2858 = vmatprep.subr.bf16.mxu0 0
        %2859 = vmatpush1.bf16.xpose.msra.mxu0 0
        %2860 = vmatprep.subr.bf16.mxu0 0
        %2861 = vmatpush1.bf16.xpose.msra.mxu0 0
        %2862 = vmatprep.subr.bf16.mxu0 0
        %2863 = vmatpush1.bf16.xpose.msra.mxu0 0
        %2864 = vmatprep.subr.bf16.mxu0 0
        %2865 = vmatpush1.bf16.xpose.msra.mxu0 0
        %2866 = vmatprep.subr.bf16.mxu0 0
        %2867 = vmatpush1.bf16.xpose.msra.mxu0 0
        %2868 = vmatprep.subr.bf16.mxu0 0
        %2869 = vmatpush1.bf16.xpose.msra.mxu0 0
        %2870 = vmatprep.subr.bf16.mxu0 0
        %2871 = vmatpush1.bf16.xpose.msra.mxu0 %v2854
        %2872 = vmatprep.subr.bf16.mxu0 0
        %2873 = vmatpush2.bf16.xpose.msra.mxu0 0
        %2874 = vmatprep.subr.bf16.mxu0 0
        %2875 = vmatpush2.bf16.xpose.msra.mxu0 0
        %2876 = vmatprep.subr.bf16.mxu0 0
        %2877 = vmatpush2.bf16.xpose.msra.mxu0 0
        %2878 = vmatprep.subr.bf16.mxu0 0
        %2879 = vmatpush2.bf16.xpose.msra.mxu0 0
        %2880 = vmatprep.subr.bf16.mxu0 0
        %2881 = vmatpush2.bf16.xpose.msra.mxu0 0
        %2882 = vmatprep.subr.bf16.mxu0 0
        %2883 = vmatpush2.bf16.xpose.msra.mxu0 0
        %2884 = vmatprep.subr.bf16.mxu0 0
        %2885 = vmatpush2.bf16.xpose.msra.mxu0 0
        %2886 = vmatprep.subr.bf16.mxu0 0
        %2887 = vmatpush2.bf16.xpose.msra.mxu0 0
        %2888 = vmatprep.mubr.bf16.mxu0 0
        %2889 = vmatmul.mubr.bf16.gmra.mxu0 %v2851
        %v2890 = vpop.f32.mrf.mxu0
        %v2891 = vadd.f32 0.0, %v2890
        %v2892 = vpop.f32.mrf.mxu0
        %v2893 = vpop.f32.mrf.mxu0
        %v2894 = vadd.f32 0.0, %v2893
        %v2895 = vpop.f32.mrf.mxu0
        %2896 = vdwg.mxu0
        %v2898 = vsel %vm1486, %v1093, 0
        %v2901 = vsel %vm1486, %v1285, 0
        %2903 = vmatprep.subr.bf16.mxu0 0
        %2904 = vmatpush1.bf16.xpose.msra.mxu0 0
        %2905 = vmatprep.subr.bf16.mxu0 0
        %2906 = vmatpush1.bf16.xpose.msra.mxu0 0
        %2907 = vmatprep.subr.bf16.mxu0 0
        %2908 = vmatpush1.bf16.xpose.msra.mxu0 0
        %2909 = vmatprep.subr.bf16.mxu0 0
        %2910 = vmatpush1.bf16.xpose.msra.mxu0 0
        %2911 = vmatprep.subr.bf16.mxu0 0
        %2912 = vmatpush1.bf16.xpose.msra.mxu0 0
        %2913 = vmatprep.subr.bf16.mxu0 0
        %2914 = vmatpush1.bf16.xpose.msra.mxu0 0
        %2915 = vmatprep.subr.bf16.mxu0 0
        %2916 = vmatpush1.bf16.xpose.msra.mxu0 0
        %2917 = vmatprep.subr.bf16.mxu0 0
        %2918 = vmatpush1.bf16.xpose.msra.mxu0 %v2901
        %2919 = vmatprep.subr.bf16.mxu0 0
        %2920 = vmatpush2.bf16.xpose.msra.mxu0 0
        %2921 = vmatprep.subr.bf16.mxu0 0
        %2922 = vmatpush2.bf16.xpose.msra.mxu0 0
        %2923 = vmatprep.subr.bf16.mxu0 0
        %2924 = vmatpush2.bf16.xpose.msra.mxu0 0
        %2925 = vmatprep.subr.bf16.mxu0 0
        %2926 = vmatpush2.bf16.xpose.msra.mxu0 0
        %2927 = vmatprep.subr.bf16.mxu0 0
        %2928 = vmatpush2.bf16.xpose.msra.mxu0 0
        %2929 = vmatprep.subr.bf16.mxu0 0
        %2930 = vmatpush2.bf16.xpose.msra.mxu0 0
        %2931 = vmatprep.subr.bf16.mxu0 0
        %2932 = vmatpush2.bf16.xpose.msra.mxu0 0
        %2933 = vmatprep.subr.bf16.mxu0 0
        %2934 = vmatpush2.bf16.xpose.msra.mxu0 0
        %2935 = vmatprep.mubr.bf16.mxu0 0
        %2936 = vmatmul.mubr.bf16.gmra.mxu0 %v2898
        %v2937 = vpop.f32.mrf.mxu0
        %v2938 = vadd.f32 0.0, %v2937
        %v2939 = vpop.f32.mrf.mxu0
        %v2940 = vpop.f32.mrf.mxu0
        %v2941 = vadd.f32 0.0, %v2940
        %v2942 = vpop.f32.mrf.mxu0
        %2943 = vdwg.mxu0
        %v2945 = vsel %vm1486, %v1094, 0
        %v2948 = vsel %vm1486, %v1286, 0
        %2950 = vmatprep.subr.bf16.mxu0 0
        %2951 = vmatpush1.bf16.xpose.msra.mxu0 0
        %2952 = vmatprep.subr.bf16.mxu0 0
        %2953 = vmatpush1.bf16.xpose.msra.mxu0 0
        %2954 = vmatprep.subr.bf16.mxu0 0
        %2955 = vmatpush1.bf16.xpose.msra.mxu0 0
        %2956 = vmatprep.subr.bf16.mxu0 0
        %2957 = vmatpush1.bf16.xpose.msra.mxu0 0
        %2958 = vmatprep.subr.bf16.mxu0 0
        %2959 = vmatpush1.bf16.xpose.msra.mxu0 0
        %2960 = vmatprep.subr.bf16.mxu0 0
        %2961 = vmatpush1.bf16.xpose.msra.mxu0 0
        %2962 = vmatprep.subr.bf16.mxu0 0
        %2963 = vmatpush1.bf16.xpose.msra.mxu0 0
        %2964 = vmatprep.subr.bf16.mxu0 0
        %2965 = vmatpush1.bf16.xpose.msra.mxu0 %v2948
        %2966 = vmatprep.subr.bf16.mxu0 0
        %2967 = vmatpush2.bf16.xpose.msra.mxu0 0
        %2968 = vmatprep.subr.bf16.mxu0 0
        %2969 = vmatpush2.bf16.xpose.msra.mxu0 0
        %2970 = vmatprep.subr.bf16.mxu0 0
        %2971 = vmatpush2.bf16.xpose.msra.mxu0 0
        %2972 = vmatprep.subr.bf16.mxu0 0
        %2973 = vmatpush2.bf16.xpose.msra.mxu0 0
        %2974 = vmatprep.subr.bf16.mxu0 0
        %2975 = vmatpush2.bf16.xpose.msra.mxu0 0
        %2976 = vmatprep.subr.bf16.mxu0 0
        %2977 = vmatpush2.bf16.xpose.msra.mxu0 0
        %2978 = vmatprep.subr.bf16.mxu0 0
        %2979 = vmatpush2.bf16.xpose.msra.mxu0 0
        %2980 = vmatprep.subr.bf16.mxu0 0
        %2981 = vmatpush2.bf16.xpose.msra.mxu0 0
        %2982 = vmatprep.mubr.bf16.mxu0 0
        %2983 = vmatmul.mubr.bf16.gmra.mxu0 %v2945
        %v2984 = vpop.f32.mrf.mxu0
        %v2985 = vadd.f32 0.0, %v2984
        %v2986 = vpop.f32.mrf.mxu0
        %v2987 = vpop.f32.mrf.mxu0
        %v2988 = vadd.f32 0.0, %v2987
        %v2989 = vpop.f32.mrf.mxu0
        %2990 = vdwg.mxu0
        %v2991 = vsel %vm1484, 1, 0
        %v2992 = vsel %vm1485, 1, 0
        %vm2993 = vcmp.eq.s32.totalorder %v2991, 1
        %vm2994 = vcmp.eq.s32.totalorder %v2992, 1
        %v2995 = vsel %vm2993, %v1528, -1e+30
        %v2996 = vsel %vm2994, %v1531, -1e+30
        %v2997 = vsel %vm2993, %v1575, -1e+30
        %v2998 = vsel %vm2994, %v1578, -1e+30
        %v2999 = vsel %vm2993, %v1622, -1e+30
        %v3000 = vsel %vm2994, %v1625, -1e+30
        %v3001 = vsel %vm2993, %v1669, -1e+30
        %v3002 = vsel %vm2994, %v1672, -1e+30
        %v3003 = vsel %vm2993, %v1716, -1e+30
        %v3004 = vsel %vm2994, %v1719, -1e+30
        %v3005 = vsel %vm2993, %v1763, -1e+30
        %v3006 = vsel %vm2994, %v1766, -1e+30
        %v3007 = vsel %vm2993, %v1810, -1e+30
        %v3008 = vsel %vm2994, %v1813, -1e+30
        %v3009 = vsel %vm2993, %v1857, -1e+30
        %v3010 = vsel %vm2994, %v1860, -1e+30
        %v3011 = vsel %vm2993, %v1904, -1e+30
        %v3012 = vsel %vm2994, %v1907, -1e+30
        %v3013 = vsel %vm2993, %v1951, -1e+30
        %v3014 = vsel %vm2994, %v1954, -1e+30
        %v3015 = vsel %vm2993, %v1998, -1e+30
        %v3016 = vsel %vm2994, %v2001, -1e+30
        %v3017 = vsel %vm2993, %v2045, -1e+30
        %v3018 = vsel %vm2994, %v2048, -1e+30
        %v3019 = vsel %vm2993, %v2092, -1e+30
        %v3020 = vsel %vm2994, %v2095, -1e+30
        %v3021 = vsel %vm2993, %v2139, -1e+30
        %v3022 = vsel %vm2994, %v2142, -1e+30
        %v3023 = vsel %vm2993, %v2186, -1e+30
        %v3024 = vsel %vm2994, %v2189, -1e+30
        %v3025 = vsel %vm2993, %v2233, -1e+30
        %v3026 = vsel %vm2994, %v2236, -1e+30
        %v3027 = vsel %vm2993, %v2280, -1e+30
        %v3028 = vsel %vm2994, %v2283, -1e+30
        %v3029 = vsel %vm2993, %v2327, -1e+30
        %v3030 = vsel %vm2994, %v2330, -1e+30
        %v3031 = vsel %vm2993, %v2374, -1e+30
        %v3032 = vsel %vm2994, %v2377, -1e+30
        %v3033 = vsel %vm2993, %v2421, -1e+30
        %v3034 = vsel %vm2994, %v2424, -1e+30
        %v3035 = vsel %vm2993, %v2468, -1e+30
        %v3036 = vsel %vm2994, %v2471, -1e+30
        %v3037 = vsel %vm2993, %v2515, -1e+30
        %v3038 = vsel %vm2994, %v2518, -1e+30
        %v3039 = vsel %vm2993, %v2562, -1e+30
        %v3040 = vsel %vm2994, %v2565, -1e+30
        %v3041 = vsel %vm2993, %v2609, -1e+30
        %v3042 = vsel %vm2994, %v2612, -1e+30
        %v3043 = vsel %vm2993, %v2656, -1e+30
        %v3044 = vsel %vm2994, %v2659, -1e+30
        %v3045 = vsel %vm2993, %v2703, -1e+30
        %v3046 = vsel %vm2994, %v2706, -1e+30
        %v3047 = vsel %vm2993, %v2750, -1e+30
        %v3048 = vsel %vm2994, %v2753, -1e+30
        %v3049 = vsel %vm2993, %v2797, -1e+30
        %v3050 = vsel %vm2994, %v2800, -1e+30
        %v3051 = vsel %vm2993, %v2844, -1e+30
        %v3052 = vsel %vm2994, %v2847, -1e+30
        %v3053 = vsel %vm2993, %v2891, -1e+30
        %v3054 = vsel %vm2994, %v2894, -1e+30
        %v3055 = vsel %vm2993, %v2938, -1e+30
        %v3056 = vsel %vm2994, %v2941, -1e+30
        %v3057 = vsel %vm2993, %v2985, -1e+30
        %v3058 = vsel %vm2994, %v2988, -1e+30
        %vm3059 = vcmask 130048
        %v3060 = vsel %vm3059, %v2995, -inf
        %3061 = vmax.xlane.f32.xlu0 %v3060
        %v3062 = vpop.xlane.xlu0 %3061
        %v3063 = vsel %vm3059, %v2996, -inf
        %3064 = vmax.xlane.f32.xlu0 %v3063
        %v3065 = vpop.xlane.xlu0 %3064
        %v3066 = vsel %vm3059, %v2997, -inf
        %3067 = vmax.xlane.f32.xlu0 %v3066
        %v3068 = vpop.xlane.xlu0 %3067
        %v3069 = vsel %vm3059, %v2998, -inf
        %3070 = vmax.xlane.f32.xlu0 %v3069
        %v3071 = vpop.xlane.xlu0 %3070
        %v3072 = vsel %vm3059, %v2999, -inf
        %3073 = vmax.xlane.f32.xlu0 %v3072
        %v3074 = vpop.xlane.xlu0 %3073
        %v3075 = vsel %vm3059, %v3000, -inf
        %3076 = vmax.xlane.f32.xlu0 %v3075
        %v3077 = vpop.xlane.xlu0 %3076
        %v3078 = vsel %vm3059, %v3001, -inf
        %3079 = vmax.xlane.f32.xlu0 %v3078
        %v3080 = vpop.xlane.xlu0 %3079
        %v3081 = vsel %vm3059, %v3002, -inf
        %3082 = vmax.xlane.f32.xlu0 %v3081
        %v3083 = vpop.xlane.xlu0 %3082
        %v3084 = vsel %vm3059, %v3003, -inf
        %3085 = vmax.xlane.f32.xlu0 %v3084
        %v3086 = vpop.xlane.xlu0 %3085
        %v3087 = vsel %vm3059, %v3004, -inf
        %3088 = vmax.xlane.f32.xlu0 %v3087
        %v3089 = vpop.xlane.xlu0 %3088
        %v3090 = vsel %vm3059, %v3005, -inf
        %3091 = vmax.xlane.f32.xlu0 %v3090
        %v3092 = vpop.xlane.xlu0 %3091
        %v3093 = vsel %vm3059, %v3006, -inf
        %3094 = vmax.xlane.f32.xlu0 %v3093
        %v3095 = vpop.xlane.xlu0 %3094
        %v3096 = vsel %vm3059, %v3007, -inf
        %3097 = vmax.xlane.f32.xlu0 %v3096
        %v3098 = vpop.xlane.xlu0 %3097
        %v3099 = vsel %vm3059, %v3008, -inf
        %3100 = vmax.xlane.f32.xlu0 %v3099
        %v3101 = vpop.xlane.xlu0 %3100
        %v3102 = vsel %vm3059, %v3009, -inf
        %3103 = vmax.xlane.f32.xlu0 %v3102
        %v3104 = vpop.xlane.xlu0 %3103
        %v3105 = vsel %vm3059, %v3010, -inf
        %3106 = vmax.xlane.f32.xlu0 %v3105
        %v3107 = vpop.xlane.xlu0 %3106
        %v3108 = vsel %vm3059, %v3011, -inf
        %3109 = vmax.xlane.f32.xlu0 %v3108
        %v3110 = vpop.xlane.xlu0 %3109
        %v3111 = vsel %vm3059, %v3012, -inf
        %3112 = vmax.xlane.f32.xlu0 %v3111
        %v3113 = vpop.xlane.xlu0 %3112
        %v3114 = vsel %vm3059, %v3013, -inf
        %3115 = vmax.xlane.f32.xlu0 %v3114
        %v3116 = vpop.xlane.xlu0 %3115
        %v3117 = vsel %vm3059, %v3014, -inf
        %3118 = vmax.xlane.f32.xlu0 %v3117
        %v3119 = vpop.xlane.xlu0 %3118
        %v3120 = vsel %vm3059, %v3015, -inf
        %3121 = vmax.xlane.f32.xlu0 %v3120
        %v3122 = vpop.xlane.xlu0 %3121
        %v3123 = vsel %vm3059, %v3016, -inf
        %3124 = vmax.xlane.f32.xlu0 %v3123
        %v3125 = vpop.xlane.xlu0 %3124
        %v3126 = vsel %vm3059, %v3017, -inf
        %3127 = vmax.xlane.f32.xlu0 %v3126
        %v3128 = vpop.xlane.xlu0 %3127
        %v3129 = vsel %vm3059, %v3018, -inf
        %3130 = vmax.xlane.f32.xlu0 %v3129
        %v3131 = vpop.xlane.xlu0 %3130
        %v3132 = vsel %vm3059, %v3019, -inf
        %3133 = vmax.xlane.f32.xlu0 %v3132
        %v3134 = vpop.xlane.xlu0 %3133
        %v3135 = vsel %vm3059, %v3020, -inf
        %3136 = vmax.xlane.f32.xlu0 %v3135
        %v3137 = vpop.xlane.xlu0 %3136
        %v3138 = vsel %vm3059, %v3021, -inf
        %3139 = vmax.xlane.f32.xlu0 %v3138
        %v3140 = vpop.xlane.xlu0 %3139
        %v3141 = vsel %vm3059, %v3022, -inf
        %3142 = vmax.xlane.f32.xlu0 %v3141
        %v3143 = vpop.xlane.xlu0 %3142
        %v3144 = vsel %vm3059, %v3023, -inf
        %3145 = vmax.xlane.f32.xlu0 %v3144
        %v3146 = vpop.xlane.xlu0 %3145
        %v3147 = vsel %vm3059, %v3024, -inf
        %3148 = vmax.xlane.f32.xlu0 %v3147
        %v3149 = vpop.xlane.xlu0 %3148
        %v3150 = vsel %vm3059, %v3025, -inf
        %3151 = vmax.xlane.f32.xlu0 %v3150
        %v3152 = vpop.xlane.xlu0 %3151
        %v3153 = vsel %vm3059, %v3026, -inf
        %3154 = vmax.xlane.f32.xlu0 %v3153
        %v3155 = vpop.xlane.xlu0 %3154
        %v3156 = vsel %vm3059, %v3027, -inf
        %3157 = vmax.xlane.f32.xlu0 %v3156
        %v3158 = vpop.xlane.xlu0 %3157
        %v3159 = vsel %vm3059, %v3028, -inf
        %3160 = vmax.xlane.f32.xlu0 %v3159
        %v3161 = vpop.xlane.xlu0 %3160
        %v3162 = vsel %vm3059, %v3029, -inf
        %3163 = vmax.xlane.f32.xlu0 %v3162
        %v3164 = vpop.xlane.xlu0 %3163
        %v3165 = vsel %vm3059, %v3030, -inf
        %3166 = vmax.xlane.f32.xlu0 %v3165
        %v3167 = vpop.xlane.xlu0 %3166
        %v3168 = vsel %vm3059, %v3031, -inf
        %3169 = vmax.xlane.f32.xlu0 %v3168
        %v3170 = vpop.xlane.xlu0 %3169
        %v3171 = vsel %vm3059, %v3032, -inf
        %3172 = vmax.xlane.f32.xlu0 %v3171
        %v3173 = vpop.xlane.xlu0 %3172
        %v3174 = vsel %vm3059, %v3033, -inf
        %3175 = vmax.xlane.f32.xlu0 %v3174
        %v3176 = vpop.xlane.xlu0 %3175
        %v3177 = vsel %vm3059, %v3034, -inf
        %3178 = vmax.xlane.f32.xlu0 %v3177
        %v3179 = vpop.xlane.xlu0 %3178
        %v3180 = vsel %vm3059, %v3035, -inf
        %3181 = vmax.xlane.f32.xlu0 %v3180
        %v3182 = vpop.xlane.xlu0 %3181
        %v3183 = vsel %vm3059, %v3036, -inf
        %3184 = vmax.xlane.f32.xlu0 %v3183
        %v3185 = vpop.xlane.xlu0 %3184
        %v3186 = vsel %vm3059, %v3037, -inf
        %3187 = vmax.xlane.f32.xlu0 %v3186
        %v3188 = vpop.xlane.xlu0 %3187
        %v3189 = vsel %vm3059, %v3038, -inf
        %3190 = vmax.xlane.f32.xlu0 %v3189
        %v3191 = vpop.xlane.xlu0 %3190
        %v3192 = vsel %vm3059, %v3039, -inf
        %3193 = vmax.xlane.f32.xlu0 %v3192
        %v3194 = vpop.xlane.xlu0 %3193
        %v3195 = vsel %vm3059, %v3040, -inf
        %3196 = vmax.xlane.f32.xlu0 %v3195
        %v3197 = vpop.xlane.xlu0 %3196
        %v3198 = vsel %vm3059, %v3041, -inf
        %3199 = vmax.xlane.f32.xlu0 %v3198
        %v3200 = vpop.xlane.xlu0 %3199
        %v3201 = vsel %vm3059, %v3042, -inf
        %3202 = vmax.xlane.f32.xlu0 %v3201
        %v3203 = vpop.xlane.xlu0 %3202
        %v3204 = vsel %vm3059, %v3043, -inf
        %3205 = vmax.xlane.f32.xlu0 %v3204
        %v3206 = vpop.xlane.xlu0 %3205
        %v3207 = vsel %vm3059, %v3044, -inf
        %3208 = vmax.xlane.f32.xlu0 %v3207
        %v3209 = vpop.xlane.xlu0 %3208
        %v3210 = vsel %vm3059, %v3045, -inf
        %3211 = vmax.xlane.f32.xlu0 %v3210
        %v3212 = vpop.xlane.xlu0 %3211
        %v3213 = vsel %vm3059, %v3046, -inf
        %3214 = vmax.xlane.f32.xlu0 %v3213
        %v3215 = vpop.xlane.xlu0 %3214
        %v3216 = vsel %vm3059, %v3047, -inf
        %3217 = vmax.xlane.f32.xlu0 %v3216
        %v3218 = vpop.xlane.xlu0 %3217
        %v3219 = vsel %vm3059, %v3048, -inf
        %3220 = vmax.xlane.f32.xlu0 %v3219
        %v3221 = vpop.xlane.xlu0 %3220
        %v3222 = vsel %vm3059, %v3049, -inf
        %3223 = vmax.xlane.f32.xlu0 %v3222
        %v3224 = vpop.xlane.xlu0 %3223
        %v3225 = vsel %vm3059, %v3050, -inf
        %3226 = vmax.xlane.f32.xlu0 %v3225
        %v3227 = vpop.xlane.xlu0 %3226
        %v3228 = vsel %vm3059, %v3051, -inf
        %3229 = vmax.xlane.f32.xlu0 %v3228
        %v3230 = vpop.xlane.xlu0 %3229
        %v3231 = vsel %vm3059, %v3052, -inf
        %3232 = vmax.xlane.f32.xlu0 %v3231
        %v3233 = vpop.xlane.xlu0 %3232
        %v3234 = vsel %vm3059, %v3053, -inf
        %3235 = vmax.xlane.f32.xlu0 %v3234
        %v3236 = vpop.xlane.xlu0 %3235
        %v3237 = vsel %vm3059, %v3054, -inf
        %3238 = vmax.xlane.f32.xlu0 %v3237
        %v3239 = vpop.xlane.xlu0 %3238
        %v3240 = vsel %vm3059, %v3055, -inf
        %3241 = vmax.xlane.f32.xlu0 %v3240
        %v3242 = vpop.xlane.xlu0 %3241
        %v3243 = vsel %vm3059, %v3056, -inf
        %3244 = vmax.xlane.f32.xlu0 %v3243
        %v3245 = vpop.xlane.xlu0 %3244
        %v3246 = vsel %vm3059, %v3057, -inf
        %3247 = vmax.xlane.f32.xlu0 %v3246
        %v3248 = vpop.xlane.xlu0 %3247
        %v3249 = vsel %vm3059, %v3058, -inf
        %3250 = vmax.xlane.f32.xlu0 %v3249
        %v3251 = vpop.xlane.xlu0 %3250
        %v3252 = vsub.f32 %v2995, %v3062
        %v3253 = vsub.f32 %v2996, %v3065
        %v3254 = vsub.f32 %v2997, %v3068
        %v3255 = vsub.f32 %v2998, %v3071
        %v3256 = vsub.f32 %v2999, %v3074
        %v3257 = vsub.f32 %v3000, %v3077
        %v3258 = vsub.f32 %v3001, %v3080
        %v3259 = vsub.f32 %v3002, %v3083
        %v3260 = vsub.f32 %v3003, %v3086
        %v3261 = vsub.f32 %v3004, %v3089
        %v3262 = vsub.f32 %v3005, %v3092
        %v3263 = vsub.f32 %v3006, %v3095
        %v3264 = vsub.f32 %v3007, %v3098
        %v3265 = vsub.f32 %v3008, %v3101
        %v3266 = vsub.f32 %v3009, %v3104
        %v3267 = vsub.f32 %v3010, %v3107
        %v3268 = vsub.f32 %v3011, %v3110
        %v3269 = vsub.f32 %v3012, %v3113
        %v3270 = vsub.f32 %v3013, %v3116
        %v3271 = vsub.f32 %v3014, %v3119
        %v3272 = vsub.f32 %v3015, %v3122
        %v3273 = vsub.f32 %v3016, %v3125
        %v3274 = vsub.f32 %v3017, %v3128
        %v3275 = vsub.f32 %v3018, %v3131
        %v3276 = vsub.f32 %v3019, %v3134
        %v3277 = vsub.f32 %v3020, %v3137
        %v3278 = vsub.f32 %v3021, %v3140
        %v3279 = vsub.f32 %v3022, %v3143
        %v3280 = vsub.f32 %v3023, %v3146
        %v3281 = vsub.f32 %v3024, %v3149
        %v3282 = vsub.f32 %v3025, %v3152
        %v3283 = vsub.f32 %v3026, %v3155
        %v3284 = vsub.f32 %v3027, %v3158
        %v3285 = vsub.f32 %v3028, %v3161
        %v3286 = vsub.f32 %v3029, %v3164
        %v3287 = vsub.f32 %v3030, %v3167
        %v3288 = vsub.f32 %v3031, %v3170
        %v3289 = vsub.f32 %v3032, %v3173
        %v3290 = vsub.f32 %v3033, %v3176
        %v3291 = vsub.f32 %v3034, %v3179
        %v3292 = vsub.f32 %v3035, %v3182
        %v3293 = vsub.f32 %v3036, %v3185
        %v3294 = vsub.f32 %v3037, %v3188
        %v3295 = vsub.f32 %v3038, %v3191
        %v3296 = vsub.f32 %v3039, %v3194
        %v3297 = vsub.f32 %v3040, %v3197
        %v3298 = vsub.f32 %v3041, %v3200
        %v3299 = vsub.f32 %v3042, %v3203
        %v3300 = vsub.f32 %v3043, %v3206
        %v3301 = vsub.f32 %v3044, %v3209
        %v3302 = vsub.f32 %v3045, %v3212
        %v3303 = vsub.f32 %v3046, %v3215
        %v3304 = vsub.f32 %v3047, %v3218
        %v3305 = vsub.f32 %v3048, %v3221
        %v3306 = vsub.f32 %v3049, %v3224
        %v3307 = vsub.f32 %v3050, %v3227
        %v3308 = vsub.f32 %v3051, %v3230
        %v3309 = vsub.f32 %v3052, %v3233
        %v3310 = vsub.f32 %v3053, %v3236
        %v3311 = vsub.f32 %v3054, %v3239
        %v3312 = vsub.f32 %v3055, %v3242
        %v3313 = vsub.f32 %v3056, %v3245
        %v3314 = vsub.f32 %v3057, %v3248
        %v3315 = vsub.f32 %v3058, %v3251
        %v3316 = vmul.f32 %v3252, 1.442695
        %v3317 = vpow.pop %v3316
        %v3318 = vmul.f32 %v3253, 1.442695
        %v3319 = vpow.pop %v3318
        %v3320 = vmul.f32 %v3254, 1.442695
        %v3321 = vpow.pop %v3320
        %v3322 = vmul.f32 %v3255, 1.442695
        %v3323 = vpow.pop %v3322
        %v3324 = vmul.f32 %v3256, 1.442695
        %v3325 = vpow.pop %v3324
        %v3326 = vmul.f32 %v3257, 1.442695
        %v3327 = vpow.pop %v3326
        %v3328 = vmul.f32 %v3258, 1.442695
        %v3329 = vpow.pop %v3328
        %v3330 = vmul.f32 %v3259, 1.442695
        %v3331 = vpow.pop %v3330
        %v3332 = vmul.f32 %v3260, 1.442695
        %v3333 = vpow.pop %v3332
        %v3334 = vmul.f32 %v3261, 1.442695
        %v3335 = vpow.pop %v3334
        %v3336 = vmul.f32 %v3262, 1.442695
        %v3337 = vpow.pop %v3336
        %v3338 = vmul.f32 %v3263, 1.442695
        %v3339 = vpow.pop %v3338
        %v3340 = vmul.f32 %v3264, 1.442695
        %v3341 = vpow.pop %v3340
        %v3342 = vmul.f32 %v3265, 1.442695
        %v3343 = vpow.pop %v3342
        %v3344 = vmul.f32 %v3266, 1.442695
        %v3345 = vpow.pop %v3344
        %v3346 = vmul.f32 %v3267, 1.442695
        %v3347 = vpow.pop %v3346
        %v3348 = vmul.f32 %v3268, 1.442695
        %v3349 = vpow.pop %v3348
        %v3350 = vmul.f32 %v3269, 1.442695
        %v3351 = vpow.pop %v3350
        %v3352 = vmul.f32 %v3270, 1.442695
        %v3353 = vpow.pop %v3352
        %v3354 = vmul.f32 %v3271, 1.442695
        %v3355 = vpow.pop %v3354
        %v3356 = vmul.f32 %v3272, 1.442695
        %v3357 = vpow.pop %v3356
        %v3358 = vmul.f32 %v3273, 1.442695
        %v3359 = vpow.pop %v3358
        %v3360 = vmul.f32 %v3274, 1.442695
        %v3361 = vpow.pop %v3360
        %v3362 = vmul.f32 %v3275, 1.442695
        %v3363 = vpow.pop %v3362
        %v3364 = vmul.f32 %v3276, 1.442695
        %v3365 = vpow.pop %v3364
        %v3366 = vmul.f32 %v3277, 1.442695
        %v3367 = vpow.pop %v3366
        %v3368 = vmul.f32 %v3278, 1.442695
        %v3369 = vpow.pop %v3368
        %v3370 = vmul.f32 %v3279, 1.442695
        %v3371 = vpow.pop %v3370
        %v3372 = vmul.f32 %v3280, 1.442695
        %v3373 = vpow.pop %v3372
        %v3374 = vmul.f32 %v3281, 1.442695
        %v3375 = vpow.pop %v3374
        %v3376 = vmul.f32 %v3282, 1.442695
        %v3377 = vpow.pop %v3376
        %v3378 = vmul.f32 %v3283, 1.442695
        %v3379 = vpow.pop %v3378
        %v3380 = vmul.f32 %v3284, 1.442695
        %v3381 = vpow.pop %v3380
        %v3382 = vmul.f32 %v3285, 1.442695
        %v3383 = vpow.pop %v3382
        %v3384 = vmul.f32 %v3286, 1.442695
        %v3385 = vpow.pop %v3384
        %v3386 = vmul.f32 %v3287, 1.442695
        %v3387 = vpow.pop %v3386
        %v3388 = vmul.f32 %v3288, 1.442695
        %v3389 = vpow.pop %v3388
        %v3390 = vmul.f32 %v3289, 1.442695
        %v3391 = vpow.pop %v3390
        %v3392 = vmul.f32 %v3290, 1.442695
        %v3393 = vpow.pop %v3392
        %v3394 = vmul.f32 %v3291, 1.442695
        %v3395 = vpow.pop %v3394
        %v3396 = vmul.f32 %v3292, 1.442695
        %v3397 = vpow.pop %v3396
        %v3398 = vmul.f32 %v3293, 1.442695
        %v3399 = vpow.pop %v3398
        %v3400 = vmul.f32 %v3294, 1.442695
        %v3401 = vpow.pop %v3400
        %v3402 = vmul.f32 %v3295, 1.442695
        %v3403 = vpow.pop %v3402
        %v3404 = vmul.f32 %v3296, 1.442695
        %v3405 = vpow.pop %v3404
        %v3406 = vmul.f32 %v3297, 1.442695
        %v3407 = vpow.pop %v3406
        %v3408 = vmul.f32 %v3298, 1.442695
        %v3409 = vpow.pop %v3408
        %v3410 = vmul.f32 %v3299, 1.442695
        %v3411 = vpow.pop %v3410
        %v3412 = vmul.f32 %v3300, 1.442695
        %v3413 = vpow.pop %v3412
        %v3414 = vmul.f32 %v3301, 1.442695
        %v3415 = vpow.pop %v3414
        %v3416 = vmul.f32 %v3302, 1.442695
        %v3417 = vpow.pop %v3416
        %v3418 = vmul.f32 %v3303, 1.442695
        %v3419 = vpow.pop %v3418
        %v3420 = vmul.f32 %v3304, 1.442695
        %v3421 = vpow.pop %v3420
        %v3422 = vmul.f32 %v3305, 1.442695
        %v3423 = vpow.pop %v3422
        %v3424 = vmul.f32 %v3306, 1.442695
        %v3425 = vpow.pop %v3424
        %v3426 = vmul.f32 %v3307, 1.442695
        %v3427 = vpow.pop %v3426
        %v3428 = vmul.f32 %v3308, 1.442695
        %v3429 = vpow.pop %v3428
        %v3430 = vmul.f32 %v3309, 1.442695
        %v3431 = vpow.pop %v3430
        %v3432 = vmul.f32 %v3310, 1.442695
        %v3433 = vpow.pop %v3432
        %v3434 = vmul.f32 %v3311, 1.442695
        %v3435 = vpow.pop %v3434
        %v3436 = vmul.f32 %v3312, 1.442695
        %v3437 = vpow.pop %v3436
        %v3438 = vmul.f32 %v3313, 1.442695
        %v3439 = vpow.pop %v3438
        %v3440 = vmul.f32 %v3314, 1.442695
        %v3441 = vpow.pop %v3440
        %v3442 = vmul.f32 %v3315, 1.442695
        %v3443 = vpow.pop %v3442
        %v3444 = vsel %vm3059, %v3317, 0.0
        %3445 = vadd.xlane.f32.xlu0 %v3444
        %v3446 = vpop.xlane.xlu0 %3445
        %v3447 = vsel %vm3059, %v3319, 0.0
        %3448 = vadd.xlane.f32.xlu0 %v3447
        %v3449 = vpop.xlane.xlu0 %3448
        %v3450 = vsel %vm3059, %v3321, 0.0
        %3451 = vadd.xlane.f32.xlu0 %v3450
        %v3452 = vpop.xlane.xlu0 %3451
        %v3453 = vsel %vm3059, %v3323, 0.0
        %3454 = vadd.xlane.f32.xlu0 %v3453
        %v3455 = vpop.xlane.xlu0 %3454
        %v3456 = vsel %vm3059, %v3325, 0.0
        %3457 = vadd.xlane.f32.xlu0 %v3456
        %v3458 = vpop.xlane.xlu0 %3457
        %v3459 = vsel %vm3059, %v3327, 0.0
        %3460 = vadd.xlane.f32.xlu0 %v3459
        %v3461 = vpop.xlane.xlu0 %3460
        %v3462 = vsel %vm3059, %v3329, 0.0
        %3463 = vadd.xlane.f32.xlu0 %v3462
        %v3464 = vpop.xlane.xlu0 %3463
        %v3465 = vsel %vm3059, %v3331, 0.0
        %3466 = vadd.xlane.f32.xlu0 %v3465
        %v3467 = vpop.xlane.xlu0 %3466
        %v3468 = vsel %vm3059, %v3333, 0.0
        %3469 = vadd.xlane.f32.xlu0 %v3468
        %v3470 = vpop.xlane.xlu0 %3469
        %v3471 = vsel %vm3059, %v3335, 0.0
        %3472 = vadd.xlane.f32.xlu0 %v3471
        %v3473 = vpop.xlane.xlu0 %3472
        %v3474 = vsel %vm3059, %v3337, 0.0
        %3475 = vadd.xlane.f32.xlu0 %v3474
        %v3476 = vpop.xlane.xlu0 %3475
        %v3477 = vsel %vm3059, %v3339, 0.0
        %3478 = vadd.xlane.f32.xlu0 %v3477
        %v3479 = vpop.xlane.xlu0 %3478
        %v3480 = vsel %vm3059, %v3341, 0.0
        %3481 = vadd.xlane.f32.xlu0 %v3480
        %v3482 = vpop.xlane.xlu0 %3481
        %v3483 = vsel %vm3059, %v3343, 0.0
        %3484 = vadd.xlane.f32.xlu0 %v3483
        %v3485 = vpop.xlane.xlu0 %3484
        %v3486 = vsel %vm3059, %v3345, 0.0
        %3487 = vadd.xlane.f32.xlu0 %v3486
        %v3488 = vpop.xlane.xlu0 %3487
        %v3489 = vsel %vm3059, %v3347, 0.0
        %3490 = vadd.xlane.f32.xlu0 %v3489
        %v3491 = vpop.xlane.xlu0 %3490
        %v3492 = vsel %vm3059, %v3349, 0.0
        %3493 = vadd.xlane.f32.xlu0 %v3492
        %v3494 = vpop.xlane.xlu0 %3493
        %v3495 = vsel %vm3059, %v3351, 0.0
        %3496 = vadd.xlane.f32.xlu0 %v3495
        %v3497 = vpop.xlane.xlu0 %3496
        %v3498 = vsel %vm3059, %v3353, 0.0
        %3499 = vadd.xlane.f32.xlu0 %v3498
        %v3500 = vpop.xlane.xlu0 %3499
        %v3501 = vsel %vm3059, %v3355, 0.0
        %3502 = vadd.xlane.f32.xlu0 %v3501
        %v3503 = vpop.xlane.xlu0 %3502
        %v3504 = vsel %vm3059, %v3357, 0.0
        %3505 = vadd.xlane.f32.xlu0 %v3504
        %v3506 = vpop.xlane.xlu0 %3505
        %v3507 = vsel %vm3059, %v3359, 0.0
        %3508 = vadd.xlane.f32.xlu0 %v3507
        %v3509 = vpop.xlane.xlu0 %3508
        %v3510 = vsel %vm3059, %v3361, 0.0
        %3511 = vadd.xlane.f32.xlu0 %v3510
        %v3512 = vpop.xlane.xlu0 %3511
        %v3513 = vsel %vm3059, %v3363, 0.0
        %3514 = vadd.xlane.f32.xlu0 %v3513
        %v3515 = vpop.xlane.xlu0 %3514
        %v3516 = vsel %vm3059, %v3365, 0.0
        %3517 = vadd.xlane.f32.xlu0 %v3516
        %v3518 = vpop.xlane.xlu0 %3517
        %v3519 = vsel %vm3059, %v3367, 0.0
        %3520 = vadd.xlane.f32.xlu0 %v3519
        %v3521 = vpop.xlane.xlu0 %3520
        %v3522 = vsel %vm3059, %v3369, 0.0
        %3523 = vadd.xlane.f32.xlu0 %v3522
        %v3524 = vpop.xlane.xlu0 %3523
        %v3525 = vsel %vm3059, %v3371, 0.0
        %3526 = vadd.xlane.f32.xlu0 %v3525
        %v3527 = vpop.xlane.xlu0 %3526
        %v3528 = vsel %vm3059, %v3373, 0.0
        %3529 = vadd.xlane.f32.xlu0 %v3528
        %v3530 = vpop.xlane.xlu0 %3529
        %v3531 = vsel %vm3059, %v3375, 0.0
        %3532 = vadd.xlane.f32.xlu0 %v3531
        %v3533 = vpop.xlane.xlu0 %3532
        %v3534 = vsel %vm3059, %v3377, 0.0
        %3535 = vadd.xlane.f32.xlu0 %v3534
        %v3536 = vpop.xlane.xlu0 %3535
        %v3537 = vsel %vm3059, %v3379, 0.0
        %3538 = vadd.xlane.f32.xlu0 %v3537
        %v3539 = vpop.xlane.xlu0 %3538
        %v3540 = vsel %vm3059, %v3381, 0.0
        %3541 = vadd.xlane.f32.xlu0 %v3540
        %v3542 = vpop.xlane.xlu0 %3541
        %v3543 = vsel %vm3059, %v3383, 0.0
        %3544 = vadd.xlane.f32.xlu0 %v3543
        %v3545 = vpop.xlane.xlu0 %3544
        %v3546 = vsel %vm3059, %v3385, 0.0
        %3547 = vadd.xlane.f32.xlu0 %v3546
        %v3548 = vpop.xlane.xlu0 %3547
        %v3549 = vsel %vm3059, %v3387, 0.0
        %3550 = vadd.xlane.f32.xlu0 %v3549
        %v3551 = vpop.xlane.xlu0 %3550
        %v3552 = vsel %vm3059, %v3389, 0.0
        %3553 = vadd.xlane.f32.xlu0 %v3552
        %v3554 = vpop.xlane.xlu0 %3553
        %v3555 = vsel %vm3059, %v3391, 0.0
        %3556 = vadd.xlane.f32.xlu0 %v3555
        %v3557 = vpop.xlane.xlu0 %3556
        %v3558 = vsel %vm3059, %v3393, 0.0
        %3559 = vadd.xlane.f32.xlu0 %v3558
        %v3560 = vpop.xlane.xlu0 %3559
        %v3561 = vsel %vm3059, %v3395, 0.0
        %3562 = vadd.xlane.f32.xlu0 %v3561
        %v3563 = vpop.xlane.xlu0 %3562
        %v3564 = vsel %vm3059, %v3397, 0.0
        %3565 = vadd.xlane.f32.xlu0 %v3564
        %v3566 = vpop.xlane.xlu0 %3565
        %v3567 = vsel %vm3059, %v3399, 0.0
        %3568 = vadd.xlane.f32.xlu0 %v3567
        %v3569 = vpop.xlane.xlu0 %3568
        %v3570 = vsel %vm3059, %v3401, 0.0
        %3571 = vadd.xlane.f32.xlu0 %v3570
        %v3572 = vpop.xlane.xlu0 %3571
        %v3573 = vsel %vm3059, %v3403, 0.0
        %3574 = vadd.xlane.f32.xlu0 %v3573
        %v3575 = vpop.xlane.xlu0 %3574
        %v3576 = vsel %vm3059, %v3405, 0.0
        %3577 = vadd.xlane.f32.xlu0 %v3576
        %v3578 = vpop.xlane.xlu0 %3577
        %v3579 = vsel %vm3059, %v3407, 0.0
        %3580 = vadd.xlane.f32.xlu0 %v3579
        %v3581 = vpop.xlane.xlu0 %3580
        %v3582 = vsel %vm3059, %v3409, 0.0
        %3583 = vadd.xlane.f32.xlu0 %v3582
        %v3584 = vpop.xlane.xlu0 %3583
        %v3585 = vsel %vm3059, %v3411, 0.0
        %3586 = vadd.xlane.f32.xlu0 %v3585
        %v3587 = vpop.xlane.xlu0 %3586
        %v3588 = vsel %vm3059, %v3413, 0.0
        %3589 = vadd.xlane.f32.xlu0 %v3588
        %v3590 = vpop.xlane.xlu0 %3589
        %v3591 = vsel %vm3059, %v3415, 0.0
        %3592 = vadd.xlane.f32.xlu0 %v3591
        %v3593 = vpop.xlane.xlu0 %3592
        %v3594 = vsel %vm3059, %v3417, 0.0
        %3595 = vadd.xlane.f32.xlu0 %v3594
        %v3596 = vpop.xlane.xlu0 %3595
        %v3597 = vsel %vm3059, %v3419, 0.0
        %3598 = vadd.xlane.f32.xlu0 %v3597
        %v3599 = vpop.xlane.xlu0 %3598
        %v3600 = vsel %vm3059, %v3421, 0.0
        %3601 = vadd.xlane.f32.xlu0 %v3600
        %v3602 = vpop.xlane.xlu0 %3601
        %v3603 = vsel %vm3059, %v3423, 0.0
        %3604 = vadd.xlane.f32.xlu0 %v3603
        %v3605 = vpop.xlane.xlu0 %3604
        %v3606 = vsel %vm3059, %v3425, 0.0
        %3607 = vadd.xlane.f32.xlu0 %v3606
        %v3608 = vpop.xlane.xlu0 %3607
        %v3609 = vsel %vm3059, %v3427, 0.0
        %3610 = vadd.xlane.f32.xlu0 %v3609
        %v3611 = vpop.xlane.xlu0 %3610
        %v3612 = vsel %vm3059, %v3429, 0.0
        %3613 = vadd.xlane.f32.xlu0 %v3612
        %v3614 = vpop.xlane.xlu0 %3613
        %v3615 = vsel %vm3059, %v3431, 0.0
        %3616 = vadd.xlane.f32.xlu0 %v3615
        %v3617 = vpop.xlane.xlu0 %3616
        %v3618 = vsel %vm3059, %v3433, 0.0
        %3619 = vadd.xlane.f32.xlu0 %v3618
        %v3620 = vpop.xlane.xlu0 %3619
        %v3621 = vsel %vm3059, %v3435, 0.0
        %3622 = vadd.xlane.f32.xlu0 %v3621
        %v3623 = vpop.xlane.xlu0 %3622
        %v3624 = vsel %vm3059, %v3437, 0.0
        %3625 = vadd.xlane.f32.xlu0 %v3624
        %v3626 = vpop.xlane.xlu0 %3625
        %v3627 = vsel %vm3059, %v3439, 0.0
        %3628 = vadd.xlane.f32.xlu0 %v3627
        %v3629 = vpop.xlane.xlu0 %3628
        %v3630 = vsel %vm3059, %v3441, 0.0
        %3631 = vadd.xlane.f32.xlu0 %v3630
        %v3632 = vpop.xlane.xlu0 %3631
        %v3633 = vsel %vm3059, %v3443, 0.0
        %3634 = vadd.xlane.f32.xlu0 %v3633
        %v3635 = vpop.xlane.xlu0 %3634
        %v3636 = vrcp.pop %v3446
        %v3637 = vrcp.pop %v3449
        %v3638 = vrcp.pop %v3452
        %v3639 = vrcp.pop %v3455
        %v3640 = vrcp.pop %v3458
        %v3641 = vrcp.pop %v3461
        %v3642 = vrcp.pop %v3464
        %v3643 = vrcp.pop %v3467
        %v3644 = vrcp.pop %v3470
        %v3645 = vrcp.pop %v3473
        %v3646 = vrcp.pop %v3476
        %v3647 = vrcp.pop %v3479
        %v3648 = vrcp.pop %v3482
        %v3649 = vrcp.pop %v3485
        %v3650 = vrcp.pop %v3488
        %v3651 = vrcp.pop %v3491
        %v3652 = vrcp.pop %v3494
        %v3653 = vrcp.pop %v3497
        %v3654 = vrcp.pop %v3500
        %v3655 = vrcp.pop %v3503
        %v3656 = vrcp.pop %v3506
        %v3657 = vrcp.pop %v3509
        %v3658 = vrcp.pop %v3512
        %v3659 = vrcp.pop %v3515
        %v3660 = vrcp.pop %v3518
        %v3661 = vrcp.pop %v3521
        %v3662 = vrcp.pop %v3524
        %v3663 = vrcp.pop %v3527
        %v3664 = vrcp.pop %v3530
        %v3665 = vrcp.pop %v3533
        %v3666 = vrcp.pop %v3536
        %v3667 = vrcp.pop %v3539
        %v3668 = vrcp.pop %v3542
        %v3669 = vrcp.pop %v3545
        %v3670 = vrcp.pop %v3548
        %v3671 = vrcp.pop %v3551
        %v3672 = vrcp.pop %v3554
        %v3673 = vrcp.pop %v3557
        %v3674 = vrcp.pop %v3560
        %v3675 = vrcp.pop %v3563
        %v3676 = vrcp.pop %v3566
        %v3677 = vrcp.pop %v3569
        %v3678 = vrcp.pop %v3572
        %v3679 = vrcp.pop %v3575
        %v3680 = vrcp.pop %v3578
        %v3681 = vrcp.pop %v3581
        %v3682 = vrcp.pop %v3584
        %v3683 = vrcp.pop %v3587
        %v3684 = vrcp.pop %v3590
        %v3685 = vrcp.pop %v3593
        %v3686 = vrcp.pop %v3596
        %v3687 = vrcp.pop %v3599
        %v3688 = vrcp.pop %v3602
        %v3689 = vrcp.pop %v3605
        %v3690 = vrcp.pop %v3608
        %v3691 = vrcp.pop %v3611
        %v3692 = vrcp.pop %v3614
        %v3693 = vrcp.pop %v3617
        %v3694 = vrcp.pop %v3620
        %v3695 = vrcp.pop %v3623
        %v3696 = vrcp.pop %v3626
        %v3697 = vrcp.pop %v3629
        %v3698 = vrcp.pop %v3632
        %v3699 = vrcp.pop %v3635
        %v3700 = vmul.f32 %v3317, %v3636
        %v3701 = vmul.f32 %v3319, %v3637
        %v3702 = vmul.f32 %v3321, %v3638
        %v3703 = vmul.f32 %v3323, %v3639
        %v3704 = vmul.f32 %v3325, %v3640
        %v3705 = vmul.f32 %v3327, %v3641
        %v3706 = vmul.f32 %v3329, %v3642
        %v3707 = vmul.f32 %v3331, %v3643
        %v3708 = vmul.f32 %v3333, %v3644
        %v3709 = vmul.f32 %v3335, %v3645
        %v3710 = vmul.f32 %v3337, %v3646
        %v3711 = vmul.f32 %v3339, %v3647
        %v3712 = vmul.f32 %v3341, %v3648
        %v3713 = vmul.f32 %v3343, %v3649
        %v3714 = vmul.f32 %v3345, %v3650
        %v3715 = vmul.f32 %v3347, %v3651
        %v3716 = vmul.f32 %v3349, %v3652
        %v3717 = vmul.f32 %v3351, %v3653
        %v3718 = vmul.f32 %v3353, %v3654
        %v3719 = vmul.f32 %v3355, %v3655
        %v3720 = vmul.f32 %v3357, %v3656
        %v3721 = vmul.f32 %v3359, %v3657
        %v3722 = vmul.f32 %v3361, %v3658
        %v3723 = vmul.f32 %v3363, %v3659
        %v3724 = vmul.f32 %v3365, %v3660
        %v3725 = vmul.f32 %v3367, %v3661
        %v3726 = vmul.f32 %v3369, %v3662
        %v3727 = vmul.f32 %v3371, %v3663
        %v3728 = vmul.f32 %v3373, %v3664
        %v3729 = vmul.f32 %v3375, %v3665
        %v3730 = vmul.f32 %v3377, %v3666
        %v3731 = vmul.f32 %v3379, %v3667
        %v3732 = vmul.f32 %v3381, %v3668
        %v3733 = vmul.f32 %v3383, %v3669
        %v3734 = vmul.f32 %v3385, %v3670
        %v3735 = vmul.f32 %v3387, %v3671
        %v3736 = vmul.f32 %v3389, %v3672
        %v3737 = vmul.f32 %v3391, %v3673
        %v3738 = vmul.f32 %v3393, %v3674
        %v3739 = vmul.f32 %v3395, %v3675
        %v3740 = vmul.f32 %v3397, %v3676
        %v3741 = vmul.f32 %v3399, %v3677
        %v3742 = vmul.f32 %v3401, %v3678
        %v3743 = vmul.f32 %v3403, %v3679
        %v3744 = vmul.f32 %v3405, %v3680
        %v3745 = vmul.f32 %v3407, %v3681
        %v3746 = vmul.f32 %v3409, %v3682
        %v3747 = vmul.f32 %v3411, %v3683
        %v3748 = vmul.f32 %v3413, %v3684
        %v3749 = vmul.f32 %v3415, %v3685
        %v3750 = vmul.f32 %v3417, %v3686
        %v3751 = vmul.f32 %v3419, %v3687
        %v3752 = vmul.f32 %v3421, %v3688
        %v3753 = vmul.f32 %v3423, %v3689
        %v3754 = vmul.f32 %v3425, %v3690
        %v3755 = vmul.f32 %v3427, %v3691
        %v3756 = vmul.f32 %v3429, %v3692
        %v3757 = vmul.f32 %v3431, %v3693
        %v3758 = vmul.f32 %v3433, %v3694
        %v3759 = vmul.f32 %v3435, %v3695
        %v3760 = vmul.f32 %v3437, %v3696
        %v3761 = vmul.f32 %v3439, %v3697
        %v3762 = vmul.f32 %v3441, %v3698
        %v3763 = vmul.f32 %v3443, %v3699
        %v3764 = vpack.c.bf16 %v3701, %v3700
        %v3765 = vpack.c.bf16 %v3703, %v3702
        %v3766 = vpack.c.bf16 %v3705, %v3704
        %v3767 = vpack.c.bf16 %v3707, %v3706
        %v3768 = vpack.c.bf16 %v3709, %v3708
        %v3769 = vpack.c.bf16 %v3711, %v3710
        %v3770 = vpack.c.bf16 %v3713, %v3712
        %v3771 = vpack.c.bf16 %v3715, %v3714
        %v3772 = vpack.c.bf16 %v3717, %v3716
        %v3773 = vpack.c.bf16 %v3719, %v3718
        %v3774 = vpack.c.bf16 %v3721, %v3720
        %v3775 = vpack.c.bf16 %v3723, %v3722
        %v3776 = vpack.c.bf16 %v3725, %v3724
        %v3777 = vpack.c.bf16 %v3727, %v3726
        %v3778 = vpack.c.bf16 %v3729, %v3728
        %v3779 = vpack.c.bf16 %v3731, %v3730
        %v3780 = vpack.c.bf16 %v3733, %v3732
        %v3781 = vpack.c.bf16 %v3735, %v3734
        %v3782 = vpack.c.bf16 %v3737, %v3736
        %v3783 = vpack.c.bf16 %v3739, %v3738
        %v3784 = vpack.c.bf16 %v3741, %v3740
        %v3785 = vpack.c.bf16 %v3743, %v3742
        %v3786 = vpack.c.bf16 %v3745, %v3744
        %v3787 = vpack.c.bf16 %v3747, %v3746
        %v3788 = vpack.c.bf16 %v3749, %v3748
        %v3789 = vpack.c.bf16 %v3751, %v3750
        %v3790 = vpack.c.bf16 %v3753, %v3752
        %v3791 = vpack.c.bf16 %v3755, %v3754
        %v3792 = vpack.c.bf16 %v3757, %v3756
        %v3793 = vpack.c.bf16 %v3759, %v3758
        %v3794 = vpack.c.bf16 %v3761, %v3760
        %v3795 = vpack.c.bf16 %v3763, %v3762
        %v3797 = vsel %vm3059, %v3764, 0
        %3799 = vmatprep.subr.bf16.mxu0 0
        %3800 = vmatpush1.bf16.msra.mxu0 0
        %3801 = vmatprep.subr.bf16.mxu0 0
        %3802 = vmatpush1.bf16.msra.mxu0 0
        %3803 = vmatprep.subr.bf16.mxu0 0
        %3804 = vmatpush1.bf16.msra.mxu0 0
        %3805 = vmatprep.subr.bf16.mxu0 0
        %3806 = vmatpush1.bf16.msra.mxu0 0
        %3807 = vmatprep.subr.bf16.mxu0 0
        %3808 = vmatpush1.bf16.msra.mxu0 0
        %3809 = vmatprep.subr.bf16.mxu0 0
        %3810 = vmatpush1.bf16.msra.mxu0 0
        %3811 = vmatprep.subr.bf16.mxu0 0
        %3812 = vmatpush1.bf16.msra.mxu0 0
        %3813 = vmatprep.subr.bf16.mxu0 0
        %3814 = vmatpush1.bf16.msra.mxu0 %v1447
        %3815 = vmatprep.subr.bf16.mxu0 0
        %3816 = vmatpush2.bf16.msra.mxu0 0
        %3817 = vmatprep.subr.bf16.mxu0 0
        %3818 = vmatpush2.bf16.msra.mxu0 0
        %3819 = vmatprep.subr.bf16.mxu0 0
        %3820 = vmatpush2.bf16.msra.mxu0 0
        %3821 = vmatprep.subr.bf16.mxu0 0
        %3822 = vmatpush2.bf16.msra.mxu0 0
        %3823 = vmatprep.subr.bf16.mxu0 0
        %3824 = vmatpush2.bf16.msra.mxu0 0
        %3825 = vmatprep.subr.bf16.mxu0 0
        %3826 = vmatpush2.bf16.msra.mxu0 0
        %3827 = vmatprep.subr.bf16.mxu0 0
        %3828 = vmatpush2.bf16.msra.mxu0 0
        %3829 = vmatprep.subr.bf16.mxu0 0
        %3830 = vmatpush2.bf16.msra.mxu0 0
        %3831 = vmatprep.mubr.bf16.mxu0 0
        %3832 = vmatmul.mubr.bf16.gmra.mxu0 %v3797
        %v3833 = vpop.f32.mrf.mxu0
        %v3834 = vadd.f32 0.0, %v3833
        %v3835 = vpop.f32.mrf.mxu0
        %v3836 = vpop.f32.mrf.mxu0
        %v3837 = vadd.f32 0.0, %v3836
        %v3838 = vpop.f32.mrf.mxu0
        %3839 = vdwg.mxu0
        %v3841 = vsel %vm3059, %v3765, 0
        %3843 = vmatprep.subr.bf16.mxu0 0
        %3844 = vmatpush1.bf16.msra.mxu0 0
        %3845 = vmatprep.subr.bf16.mxu0 0
        %3846 = vmatpush1.bf16.msra.mxu0 0
        %3847 = vmatprep.subr.bf16.mxu0 0
        %3848 = vmatpush1.bf16.msra.mxu0 0
        %3849 = vmatprep.subr.bf16.mxu0 0
        %3850 = vmatpush1.bf16.msra.mxu0 0
        %3851 = vmatprep.subr.bf16.mxu0 0
        %3852 = vmatpush1.bf16.msra.mxu0 0
        %3853 = vmatprep.subr.bf16.mxu0 0
        %3854 = vmatpush1.bf16.msra.mxu0 0
        %3855 = vmatprep.subr.bf16.mxu0 0
        %3856 = vmatpush1.bf16.msra.mxu0 0
        %3857 = vmatprep.subr.bf16.mxu0 0
        %3858 = vmatpush1.bf16.msra.mxu0 %v1448
        %3859 = vmatprep.subr.bf16.mxu0 0
        %3860 = vmatpush2.bf16.msra.mxu0 0
        %3861 = vmatprep.subr.bf16.mxu0 0
        %3862 = vmatpush2.bf16.msra.mxu0 0
        %3863 = vmatprep.subr.bf16.mxu0 0
        %3864 = vmatpush2.bf16.msra.mxu0 0
        %3865 = vmatprep.subr.bf16.mxu0 0
        %3866 = vmatpush2.bf16.msra.mxu0 0
        %3867 = vmatprep.subr.bf16.mxu0 0
        %3868 = vmatpush2.bf16.msra.mxu0 0
        %3869 = vmatprep.subr.bf16.mxu0 0
        %3870 = vmatpush2.bf16.msra.mxu0 0
        %3871 = vmatprep.subr.bf16.mxu0 0
        %3872 = vmatpush2.bf16.msra.mxu0 0
        %3873 = vmatprep.subr.bf16.mxu0 0
        %3874 = vmatpush2.bf16.msra.mxu0 0
        %3875 = vmatprep.mubr.bf16.mxu0 0
        %3876 = vmatmul.mubr.bf16.gmra.mxu0 %v3841
        %v3877 = vpop.f32.mrf.mxu0
        %v3878 = vadd.f32 0.0, %v3877
        %v3879 = vpop.f32.mrf.mxu0
        %v3880 = vpop.f32.mrf.mxu0
        %v3881 = vadd.f32 0.0, %v3880
        %v3882 = vpop.f32.mrf.mxu0
        %3883 = vdwg.mxu0
        %v3885 = vsel %vm3059, %v3766, 0
        %3887 = vmatprep.subr.bf16.mxu0 0
        %3888 = vmatpush1.bf16.msra.mxu0 0
        %3889 = vmatprep.subr.bf16.mxu0 0
        %3890 = vmatpush1.bf16.msra.mxu0 0
        %3891 = vmatprep.subr.bf16.mxu0 0
        %3892 = vmatpush1.bf16.msra.mxu0 0
        %3893 = vmatprep.subr.bf16.mxu0 0
        %3894 = vmatpush1.bf16.msra.mxu0 0
        %3895 = vmatprep.subr.bf16.mxu0 0
        %3896 = vmatpush1.bf16.msra.mxu0 0
        %3897 = vmatprep.subr.bf16.mxu0 0
        %3898 = vmatpush1.bf16.msra.mxu0 0
        %3899 = vmatprep.subr.bf16.mxu0 0
        %3900 = vmatpush1.bf16.msra.mxu0 0
        %3901 = vmatprep.subr.bf16.mxu0 0
        %3902 = vmatpush1.bf16.msra.mxu0 %v1449
        %3903 = vmatprep.subr.bf16.mxu0 0
        %3904 = vmatpush2.bf16.msra.mxu0 0
        %3905 = vmatprep.subr.bf16.mxu0 0
        %3906 = vmatpush2.bf16.msra.mxu0 0
        %3907 = vmatprep.subr.bf16.mxu0 0
        %3908 = vmatpush2.bf16.msra.mxu0 0
        %3909 = vmatprep.subr.bf16.mxu0 0
        %3910 = vmatpush2.bf16.msra.mxu0 0
        %3911 = vmatprep.subr.bf16.mxu0 0
        %3912 = vmatpush2.bf16.msra.mxu0 0
        %3913 = vmatprep.subr.bf16.mxu0 0
        %3914 = vmatpush2.bf16.msra.mxu0 0
        %3915 = vmatprep.subr.bf16.mxu0 0
        %3916 = vmatpush2.bf16.msra.mxu0 0
        %3917 = vmatprep.subr.bf16.mxu0 0
        %3918 = vmatpush2.bf16.msra.mxu0 0
        %3919 = vmatprep.mubr.bf16.mxu0 0
        %3920 = vmatmul.mubr.bf16.gmra.mxu0 %v3885
        %v3921 = vpop.f32.mrf.mxu0
        %v3922 = vadd.f32 0.0, %v3921
        %v3923 = vpop.f32.mrf.mxu0
        %v3924 = vpop.f32.mrf.mxu0
        %v3925 = vadd.f32 0.0, %v3924
        %v3926 = vpop.f32.mrf.mxu0
        %3927 = vdwg.mxu0
        %v3929 = vsel %vm3059, %v3767, 0
        %3931 = vmatprep.subr.bf16.mxu0 0
        %3932 = vmatpush1.bf16.msra.mxu0 0
        %3933 = vmatprep.subr.bf16.mxu0 0
        %3934 = vmatpush1.bf16.msra.mxu0 0
        %3935 = vmatprep.subr.bf16.mxu0 0
        %3936 = vmatpush1.bf16.msra.mxu0 0
        %3937 = vmatprep.subr.bf16.mxu0 0
        %3938 = vmatpush1.bf16.msra.mxu0 0
        %3939 = vmatprep.subr.bf16.mxu0 0
        %3940 = vmatpush1.bf16.msra.mxu0 0
        %3941 = vmatprep.subr.bf16.mxu0 0
        %3942 = vmatpush1.bf16.msra.mxu0 0
        %3943 = vmatprep.subr.bf16.mxu0 0
        %3944 = vmatpush1.bf16.msra.mxu0 0
        %3945 = vmatprep.subr.bf16.mxu0 0
        %3946 = vmatpush1.bf16.msra.mxu0 %v1450
        %3947 = vmatprep.subr.bf16.mxu0 0
        %3948 = vmatpush2.bf16.msra.mxu0 0
        %3949 = vmatprep.subr.bf16.mxu0 0
        %3950 = vmatpush2.bf16.msra.mxu0 0
        %3951 = vmatprep.subr.bf16.mxu0 0
        %3952 = vmatpush2.bf16.msra.mxu0 0
        %3953 = vmatprep.subr.bf16.mxu0 0
        %3954 = vmatpush2.bf16.msra.mxu0 0
        %3955 = vmatprep.subr.bf16.mxu0 0
        %3956 = vmatpush2.bf16.msra.mxu0 0
        %3957 = vmatprep.subr.bf16.mxu0 0
        %3958 = vmatpush2.bf16.msra.mxu0 0
        %3959 = vmatprep.subr.bf16.mxu0 0
        %3960 = vmatpush2.bf16.msra.mxu0 0
        %3961 = vmatprep.subr.bf16.mxu0 0
        %3962 = vmatpush2.bf16.msra.mxu0 0
        %3963 = vmatprep.mubr.bf16.mxu0 0
        %3964 = vmatmul.mubr.bf16.gmra.mxu0 %v3929
        %v3965 = vpop.f32.mrf.mxu0
        %v3966 = vadd.f32 0.0, %v3965
        %v3967 = vpop.f32.mrf.mxu0
        %v3968 = vpop.f32.mrf.mxu0
        %v3969 = vadd.f32 0.0, %v3968
        %v3970 = vpop.f32.mrf.mxu0
        %3971 = vdwg.mxu0
        %v3973 = vsel %vm3059, %v3768, 0
        %3975 = vmatprep.subr.bf16.mxu0 0
        %3976 = vmatpush1.bf16.msra.mxu0 0
        %3977 = vmatprep.subr.bf16.mxu0 0
        %3978 = vmatpush1.bf16.msra.mxu0 0
        %3979 = vmatprep.subr.bf16.mxu0 0
        %3980 = vmatpush1.bf16.msra.mxu0 0
        %3981 = vmatprep.subr.bf16.mxu0 0
        %3982 = vmatpush1.bf16.msra.mxu0 0
        %3983 = vmatprep.subr.bf16.mxu0 0
        %3984 = vmatpush1.bf16.msra.mxu0 0
        %3985 = vmatprep.subr.bf16.mxu0 0
        %3986 = vmatpush1.bf16.msra.mxu0 0
        %3987 = vmatprep.subr.bf16.mxu0 0
        %3988 = vmatpush1.bf16.msra.mxu0 0
        %3989 = vmatprep.subr.bf16.mxu0 0
        %3990 = vmatpush1.bf16.msra.mxu0 %v1451
        %3991 = vmatprep.subr.bf16.mxu0 0
        %3992 = vmatpush2.bf16.msra.mxu0 0
        %3993 = vmatprep.subr.bf16.mxu0 0
        %3994 = vmatpush2.bf16.msra.mxu0 0
        %3995 = vmatprep.subr.bf16.mxu0 0
        %3996 = vmatpush2.bf16.msra.mxu0 0
        %3997 = vmatprep.subr.bf16.mxu0 0
        %3998 = vmatpush2.bf16.msra.mxu0 0
        %3999 = vmatprep.subr.bf16.mxu0 0
        %4000 = vmatpush2.bf16.msra.mxu0 0
        %4001 = vmatprep.subr.bf16.mxu0 0
        %4002 = vmatpush2.bf16.msra.mxu0 0
        %4003 = vmatprep.subr.bf16.mxu0 0
        %4004 = vmatpush2.bf16.msra.mxu0 0
        %4005 = vmatprep.subr.bf16.mxu0 0
        %4006 = vmatpush2.bf16.msra.mxu0 0
        %4007 = vmatprep.mubr.bf16.mxu0 0
        %4008 = vmatmul.mubr.bf16.gmra.mxu0 %v3973
        %v4009 = vpop.f32.mrf.mxu0
        %v4010 = vadd.f32 0.0, %v4009
        %v4011 = vpop.f32.mrf.mxu0
        %v4012 = vpop.f32.mrf.mxu0
        %v4013 = vadd.f32 0.0, %v4012
        %v4014 = vpop.f32.mrf.mxu0
        %4015 = vdwg.mxu0
        %v4017 = vsel %vm3059, %v3769, 0
        %4019 = vmatprep.subr.bf16.mxu0 0
        %4020 = vmatpush1.bf16.msra.mxu0 0
        %4021 = vmatprep.subr.bf16.mxu0 0
        %4022 = vmatpush1.bf16.msra.mxu0 0
        %4023 = vmatprep.subr.bf16.mxu0 0
        %4024 = vmatpush1.bf16.msra.mxu0 0
        %4025 = vmatprep.subr.bf16.mxu0 0
        %4026 = vmatpush1.bf16.msra.mxu0 0
        %4027 = vmatprep.subr.bf16.mxu0 0
        %4028 = vmatpush1.bf16.msra.mxu0 0
        %4029 = vmatprep.subr.bf16.mxu0 0
        %4030 = vmatpush1.bf16.msra.mxu0 0
        %4031 = vmatprep.subr.bf16.mxu0 0
        %4032 = vmatpush1.bf16.msra.mxu0 0
        %4033 = vmatprep.subr.bf16.mxu0 0
        %4034 = vmatpush1.bf16.msra.mxu0 %v1452
        %4035 = vmatprep.subr.bf16.mxu0 0
        %4036 = vmatpush2.bf16.msra.mxu0 0
        %4037 = vmatprep.subr.bf16.mxu0 0
        %4038 = vmatpush2.bf16.msra.mxu0 0
        %4039 = vmatprep.subr.bf16.mxu0 0
        %4040 = vmatpush2.bf16.msra.mxu0 0
        %4041 = vmatprep.subr.bf16.mxu0 0
        %4042 = vmatpush2.bf16.msra.mxu0 0
        %4043 = vmatprep.subr.bf16.mxu0 0
        %4044 = vmatpush2.bf16.msra.mxu0 0
        %4045 = vmatprep.subr.bf16.mxu0 0
        %4046 = vmatpush2.bf16.msra.mxu0 0
        %4047 = vmatprep.subr.bf16.mxu0 0
        %4048 = vmatpush2.bf16.msra.mxu0 0
        %4049 = vmatprep.subr.bf16.mxu0 0
        %4050 = vmatpush2.bf16.msra.mxu0 0
        %4051 = vmatprep.mubr.bf16.mxu0 0
        %4052 = vmatmul.mubr.bf16.gmra.mxu0 %v4017
        %v4053 = vpop.f32.mrf.mxu0
        %v4054 = vadd.f32 0.0, %v4053
        %v4055 = vpop.f32.mrf.mxu0
        %v4056 = vpop.f32.mrf.mxu0
        %v4057 = vadd.f32 0.0, %v4056
        %v4058 = vpop.f32.mrf.mxu0
        %4059 = vdwg.mxu0
        %v4061 = vsel %vm3059, %v3770, 0
        %4063 = vmatprep.subr.bf16.mxu0 0
        %4064 = vmatpush1.bf16.msra.mxu0 0
        %4065 = vmatprep.subr.bf16.mxu0 0
        %4066 = vmatpush1.bf16.msra.mxu0 0
        %4067 = vmatprep.subr.bf16.mxu0 0
        %4068 = vmatpush1.bf16.msra.mxu0 0
        %4069 = vmatprep.subr.bf16.mxu0 0
        %4070 = vmatpush1.bf16.msra.mxu0 0
        %4071 = vmatprep.subr.bf16.mxu0 0
        %4072 = vmatpush1.bf16.msra.mxu0 0
        %4073 = vmatprep.subr.bf16.mxu0 0
        %4074 = vmatpush1.bf16.msra.mxu0 0
        %4075 = vmatprep.subr.bf16.mxu0 0
        %4076 = vmatpush1.bf16.msra.mxu0 0
        %4077 = vmatprep.subr.bf16.mxu0 0
        %4078 = vmatpush1.bf16.msra.mxu0 %v1453
        %4079 = vmatprep.subr.bf16.mxu0 0
        %4080 = vmatpush2.bf16.msra.mxu0 0
        %4081 = vmatprep.subr.bf16.mxu0 0
        %4082 = vmatpush2.bf16.msra.mxu0 0
        %4083 = vmatprep.subr.bf16.mxu0 0
        %4084 = vmatpush2.bf16.msra.mxu0 0
        %4085 = vmatprep.subr.bf16.mxu0 0
        %4086 = vmatpush2.bf16.msra.mxu0 0
        %4087 = vmatprep.subr.bf16.mxu0 0
        %4088 = vmatpush2.bf16.msra.mxu0 0
        %4089 = vmatprep.subr.bf16.mxu0 0
        %4090 = vmatpush2.bf16.msra.mxu0 0
        %4091 = vmatprep.subr.bf16.mxu0 0
        %4092 = vmatpush2.bf16.msra.mxu0 0
        %4093 = vmatprep.subr.bf16.mxu0 0
        %4094 = vmatpush2.bf16.msra.mxu0 0
        %4095 = vmatprep.mubr.bf16.mxu0 0
        %4096 = vmatmul.mubr.bf16.gmra.mxu0 %v4061
        %v4097 = vpop.f32.mrf.mxu0
        %v4098 = vadd.f32 0.0, %v4097
        %v4099 = vpop.f32.mrf.mxu0
        %v4100 = vpop.f32.mrf.mxu0
        %v4101 = vadd.f32 0.0, %v4100
        %v4102 = vpop.f32.mrf.mxu0
        %4103 = vdwg.mxu0
        %v4105 = vsel %vm3059, %v3771, 0
        %4107 = vmatprep.subr.bf16.mxu0 0
        %4108 = vmatpush1.bf16.msra.mxu0 0
        %4109 = vmatprep.subr.bf16.mxu0 0
        %4110 = vmatpush1.bf16.msra.mxu0 0
        %4111 = vmatprep.subr.bf16.mxu0 0
        %4112 = vmatpush1.bf16.msra.mxu0 0
        %4113 = vmatprep.subr.bf16.mxu0 0
        %4114 = vmatpush1.bf16.msra.mxu0 0
        %4115 = vmatprep.subr.bf16.mxu0 0
        %4116 = vmatpush1.bf16.msra.mxu0 0
        %4117 = vmatprep.subr.bf16.mxu0 0
        %4118 = vmatpush1.bf16.msra.mxu0 0
        %4119 = vmatprep.subr.bf16.mxu0 0
        %4120 = vmatpush1.bf16.msra.mxu0 0
        %4121 = vmatprep.subr.bf16.mxu0 0
        %4122 = vmatpush1.bf16.msra.mxu0 %v1454
        %4123 = vmatprep.subr.bf16.mxu0 0
        %4124 = vmatpush2.bf16.msra.mxu0 0
        %4125 = vmatprep.subr.bf16.mxu0 0
        %4126 = vmatpush2.bf16.msra.mxu0 0
        %4127 = vmatprep.subr.bf16.mxu0 0
        %4128 = vmatpush2.bf16.msra.mxu0 0
        %4129 = vmatprep.subr.bf16.mxu0 0
        %4130 = vmatpush2.bf16.msra.mxu0 0
        %4131 = vmatprep.subr.bf16.mxu0 0
        %4132 = vmatpush2.bf16.msra.mxu0 0
        %4133 = vmatprep.subr.bf16.mxu0 0
        %4134 = vmatpush2.bf16.msra.mxu0 0
        %4135 = vmatprep.subr.bf16.mxu0 0
        %4136 = vmatpush2.bf16.msra.mxu0 0
        %4137 = vmatprep.subr.bf16.mxu0 0
        %4138 = vmatpush2.bf16.msra.mxu0 0
        %4139 = vmatprep.mubr.bf16.mxu0 0
        %4140 = vmatmul.mubr.bf16.gmra.mxu0 %v4105
        %v4141 = vpop.f32.mrf.mxu0
        %v4142 = vadd.f32 0.0, %v4141
        %v4143 = vpop.f32.mrf.mxu0
        %v4144 = vpop.f32.mrf.mxu0
        %v4145 = vadd.f32 0.0, %v4144
        %v4146 = vpop.f32.mrf.mxu0
        %4147 = vdwg.mxu0
        %v4149 = vsel %vm3059, %v3772, 0
        %4151 = vmatprep.subr.bf16.mxu0 0
        %4152 = vmatpush1.bf16.msra.mxu0 0
        %4153 = vmatprep.subr.bf16.mxu0 0
        %4154 = vmatpush1.bf16.msra.mxu0 0
        %4155 = vmatprep.subr.bf16.mxu0 0
        %4156 = vmatpush1.bf16.msra.mxu0 0
        %4157 = vmatprep.subr.bf16.mxu0 0
        %4158 = vmatpush1.bf16.msra.mxu0 0
        %4159 = vmatprep.subr.bf16.mxu0 0
        %4160 = vmatpush1.bf16.msra.mxu0 0
        %4161 = vmatprep.subr.bf16.mxu0 0
        %4162 = vmatpush1.bf16.msra.mxu0 0
        %4163 = vmatprep.subr.bf16.mxu0 0
        %4164 = vmatpush1.bf16.msra.mxu0 0
        %4165 = vmatprep.subr.bf16.mxu0 0
        %4166 = vmatpush1.bf16.msra.mxu0 %v1455
        %4167 = vmatprep.subr.bf16.mxu0 0
        %4168 = vmatpush2.bf16.msra.mxu0 0
        %4169 = vmatprep.subr.bf16.mxu0 0
        %4170 = vmatpush2.bf16.msra.mxu0 0
        %4171 = vmatprep.subr.bf16.mxu0 0
        %4172 = vmatpush2.bf16.msra.mxu0 0
        %4173 = vmatprep.subr.bf16.mxu0 0
        %4174 = vmatpush2.bf16.msra.mxu0 0
        %4175 = vmatprep.subr.bf16.mxu0 0
        %4176 = vmatpush2.bf16.msra.mxu0 0
        %4177 = vmatprep.subr.bf16.mxu0 0
        %4178 = vmatpush2.bf16.msra.mxu0 0
        %4179 = vmatprep.subr.bf16.mxu0 0
        %4180 = vmatpush2.bf16.msra.mxu0 0
        %4181 = vmatprep.subr.bf16.mxu0 0
        %4182 = vmatpush2.bf16.msra.mxu0 0
        %4183 = vmatprep.mubr.bf16.mxu0 0
        %4184 = vmatmul.mubr.bf16.gmra.mxu0 %v4149
        %v4185 = vpop.f32.mrf.mxu0
        %v4186 = vadd.f32 0.0, %v4185
        %v4187 = vpop.f32.mrf.mxu0
        %v4188 = vpop.f32.mrf.mxu0
        %v4189 = vadd.f32 0.0, %v4188
        %v4190 = vpop.f32.mrf.mxu0
        %4191 = vdwg.mxu0
        %v4193 = vsel %vm3059, %v3773, 0
        %4195 = vmatprep.subr.bf16.mxu0 0
        %4196 = vmatpush1.bf16.msra.mxu0 0
        %4197 = vmatprep.subr.bf16.mxu0 0
        %4198 = vmatpush1.bf16.msra.mxu0 0
        %4199 = vmatprep.subr.bf16.mxu0 0
        %4200 = vmatpush1.bf16.msra.mxu0 0
        %4201 = vmatprep.subr.bf16.mxu0 0
        %4202 = vmatpush1.bf16.msra.mxu0 0
        %4203 = vmatprep.subr.bf16.mxu0 0
        %4204 = vmatpush1.bf16.msra.mxu0 0
        %4205 = vmatprep.subr.bf16.mxu0 0
        %4206 = vmatpush1.bf16.msra.mxu0 0
        %4207 = vmatprep.subr.bf16.mxu0 0
        %4208 = vmatpush1.bf16.msra.mxu0 0
        %4209 = vmatprep.subr.bf16.mxu0 0
        %4210 = vmatpush1.bf16.msra.mxu0 %v1456
        %4211 = vmatprep.subr.bf16.mxu0 0
        %4212 = vmatpush2.bf16.msra.mxu0 0
        %4213 = vmatprep.subr.bf16.mxu0 0
        %4214 = vmatpush2.bf16.msra.mxu0 0
        %4215 = vmatprep.subr.bf16.mxu0 0
        %4216 = vmatpush2.bf16.msra.mxu0 0
        %4217 = vmatprep.subr.bf16.mxu0 0
        %4218 = vmatpush2.bf16.msra.mxu0 0
        %4219 = vmatprep.subr.bf16.mxu0 0
        %4220 = vmatpush2.bf16.msra.mxu0 0
        %4221 = vmatprep.subr.bf16.mxu0 0
        %4222 = vmatpush2.bf16.msra.mxu0 0
        %4223 = vmatprep.subr.bf16.mxu0 0
        %4224 = vmatpush2.bf16.msra.mxu0 0
        %4225 = vmatprep.subr.bf16.mxu0 0
        %4226 = vmatpush2.bf16.msra.mxu0 0
        %4227 = vmatprep.mubr.bf16.mxu0 0
        %4228 = vmatmul.mubr.bf16.gmra.mxu0 %v4193
        %v4229 = vpop.f32.mrf.mxu0
        %v4230 = vadd.f32 0.0, %v4229
        %v4231 = vpop.f32.mrf.mxu0
        %v4232 = vpop.f32.mrf.mxu0
        %v4233 = vadd.f32 0.0, %v4232
        %v4234 = vpop.f32.mrf.mxu0
        %4235 = vdwg.mxu0
        %v4237 = vsel %vm3059, %v3774, 0
        %4239 = vmatprep.subr.bf16.mxu0 0
        %4240 = vmatpush1.bf16.msra.mxu0 0
        %4241 = vmatprep.subr.bf16.mxu0 0
        %4242 = vmatpush1.bf16.msra.mxu0 0
        %4243 = vmatprep.subr.bf16.mxu0 0
        %4244 = vmatpush1.bf16.msra.mxu0 0
        %4245 = vmatprep.subr.bf16.mxu0 0
        %4246 = vmatpush1.bf16.msra.mxu0 0
        %4247 = vmatprep.subr.bf16.mxu0 0
        %4248 = vmatpush1.bf16.msra.mxu0 0
        %4249 = vmatprep.subr.bf16.mxu0 0
        %4250 = vmatpush1.bf16.msra.mxu0 0
        %4251 = vmatprep.subr.bf16.mxu0 0
        %4252 = vmatpush1.bf16.msra.mxu0 0
        %4253 = vmatprep.subr.bf16.mxu0 0
        %4254 = vmatpush1.bf16.msra.mxu0 %v1457
        %4255 = vmatprep.subr.bf16.mxu0 0
        %4256 = vmatpush2.bf16.msra.mxu0 0
        %4257 = vmatprep.subr.bf16.mxu0 0
        %4258 = vmatpush2.bf16.msra.mxu0 0
        %4259 = vmatprep.subr.bf16.mxu0 0
        %4260 = vmatpush2.bf16.msra.mxu0 0
        %4261 = vmatprep.subr.bf16.mxu0 0
        %4262 = vmatpush2.bf16.msra.mxu0 0
        %4263 = vmatprep.subr.bf16.mxu0 0
        %4264 = vmatpush2.bf16.msra.mxu0 0
        %4265 = vmatprep.subr.bf16.mxu0 0
        %4266 = vmatpush2.bf16.msra.mxu0 0
        %4267 = vmatprep.subr.bf16.mxu0 0
        %4268 = vmatpush2.bf16.msra.mxu0 0
        %4269 = vmatprep.subr.bf16.mxu0 0
        %4270 = vmatpush2.bf16.msra.mxu0 0
        %4271 = vmatprep.mubr.bf16.mxu0 0
        %4272 = vmatmul.mubr.bf16.gmra.mxu0 %v4237
        %v4273 = vpop.f32.mrf.mxu0
        %v4274 = vadd.f32 0.0, %v4273
        %v4275 = vpop.f32.mrf.mxu0
        %v4276 = vpop.f32.mrf.mxu0
        %v4277 = vadd.f32 0.0, %v4276
        %v4278 = vpop.f32.mrf.mxu0
        %4279 = vdwg.mxu0
        %v4281 = vsel %vm3059, %v3775, 0
        %4283 = vmatprep.subr.bf16.mxu0 0
        %4284 = vmatpush1.bf16.msra.mxu0 0
        %4285 = vmatprep.subr.bf16.mxu0 0
        %4286 = vmatpush1.bf16.msra.mxu0 0
        %4287 = vmatprep.subr.bf16.mxu0 0
        %4288 = vmatpush1.bf16.msra.mxu0 0
        %4289 = vmatprep.subr.bf16.mxu0 0
        %4290 = vmatpush1.bf16.msra.mxu0 0
        %4291 = vmatprep.subr.bf16.mxu0 0
        %4292 = vmatpush1.bf16.msra.mxu0 0
        %4293 = vmatprep.subr.bf16.mxu0 0
        %4294 = vmatpush1.bf16.msra.mxu0 0
        %4295 = vmatprep.subr.bf16.mxu0 0
        %4296 = vmatpush1.bf16.msra.mxu0 0
        %4297 = vmatprep.subr.bf16.mxu0 0
        %4298 = vmatpush1.bf16.msra.mxu0 %v1458
        %4299 = vmatprep.subr.bf16.mxu0 0
        %4300 = vmatpush2.bf16.msra.mxu0 0
        %4301 = vmatprep.subr.bf16.mxu0 0
        %4302 = vmatpush2.bf16.msra.mxu0 0
        %4303 = vmatprep.subr.bf16.mxu0 0
        %4304 = vmatpush2.bf16.msra.mxu0 0
        %4305 = vmatprep.subr.bf16.mxu0 0
        %4306 = vmatpush2.bf16.msra.mxu0 0
        %4307 = vmatprep.subr.bf16.mxu0 0
        %4308 = vmatpush2.bf16.msra.mxu0 0
        %4309 = vmatprep.subr.bf16.mxu0 0
        %4310 = vmatpush2.bf16.msra.mxu0 0
        %4311 = vmatprep.subr.bf16.mxu0 0
        %4312 = vmatpush2.bf16.msra.mxu0 0
        %4313 = vmatprep.subr.bf16.mxu0 0
        %4314 = vmatpush2.bf16.msra.mxu0 0
        %4315 = vmatprep.mubr.bf16.mxu0 0
        %4316 = vmatmul.mubr.bf16.gmra.mxu0 %v4281
        %v4317 = vpop.f32.mrf.mxu0
        %v4318 = vadd.f32 0.0, %v4317
        %v4319 = vpop.f32.mrf.mxu0
        %v4320 = vpop.f32.mrf.mxu0
        %v4321 = vadd.f32 0.0, %v4320
        %v4322 = vpop.f32.mrf.mxu0
        %4323 = vdwg.mxu0
        %v4325 = vsel %vm3059, %v3776, 0
        %4327 = vmatprep.subr.bf16.mxu0 0
        %4328 = vmatpush1.bf16.msra.mxu0 0
        %4329 = vmatprep.subr.bf16.mxu0 0
        %4330 = vmatpush1.bf16.msra.mxu0 0
        %4331 = vmatprep.subr.bf16.mxu0 0
        %4332 = vmatpush1.bf16.msra.mxu0 0
        %4333 = vmatprep.subr.bf16.mxu0 0
        %4334 = vmatpush1.bf16.msra.mxu0 0
        %4335 = vmatprep.subr.bf16.mxu0 0
        %4336 = vmatpush1.bf16.msra.mxu0 0
        %4337 = vmatprep.subr.bf16.mxu0 0
        %4338 = vmatpush1.bf16.msra.mxu0 0
        %4339 = vmatprep.subr.bf16.mxu0 0
        %4340 = vmatpush1.bf16.msra.mxu0 0
        %4341 = vmatprep.subr.bf16.mxu0 0
        %4342 = vmatpush1.bf16.msra.mxu0 %v1459
        %4343 = vmatprep.subr.bf16.mxu0 0
        %4344 = vmatpush2.bf16.msra.mxu0 0
        %4345 = vmatprep.subr.bf16.mxu0 0
        %4346 = vmatpush2.bf16.msra.mxu0 0
        %4347 = vmatprep.subr.bf16.mxu0 0
        %4348 = vmatpush2.bf16.msra.mxu0 0
        %4349 = vmatprep.subr.bf16.mxu0 0
        %4350 = vmatpush2.bf16.msra.mxu0 0
        %4351 = vmatprep.subr.bf16.mxu0 0
        %4352 = vmatpush2.bf16.msra.mxu0 0
        %4353 = vmatprep.subr.bf16.mxu0 0
        %4354 = vmatpush2.bf16.msra.mxu0 0
        %4355 = vmatprep.subr.bf16.mxu0 0
        %4356 = vmatpush2.bf16.msra.mxu0 0
        %4357 = vmatprep.subr.bf16.mxu0 0
        %4358 = vmatpush2.bf16.msra.mxu0 0
        %4359 = vmatprep.mubr.bf16.mxu0 0
        %4360 = vmatmul.mubr.bf16.gmra.mxu0 %v4325
        %v4361 = vpop.f32.mrf.mxu0
        %v4362 = vadd.f32 0.0, %v4361
        %v4363 = vpop.f32.mrf.mxu0
        %v4364 = vpop.f32.mrf.mxu0
        %v4365 = vadd.f32 0.0, %v4364
        %v4366 = vpop.f32.mrf.mxu0
        %4367 = vdwg.mxu0
        %v4369 = vsel %vm3059, %v3777, 0
        %4371 = vmatprep.subr.bf16.mxu0 0
        %4372 = vmatpush1.bf16.msra.mxu0 0
        %4373 = vmatprep.subr.bf16.mxu0 0
        %4374 = vmatpush1.bf16.msra.mxu0 0
        %4375 = vmatprep.subr.bf16.mxu0 0
        %4376 = vmatpush1.bf16.msra.mxu0 0
        %4377 = vmatprep.subr.bf16.mxu0 0
        %4378 = vmatpush1.bf16.msra.mxu0 0
        %4379 = vmatprep.subr.bf16.mxu0 0
        %4380 = vmatpush1.bf16.msra.mxu0 0
        %4381 = vmatprep.subr.bf16.mxu0 0
        %4382 = vmatpush1.bf16.msra.mxu0 0
        %4383 = vmatprep.subr.bf16.mxu0 0
        %4384 = vmatpush1.bf16.msra.mxu0 0
        %4385 = vmatprep.subr.bf16.mxu0 0
        %4386 = vmatpush1.bf16.msra.mxu0 %v1460
        %4387 = vmatprep.subr.bf16.mxu0 0
        %4388 = vmatpush2.bf16.msra.mxu0 0
        %4389 = vmatprep.subr.bf16.mxu0 0
        %4390 = vmatpush2.bf16.msra.mxu0 0
        %4391 = vmatprep.subr.bf16.mxu0 0
        %4392 = vmatpush2.bf16.msra.mxu0 0
        %4393 = vmatprep.subr.bf16.mxu0 0
        %4394 = vmatpush2.bf16.msra.mxu0 0
        %4395 = vmatprep.subr.bf16.mxu0 0
        %4396 = vmatpush2.bf16.msra.mxu0 0
        %4397 = vmatprep.subr.bf16.mxu0 0
        %4398 = vmatpush2.bf16.msra.mxu0 0
        %4399 = vmatprep.subr.bf16.mxu0 0
        %4400 = vmatpush2.bf16.msra.mxu0 0
        %4401 = vmatprep.subr.bf16.mxu0 0
        %4402 = vmatpush2.bf16.msra.mxu0 0
        %4403 = vmatprep.mubr.bf16.mxu0 0
        %4404 = vmatmul.mubr.bf16.gmra.mxu0 %v4369
        %v4405 = vpop.f32.mrf.mxu0
        %v4406 = vadd.f32 0.0, %v4405
        %v4407 = vpop.f32.mrf.mxu0
        %v4408 = vpop.f32.mrf.mxu0
        %v4409 = vadd.f32 0.0, %v4408
        %v4410 = vpop.f32.mrf.mxu0
        %4411 = vdwg.mxu0
        %v4413 = vsel %vm3059, %v3778, 0
        %4415 = vmatprep.subr.bf16.mxu0 0
        %4416 = vmatpush1.bf16.msra.mxu0 0
        %4417 = vmatprep.subr.bf16.mxu0 0
        %4418 = vmatpush1.bf16.msra.mxu0 0
        %4419 = vmatprep.subr.bf16.mxu0 0
        %4420 = vmatpush1.bf16.msra.mxu0 0
        %4421 = vmatprep.subr.bf16.mxu0 0
        %4422 = vmatpush1.bf16.msra.mxu0 0
        %4423 = vmatprep.subr.bf16.mxu0 0
        %4424 = vmatpush1.bf16.msra.mxu0 0
        %4425 = vmatprep.subr.bf16.mxu0 0
        %4426 = vmatpush1.bf16.msra.mxu0 0
        %4427 = vmatprep.subr.bf16.mxu0 0
        %4428 = vmatpush1.bf16.msra.mxu0 0
        %4429 = vmatprep.subr.bf16.mxu0 0
        %4430 = vmatpush1.bf16.msra.mxu0 %v1461
        %4431 = vmatprep.subr.bf16.mxu0 0
        %4432 = vmatpush2.bf16.msra.mxu0 0
        %4433 = vmatprep.subr.bf16.mxu0 0
        %4434 = vmatpush2.bf16.msra.mxu0 0
        %4435 = vmatprep.subr.bf16.mxu0 0
        %4436 = vmatpush2.bf16.msra.mxu0 0
        %4437 = vmatprep.subr.bf16.mxu0 0
        %4438 = vmatpush2.bf16.msra.mxu0 0
        %4439 = vmatprep.subr.bf16.mxu0 0
        %4440 = vmatpush2.bf16.msra.mxu0 0
        %4441 = vmatprep.subr.bf16.mxu0 0
        %4442 = vmatpush2.bf16.msra.mxu0 0
        %4443 = vmatprep.subr.bf16.mxu0 0
        %4444 = vmatpush2.bf16.msra.mxu0 0
        %4445 = vmatprep.subr.bf16.mxu0 0
        %4446 = vmatpush2.bf16.msra.mxu0 0
        %4447 = vmatprep.mubr.bf16.mxu0 0
        %4448 = vmatmul.mubr.bf16.gmra.mxu0 %v4413
        %v4449 = vpop.f32.mrf.mxu0
        %v4450 = vadd.f32 0.0, %v4449
        %v4451 = vpop.f32.mrf.mxu0
        %v4452 = vpop.f32.mrf.mxu0
        %v4453 = vadd.f32 0.0, %v4452
        %v4454 = vpop.f32.mrf.mxu0
        %4455 = vdwg.mxu0
        %v4457 = vsel %vm3059, %v3779, 0
        %4459 = vmatprep.subr.bf16.mxu0 0
        %4460 = vmatpush1.bf16.msra.mxu0 0
        %4461 = vmatprep.subr.bf16.mxu0 0
        %4462 = vmatpush1.bf16.msra.mxu0 0
        %4463 = vmatprep.subr.bf16.mxu0 0
        %4464 = vmatpush1.bf16.msra.mxu0 0
        %4465 = vmatprep.subr.bf16.mxu0 0
        %4466 = vmatpush1.bf16.msra.mxu0 0
        %4467 = vmatprep.subr.bf16.mxu0 0
        %4468 = vmatpush1.bf16.msra.mxu0 0
        %4469 = vmatprep.subr.bf16.mxu0 0
        %4470 = vmatpush1.bf16.msra.mxu0 0
        %4471 = vmatprep.subr.bf16.mxu0 0
        %4472 = vmatpush1.bf16.msra.mxu0 0
        %4473 = vmatprep.subr.bf16.mxu0 0
        %4474 = vmatpush1.bf16.msra.mxu0 %v1462
        %4475 = vmatprep.subr.bf16.mxu0 0
        %4476 = vmatpush2.bf16.msra.mxu0 0
        %4477 = vmatprep.subr.bf16.mxu0 0
        %4478 = vmatpush2.bf16.msra.mxu0 0
        %4479 = vmatprep.subr.bf16.mxu0 0
        %4480 = vmatpush2.bf16.msra.mxu0 0
        %4481 = vmatprep.subr.bf16.mxu0 0
        %4482 = vmatpush2.bf16.msra.mxu0 0
        %4483 = vmatprep.subr.bf16.mxu0 0
        %4484 = vmatpush2.bf16.msra.mxu0 0
        %4485 = vmatprep.subr.bf16.mxu0 0
        %4486 = vmatpush2.bf16.msra.mxu0 0
        %4487 = vmatprep.subr.bf16.mxu0 0
        %4488 = vmatpush2.bf16.msra.mxu0 0
        %4489 = vmatprep.subr.bf16.mxu0 0
        %4490 = vmatpush2.bf16.msra.mxu0 0
        %4491 = vmatprep.mubr.bf16.mxu0 0
        %4492 = vmatmul.mubr.bf16.gmra.mxu0 %v4457
        %v4493 = vpop.f32.mrf.mxu0
        %v4494 = vadd.f32 0.0, %v4493
        %v4495 = vpop.f32.mrf.mxu0
        %v4496 = vpop.f32.mrf.mxu0
        %v4497 = vadd.f32 0.0, %v4496
        %v4498 = vpop.f32.mrf.mxu0
        %4499 = vdwg.mxu0
        %v4501 = vsel %vm3059, %v3780, 0
        %4503 = vmatprep.subr.bf16.mxu0 0
        %4504 = vmatpush1.bf16.msra.mxu0 0
        %4505 = vmatprep.subr.bf16.mxu0 0
        %4506 = vmatpush1.bf16.msra.mxu0 0
        %4507 = vmatprep.subr.bf16.mxu0 0
        %4508 = vmatpush1.bf16.msra.mxu0 0
        %4509 = vmatprep.subr.bf16.mxu0 0
        %4510 = vmatpush1.bf16.msra.mxu0 0
        %4511 = vmatprep.subr.bf16.mxu0 0
        %4512 = vmatpush1.bf16.msra.mxu0 0
        %4513 = vmatprep.subr.bf16.mxu0 0
        %4514 = vmatpush1.bf16.msra.mxu0 0
        %4515 = vmatprep.subr.bf16.mxu0 0
        %4516 = vmatpush1.bf16.msra.mxu0 0
        %4517 = vmatprep.subr.bf16.mxu0 0
        %4518 = vmatpush1.bf16.msra.mxu0 %v1463
        %4519 = vmatprep.subr.bf16.mxu0 0
        %4520 = vmatpush2.bf16.msra.mxu0 0
        %4521 = vmatprep.subr.bf16.mxu0 0
        %4522 = vmatpush2.bf16.msra.mxu0 0
        %4523 = vmatprep.subr.bf16.mxu0 0
        %4524 = vmatpush2.bf16.msra.mxu0 0
        %4525 = vmatprep.subr.bf16.mxu0 0
        %4526 = vmatpush2.bf16.msra.mxu0 0
        %4527 = vmatprep.subr.bf16.mxu0 0
        %4528 = vmatpush2.bf16.msra.mxu0 0
        %4529 = vmatprep.subr.bf16.mxu0 0
        %4530 = vmatpush2.bf16.msra.mxu0 0
        %4531 = vmatprep.subr.bf16.mxu0 0
        %4532 = vmatpush2.bf16.msra.mxu0 0
        %4533 = vmatprep.subr.bf16.mxu0 0
        %4534 = vmatpush2.bf16.msra.mxu0 0
        %4535 = vmatprep.mubr.bf16.mxu0 0
        %4536 = vmatmul.mubr.bf16.gmra.mxu0 %v4501
        %v4537 = vpop.f32.mrf.mxu0
        %v4538 = vadd.f32 0.0, %v4537
        %v4539 = vpop.f32.mrf.mxu0
        %v4540 = vpop.f32.mrf.mxu0
        %v4541 = vadd.f32 0.0, %v4540
        %v4542 = vpop.f32.mrf.mxu0
        %4543 = vdwg.mxu0
        %v4545 = vsel %vm3059, %v3781, 0
        %4547 = vmatprep.subr.bf16.mxu0 0
        %4548 = vmatpush1.bf16.msra.mxu0 0
        %4549 = vmatprep.subr.bf16.mxu0 0
        %4550 = vmatpush1.bf16.msra.mxu0 0
        %4551 = vmatprep.subr.bf16.mxu0 0
        %4552 = vmatpush1.bf16.msra.mxu0 0
        %4553 = vmatprep.subr.bf16.mxu0 0
        %4554 = vmatpush1.bf16.msra.mxu0 0
        %4555 = vmatprep.subr.bf16.mxu0 0
        %4556 = vmatpush1.bf16.msra.mxu0 0
        %4557 = vmatprep.subr.bf16.mxu0 0
        %4558 = vmatpush1.bf16.msra.mxu0 0
        %4559 = vmatprep.subr.bf16.mxu0 0
        %4560 = vmatpush1.bf16.msra.mxu0 0
        %4561 = vmatprep.subr.bf16.mxu0 0
        %4562 = vmatpush1.bf16.msra.mxu0 %v1464
        %4563 = vmatprep.subr.bf16.mxu0 0
        %4564 = vmatpush2.bf16.msra.mxu0 0
        %4565 = vmatprep.subr.bf16.mxu0 0
        %4566 = vmatpush2.bf16.msra.mxu0 0
        %4567 = vmatprep.subr.bf16.mxu0 0
        %4568 = vmatpush2.bf16.msra.mxu0 0
        %4569 = vmatprep.subr.bf16.mxu0 0
        %4570 = vmatpush2.bf16.msra.mxu0 0
        %4571 = vmatprep.subr.bf16.mxu0 0
        %4572 = vmatpush2.bf16.msra.mxu0 0
        %4573 = vmatprep.subr.bf16.mxu0 0
        %4574 = vmatpush2.bf16.msra.mxu0 0
        %4575 = vmatprep.subr.bf16.mxu0 0
        %4576 = vmatpush2.bf16.msra.mxu0 0
        %4577 = vmatprep.subr.bf16.mxu0 0
        %4578 = vmatpush2.bf16.msra.mxu0 0
        %4579 = vmatprep.mubr.bf16.mxu0 0
        %4580 = vmatmul.mubr.bf16.gmra.mxu0 %v4545
        %v4581 = vpop.f32.mrf.mxu0
        %v4582 = vadd.f32 0.0, %v4581
        %v4583 = vpop.f32.mrf.mxu0
        %v4584 = vpop.f32.mrf.mxu0
        %v4585 = vadd.f32 0.0, %v4584
        %v4586 = vpop.f32.mrf.mxu0
        %4587 = vdwg.mxu0
        %v4589 = vsel %vm3059, %v3782, 0
        %4591 = vmatprep.subr.bf16.mxu0 0
        %4592 = vmatpush1.bf16.msra.mxu0 0
        %4593 = vmatprep.subr.bf16.mxu0 0
        %4594 = vmatpush1.bf16.msra.mxu0 0
        %4595 = vmatprep.subr.bf16.mxu0 0
        %4596 = vmatpush1.bf16.msra.mxu0 0
        %4597 = vmatprep.subr.bf16.mxu0 0
        %4598 = vmatpush1.bf16.msra.mxu0 0
        %4599 = vmatprep.subr.bf16.mxu0 0
        %4600 = vmatpush1.bf16.msra.mxu0 0
        %4601 = vmatprep.subr.bf16.mxu0 0
        %4602 = vmatpush1.bf16.msra.mxu0 0
        %4603 = vmatprep.subr.bf16.mxu0 0
        %4604 = vmatpush1.bf16.msra.mxu0 0
        %4605 = vmatprep.subr.bf16.mxu0 0
        %4606 = vmatpush1.bf16.msra.mxu0 %v1465
        %4607 = vmatprep.subr.bf16.mxu0 0
        %4608 = vmatpush2.bf16.msra.mxu0 0
        %4609 = vmatprep.subr.bf16.mxu0 0
        %4610 = vmatpush2.bf16.msra.mxu0 0
        %4611 = vmatprep.subr.bf16.mxu0 0
        %4612 = vmatpush2.bf16.msra.mxu0 0
        %4613 = vmatprep.subr.bf16.mxu0 0
        %4614 = vmatpush2.bf16.msra.mxu0 0
        %4615 = vmatprep.subr.bf16.mxu0 0
        %4616 = vmatpush2.bf16.msra.mxu0 0
        %4617 = vmatprep.subr.bf16.mxu0 0
        %4618 = vmatpush2.bf16.msra.mxu0 0
        %4619 = vmatprep.subr.bf16.mxu0 0
        %4620 = vmatpush2.bf16.msra.mxu0 0
        %4621 = vmatprep.subr.bf16.mxu0 0
        %4622 = vmatpush2.bf16.msra.mxu0 0
        %4623 = vmatprep.mubr.bf16.mxu0 0
        %4624 = vmatmul.mubr.bf16.gmra.mxu0 %v4589
        %v4625 = vpop.f32.mrf.mxu0
        %v4626 = vadd.f32 0.0, %v4625
        %v4627 = vpop.f32.mrf.mxu0
        %v4628 = vpop.f32.mrf.mxu0
        %v4629 = vadd.f32 0.0, %v4628
        %v4630 = vpop.f32.mrf.mxu0
        %4631 = vdwg.mxu0
        %v4633 = vsel %vm3059, %v3783, 0
        %4635 = vmatprep.subr.bf16.mxu0 0
        %4636 = vmatpush1.bf16.msra.mxu0 0
        %4637 = vmatprep.subr.bf16.mxu0 0
        %4638 = vmatpush1.bf16.msra.mxu0 0
        %4639 = vmatprep.subr.bf16.mxu0 0
        %4640 = vmatpush1.bf16.msra.mxu0 0
        %4641 = vmatprep.subr.bf16.mxu0 0
        %4642 = vmatpush1.bf16.msra.mxu0 0
        %4643 = vmatprep.subr.bf16.mxu0 0
        %4644 = vmatpush1.bf16.msra.mxu0 0
        %4645 = vmatprep.subr.bf16.mxu0 0
        %4646 = vmatpush1.bf16.msra.mxu0 0
        %4647 = vmatprep.subr.bf16.mxu0 0
        %4648 = vmatpush1.bf16.msra.mxu0 0
        %4649 = vmatprep.subr.bf16.mxu0 0
        %4650 = vmatpush1.bf16.msra.mxu0 %v1466
        %4651 = vmatprep.subr.bf16.mxu0 0
        %4652 = vmatpush2.bf16.msra.mxu0 0
        %4653 = vmatprep.subr.bf16.mxu0 0
        %4654 = vmatpush2.bf16.msra.mxu0 0
        %4655 = vmatprep.subr.bf16.mxu0 0
        %4656 = vmatpush2.bf16.msra.mxu0 0
        %4657 = vmatprep.subr.bf16.mxu0 0
        %4658 = vmatpush2.bf16.msra.mxu0 0
        %4659 = vmatprep.subr.bf16.mxu0 0
        %4660 = vmatpush2.bf16.msra.mxu0 0
        %4661 = vmatprep.subr.bf16.mxu0 0
        %4662 = vmatpush2.bf16.msra.mxu0 0
        %4663 = vmatprep.subr.bf16.mxu0 0
        %4664 = vmatpush2.bf16.msra.mxu0 0
        %4665 = vmatprep.subr.bf16.mxu0 0
        %4666 = vmatpush2.bf16.msra.mxu0 0
        %4667 = vmatprep.mubr.bf16.mxu0 0
        %4668 = vmatmul.mubr.bf16.gmra.mxu0 %v4633
        %v4669 = vpop.f32.mrf.mxu0
        %v4670 = vadd.f32 0.0, %v4669
        %v4671 = vpop.f32.mrf.mxu0
        %v4672 = vpop.f32.mrf.mxu0
        %v4673 = vadd.f32 0.0, %v4672
        %v4674 = vpop.f32.mrf.mxu0
        %4675 = vdwg.mxu0
        %v4677 = vsel %vm3059, %v3784, 0
        %4679 = vmatprep.subr.bf16.mxu0 0
        %4680 = vmatpush1.bf16.msra.mxu0 0
        %4681 = vmatprep.subr.bf16.mxu0 0
        %4682 = vmatpush1.bf16.msra.mxu0 0
        %4683 = vmatprep.subr.bf16.mxu0 0
        %4684 = vmatpush1.bf16.msra.mxu0 0
        %4685 = vmatprep.subr.bf16.mxu0 0
        %4686 = vmatpush1.bf16.msra.mxu0 0
        %4687 = vmatprep.subr.bf16.mxu0 0
        %4688 = vmatpush1.bf16.msra.mxu0 0
        %4689 = vmatprep.subr.bf16.mxu0 0
        %4690 = vmatpush1.bf16.msra.mxu0 0
        %4691 = vmatprep.subr.bf16.mxu0 0
        %4692 = vmatpush1.bf16.msra.mxu0 0
        %4693 = vmatprep.subr.bf16.mxu0 0
        %4694 = vmatpush1.bf16.msra.mxu0 %v1467
        %4695 = vmatprep.subr.bf16.mxu0 0
        %4696 = vmatpush2.bf16.msra.mxu0 0
        %4697 = vmatprep.subr.bf16.mxu0 0
        %4698 = vmatpush2.bf16.msra.mxu0 0
        %4699 = vmatprep.subr.bf16.mxu0 0
        %4700 = vmatpush2.bf16.msra.mxu0 0
        %4701 = vmatprep.subr.bf16.mxu0 0
        %4702 = vmatpush2.bf16.msra.mxu0 0
        %4703 = vmatprep.subr.bf16.mxu0 0
        %4704 = vmatpush2.bf16.msra.mxu0 0
        %4705 = vmatprep.subr.bf16.mxu0 0
        %4706 = vmatpush2.bf16.msra.mxu0 0
        %4707 = vmatprep.subr.bf16.mxu0 0
        %4708 = vmatpush2.bf16.msra.mxu0 0
        %4709 = vmatprep.subr.bf16.mxu0 0
        %4710 = vmatpush2.bf16.msra.mxu0 0
        %4711 = vmatprep.mubr.bf16.mxu0 0
        %4712 = vmatmul.mubr.bf16.gmra.mxu0 %v4677
        %v4713 = vpop.f32.mrf.mxu0
        %v4714 = vadd.f32 0.0, %v4713
        %v4715 = vpop.f32.mrf.mxu0
        %v4716 = vpop.f32.mrf.mxu0
        %v4717 = vadd.f32 0.0, %v4716
        %v4718 = vpop.f32.mrf.mxu0
        %4719 = vdwg.mxu0
        %v4721 = vsel %vm3059, %v3785, 0
        %4723 = vmatprep.subr.bf16.mxu0 0
        %4724 = vmatpush1.bf16.msra.mxu0 0
        %4725 = vmatprep.subr.bf16.mxu0 0
        %4726 = vmatpush1.bf16.msra.mxu0 0
        %4727 = vmatprep.subr.bf16.mxu0 0
        %4728 = vmatpush1.bf16.msra.mxu0 0
        %4729 = vmatprep.subr.bf16.mxu0 0
        %4730 = vmatpush1.bf16.msra.mxu0 0
        %4731 = vmatprep.subr.bf16.mxu0 0
        %4732 = vmatpush1.bf16.msra.mxu0 0
        %4733 = vmatprep.subr.bf16.mxu0 0
        %4734 = vmatpush1.bf16.msra.mxu0 0
        %4735 = vmatprep.subr.bf16.mxu0 0
        %4736 = vmatpush1.bf16.msra.mxu0 0
        %4737 = vmatprep.subr.bf16.mxu0 0
        %4738 = vmatpush1.bf16.msra.mxu0 %v1468
        %4739 = vmatprep.subr.bf16.mxu0 0
        %4740 = vmatpush2.bf16.msra.mxu0 0
        %4741 = vmatprep.subr.bf16.mxu0 0
        %4742 = vmatpush2.bf16.msra.mxu0 0
        %4743 = vmatprep.subr.bf16.mxu0 0
        %4744 = vmatpush2.bf16.msra.mxu0 0
        %4745 = vmatprep.subr.bf16.mxu0 0
        %4746 = vmatpush2.bf16.msra.mxu0 0
        %4747 = vmatprep.subr.bf16.mxu0 0
        %4748 = vmatpush2.bf16.msra.mxu0 0
        %4749 = vmatprep.subr.bf16.mxu0 0
        %4750 = vmatpush2.bf16.msra.mxu0 0
        %4751 = vmatprep.subr.bf16.mxu0 0
        %4752 = vmatpush2.bf16.msra.mxu0 0
        %4753 = vmatprep.subr.bf16.mxu0 0
        %4754 = vmatpush2.bf16.msra.mxu0 0
        %4755 = vmatprep.mubr.bf16.mxu0 0
        %4756 = vmatmul.mubr.bf16.gmra.mxu0 %v4721
        %v4757 = vpop.f32.mrf.mxu0
        %v4758 = vadd.f32 0.0, %v4757
        %v4759 = vpop.f32.mrf.mxu0
        %v4760 = vpop.f32.mrf.mxu0
        %v4761 = vadd.f32 0.0, %v4760
        %v4762 = vpop.f32.mrf.mxu0
        %4763 = vdwg.mxu0
        %v4765 = vsel %vm3059, %v3786, 0
        %4767 = vmatprep.subr.bf16.mxu0 0
        %4768 = vmatpush1.bf16.msra.mxu0 0
        %4769 = vmatprep.subr.bf16.mxu0 0
        %4770 = vmatpush1.bf16.msra.mxu0 0
        %4771 = vmatprep.subr.bf16.mxu0 0
        %4772 = vmatpush1.bf16.msra.mxu0 0
        %4773 = vmatprep.subr.bf16.mxu0 0
        %4774 = vmatpush1.bf16.msra.mxu0 0
        %4775 = vmatprep.subr.bf16.mxu0 0
        %4776 = vmatpush1.bf16.msra.mxu0 0
        %4777 = vmatprep.subr.bf16.mxu0 0
        %4778 = vmatpush1.bf16.msra.mxu0 0
        %4779 = vmatprep.subr.bf16.mxu0 0
        %4780 = vmatpush1.bf16.msra.mxu0 0
        %4781 = vmatprep.subr.bf16.mxu0 0
        %4782 = vmatpush1.bf16.msra.mxu0 %v1469
        %4783 = vmatprep.subr.bf16.mxu0 0
        %4784 = vmatpush2.bf16.msra.mxu0 0
        %4785 = vmatprep.subr.bf16.mxu0 0
        %4786 = vmatpush2.bf16.msra.mxu0 0
        %4787 = vmatprep.subr.bf16.mxu0 0
        %4788 = vmatpush2.bf16.msra.mxu0 0
        %4789 = vmatprep.subr.bf16.mxu0 0
        %4790 = vmatpush2.bf16.msra.mxu0 0
        %4791 = vmatprep.subr.bf16.mxu0 0
        %4792 = vmatpush2.bf16.msra.mxu0 0
        %4793 = vmatprep.subr.bf16.mxu0 0
        %4794 = vmatpush2.bf16.msra.mxu0 0
        %4795 = vmatprep.subr.bf16.mxu0 0
        %4796 = vmatpush2.bf16.msra.mxu0 0
        %4797 = vmatprep.subr.bf16.mxu0 0
        %4798 = vmatpush2.bf16.msra.mxu0 0
        %4799 = vmatprep.mubr.bf16.mxu0 0
        %4800 = vmatmul.mubr.bf16.gmra.mxu0 %v4765
        %v4801 = vpop.f32.mrf.mxu0
        %v4802 = vadd.f32 0.0, %v4801
        %v4803 = vpop.f32.mrf.mxu0
        %v4804 = vpop.f32.mrf.mxu0
        %v4805 = vadd.f32 0.0, %v4804
        %v4806 = vpop.f32.mrf.mxu0
        %4807 = vdwg.mxu0
        %v4809 = vsel %vm3059, %v3787, 0
        %4811 = vmatprep.subr.bf16.mxu0 0
        %4812 = vmatpush1.bf16.msra.mxu0 0
        %4813 = vmatprep.subr.bf16.mxu0 0
        %4814 = vmatpush1.bf16.msra.mxu0 0
        %4815 = vmatprep.subr.bf16.mxu0 0
        %4816 = vmatpush1.bf16.msra.mxu0 0
        %4817 = vmatprep.subr.bf16.mxu0 0
        %4818 = vmatpush1.bf16.msra.mxu0 0
        %4819 = vmatprep.subr.bf16.mxu0 0
        %4820 = vmatpush1.bf16.msra.mxu0 0
        %4821 = vmatprep.subr.bf16.mxu0 0
        %4822 = vmatpush1.bf16.msra.mxu0 0
        %4823 = vmatprep.subr.bf16.mxu0 0
        %4824 = vmatpush1.bf16.msra.mxu0 0
        %4825 = vmatprep.subr.bf16.mxu0 0
        %4826 = vmatpush1.bf16.msra.mxu0 %v1470
        %4827 = vmatprep.subr.bf16.mxu0 0
        %4828 = vmatpush2.bf16.msra.mxu0 0
        %4829 = vmatprep.subr.bf16.mxu0 0
        %4830 = vmatpush2.bf16.msra.mxu0 0
        %4831 = vmatprep.subr.bf16.mxu0 0
        %4832 = vmatpush2.bf16.msra.mxu0 0
        %4833 = vmatprep.subr.bf16.mxu0 0
        %4834 = vmatpush2.bf16.msra.mxu0 0
        %4835 = vmatprep.subr.bf16.mxu0 0
        %4836 = vmatpush2.bf16.msra.mxu0 0
        %4837 = vmatprep.subr.bf16.mxu0 0
        %4838 = vmatpush2.bf16.msra.mxu0 0
        %4839 = vmatprep.subr.bf16.mxu0 0
        %4840 = vmatpush2.bf16.msra.mxu0 0
        %4841 = vmatprep.subr.bf16.mxu0 0
        %4842 = vmatpush2.bf16.msra.mxu0 0
        %4843 = vmatprep.mubr.bf16.mxu0 0
        %4844 = vmatmul.mubr.bf16.gmra.mxu0 %v4809
        %v4845 = vpop.f32.mrf.mxu0
        %v4846 = vadd.f32 0.0, %v4845
        %v4847 = vpop.f32.mrf.mxu0
        %v4848 = vpop.f32.mrf.mxu0
        %v4849 = vadd.f32 0.0, %v4848
        %v4850 = vpop.f32.mrf.mxu0
        %4851 = vdwg.mxu0
        %v4853 = vsel %vm3059, %v3788, 0
        %4855 = vmatprep.subr.bf16.mxu0 0
        %4856 = vmatpush1.bf16.msra.mxu0 0
        %4857 = vmatprep.subr.bf16.mxu0 0
        %4858 = vmatpush1.bf16.msra.mxu0 0
        %4859 = vmatprep.subr.bf16.mxu0 0
        %4860 = vmatpush1.bf16.msra.mxu0 0
        %4861 = vmatprep.subr.bf16.mxu0 0
        %4862 = vmatpush1.bf16.msra.mxu0 0
        %4863 = vmatprep.subr.bf16.mxu0 0
        %4864 = vmatpush1.bf16.msra.mxu0 0
        %4865 = vmatprep.subr.bf16.mxu0 0
        %4866 = vmatpush1.bf16.msra.mxu0 0
        %4867 = vmatprep.subr.bf16.mxu0 0
        %4868 = vmatpush1.bf16.msra.mxu0 0
        %4869 = vmatprep.subr.bf16.mxu0 0
        %4870 = vmatpush1.bf16.msra.mxu0 %v1471
        %4871 = vmatprep.subr.bf16.mxu0 0
        %4872 = vmatpush2.bf16.msra.mxu0 0
        %4873 = vmatprep.subr.bf16.mxu0 0
        %4874 = vmatpush2.bf16.msra.mxu0 0
        %4875 = vmatprep.subr.bf16.mxu0 0
        %4876 = vmatpush2.bf16.msra.mxu0 0
        %4877 = vmatprep.subr.bf16.mxu0 0
        %4878 = vmatpush2.bf16.msra.mxu0 0
        %4879 = vmatprep.subr.bf16.mxu0 0
        %4880 = vmatpush2.bf16.msra.mxu0 0
        %4881 = vmatprep.subr.bf16.mxu0 0
        %4882 = vmatpush2.bf16.msra.mxu0 0
        %4883 = vmatprep.subr.bf16.mxu0 0
        %4884 = vmatpush2.bf16.msra.mxu0 0
        %4885 = vmatprep.subr.bf16.mxu0 0
        %4886 = vmatpush2.bf16.msra.mxu0 0
        %4887 = vmatprep.mubr.bf16.mxu0 0
        %4888 = vmatmul.mubr.bf16.gmra.mxu0 %v4853
        %v4889 = vpop.f32.mrf.mxu0
        %v4890 = vadd.f32 0.0, %v4889
        %v4891 = vpop.f32.mrf.mxu0
        %v4892 = vpop.f32.mrf.mxu0
        %v4893 = vadd.f32 0.0, %v4892
        %v4894 = vpop.f32.mrf.mxu0
        %4895 = vdwg.mxu0
        %v4897 = vsel %vm3059, %v3789, 0
        %4899 = vmatprep.subr.bf16.mxu0 0
        %4900 = vmatpush1.bf16.msra.mxu0 0
        %4901 = vmatprep.subr.bf16.mxu0 0
        %4902 = vmatpush1.bf16.msra.mxu0 0
        %4903 = vmatprep.subr.bf16.mxu0 0
        %4904 = vmatpush1.bf16.msra.mxu0 0
        %4905 = vmatprep.subr.bf16.mxu0 0
        %4906 = vmatpush1.bf16.msra.mxu0 0
        %4907 = vmatprep.subr.bf16.mxu0 0
        %4908 = vmatpush1.bf16.msra.mxu0 0
        %4909 = vmatprep.subr.bf16.mxu0 0
        %4910 = vmatpush1.bf16.msra.mxu0 0
        %4911 = vmatprep.subr.bf16.mxu0 0
        %4912 = vmatpush1.bf16.msra.mxu0 0
        %4913 = vmatprep.subr.bf16.mxu0 0
        %4914 = vmatpush1.bf16.msra.mxu0 %v1472
        %4915 = vmatprep.subr.bf16.mxu0 0
        %4916 = vmatpush2.bf16.msra.mxu0 0
        %4917 = vmatprep.subr.bf16.mxu0 0
        %4918 = vmatpush2.bf16.msra.mxu0 0
        %4919 = vmatprep.subr.bf16.mxu0 0
        %4920 = vmatpush2.bf16.msra.mxu0 0
        %4921 = vmatprep.subr.bf16.mxu0 0
        %4922 = vmatpush2.bf16.msra.mxu0 0
        %4923 = vmatprep.subr.bf16.mxu0 0
        %4924 = vmatpush2.bf16.msra.mxu0 0
        %4925 = vmatprep.subr.bf16.mxu0 0
        %4926 = vmatpush2.bf16.msra.mxu0 0
        %4927 = vmatprep.subr.bf16.mxu0 0
        %4928 = vmatpush2.bf16.msra.mxu0 0
        %4929 = vmatprep.subr.bf16.mxu0 0
        %4930 = vmatpush2.bf16.msra.mxu0 0
        %4931 = vmatprep.mubr.bf16.mxu0 0
        %4932 = vmatmul.mubr.bf16.gmra.mxu0 %v4897
        %v4933 = vpop.f32.mrf.mxu0
        %v4934 = vadd.f32 0.0, %v4933
        %v4935 = vpop.f32.mrf.mxu0
        %v4936 = vpop.f32.mrf.mxu0
        %v4937 = vadd.f32 0.0, %v4936
        %v4938 = vpop.f32.mrf.mxu0
        %4939 = vdwg.mxu0
        %v4941 = vsel %vm3059, %v3790, 0
        %4943 = vmatprep.subr.bf16.mxu0 0
        %4944 = vmatpush1.bf16.msra.mxu0 0
        %4945 = vmatprep.subr.bf16.mxu0 0
        %4946 = vmatpush1.bf16.msra.mxu0 0
        %4947 = vmatprep.subr.bf16.mxu0 0
        %4948 = vmatpush1.bf16.msra.mxu0 0
        %4949 = vmatprep.subr.bf16.mxu0 0
        %4950 = vmatpush1.bf16.msra.mxu0 0
        %4951 = vmatprep.subr.bf16.mxu0 0
        %4952 = vmatpush1.bf16.msra.mxu0 0
        %4953 = vmatprep.subr.bf16.mxu0 0
        %4954 = vmatpush1.bf16.msra.mxu0 0
        %4955 = vmatprep.subr.bf16.mxu0 0
        %4956 = vmatpush1.bf16.msra.mxu0 0
        %4957 = vmatprep.subr.bf16.mxu0 0
        %4958 = vmatpush1.bf16.msra.mxu0 %v1473
        %4959 = vmatprep.subr.bf16.mxu0 0
        %4960 = vmatpush2.bf16.msra.mxu0 0
        %4961 = vmatprep.subr.bf16.mxu0 0
        %4962 = vmatpush2.bf16.msra.mxu0 0
        %4963 = vmatprep.subr.bf16.mxu0 0
        %4964 = vmatpush2.bf16.msra.mxu0 0
        %4965 = vmatprep.subr.bf16.mxu0 0
        %4966 = vmatpush2.bf16.msra.mxu0 0
        %4967 = vmatprep.subr.bf16.mxu0 0
        %4968 = vmatpush2.bf16.msra.mxu0 0
        %4969 = vmatprep.subr.bf16.mxu0 0
        %4970 = vmatpush2.bf16.msra.mxu0 0
        %4971 = vmatprep.subr.bf16.mxu0 0
        %4972 = vmatpush2.bf16.msra.mxu0 0
        %4973 = vmatprep.subr.bf16.mxu0 0
        %4974 = vmatpush2.bf16.msra.mxu0 0
        %4975 = vmatprep.mubr.bf16.mxu0 0
        %4976 = vmatmul.mubr.bf16.gmra.mxu0 %v4941
        %v4977 = vpop.f32.mrf.mxu0
        %v4978 = vadd.f32 0.0, %v4977
        %v4979 = vpop.f32.mrf.mxu0
        %v4980 = vpop.f32.mrf.mxu0
        %v4981 = vadd.f32 0.0, %v4980
        %v4982 = vpop.f32.mrf.mxu0
        %4983 = vdwg.mxu0
        %v4985 = vsel %vm3059, %v3791, 0
        %4987 = vmatprep.subr.bf16.mxu0 0
        %4988 = vmatpush1.bf16.msra.mxu0 0
        %4989 = vmatprep.subr.bf16.mxu0 0
        %4990 = vmatpush1.bf16.msra.mxu0 0
        %4991 = vmatprep.subr.bf16.mxu0 0
        %4992 = vmatpush1.bf16.msra.mxu0 0
        %4993 = vmatprep.subr.bf16.mxu0 0
        %4994 = vmatpush1.bf16.msra.mxu0 0
        %4995 = vmatprep.subr.bf16.mxu0 0
        %4996 = vmatpush1.bf16.msra.mxu0 0
        %4997 = vmatprep.subr.bf16.mxu0 0
        %4998 = vmatpush1.bf16.msra.mxu0 0
        %4999 = vmatprep.subr.bf16.mxu0 0
        %5000 = vmatpush1.bf16.msra.mxu0 0
        %5001 = vmatprep.subr.bf16.mxu0 0
        %5002 = vmatpush1.bf16.msra.mxu0 %v1474
        %5003 = vmatprep.subr.bf16.mxu0 0
        %5004 = vmatpush2.bf16.msra.mxu0 0
        %5005 = vmatprep.subr.bf16.mxu0 0
        %5006 = vmatpush2.bf16.msra.mxu0 0
        %5007 = vmatprep.subr.bf16.mxu0 0
        %5008 = vmatpush2.bf16.msra.mxu0 0
        %5009 = vmatprep.subr.bf16.mxu0 0
        %5010 = vmatpush2.bf16.msra.mxu0 0
        %5011 = vmatprep.subr.bf16.mxu0 0
        %5012 = vmatpush2.bf16.msra.mxu0 0
        %5013 = vmatprep.subr.bf16.mxu0 0
        %5014 = vmatpush2.bf16.msra.mxu0 0
        %5015 = vmatprep.subr.bf16.mxu0 0
        %5016 = vmatpush2.bf16.msra.mxu0 0
        %5017 = vmatprep.subr.bf16.mxu0 0
        %5018 = vmatpush2.bf16.msra.mxu0 0
        %5019 = vmatprep.mubr.bf16.mxu0 0
        %5020 = vmatmul.mubr.bf16.gmra.mxu0 %v4985
        %v5021 = vpop.f32.mrf.mxu0
        %v5022 = vadd.f32 0.0, %v5021
        %v5023 = vpop.f32.mrf.mxu0
        %v5024 = vpop.f32.mrf.mxu0
        %v5025 = vadd.f32 0.0, %v5024
        %v5026 = vpop.f32.mrf.mxu0
        %5027 = vdwg.mxu0
        %v5029 = vsel %vm3059, %v3792, 0
        %5031 = vmatprep.subr.bf16.mxu0 0
        %5032 = vmatpush1.bf16.msra.mxu0 0
        %5033 = vmatprep.subr.bf16.mxu0 0
        %5034 = vmatpush1.bf16.msra.mxu0 0
        %5035 = vmatprep.subr.bf16.mxu0 0
        %5036 = vmatpush1.bf16.msra.mxu0 0
        %5037 = vmatprep.subr.bf16.mxu0 0
        %5038 = vmatpush1.bf16.msra.mxu0 0
        %5039 = vmatprep.subr.bf16.mxu0 0
        %5040 = vmatpush1.bf16.msra.mxu0 0
        %5041 = vmatprep.subr.bf16.mxu0 0
        %5042 = vmatpush1.bf16.msra.mxu0 0
        %5043 = vmatprep.subr.bf16.mxu0 0
        %5044 = vmatpush1.bf16.msra.mxu0 0
        %5045 = vmatprep.subr.bf16.mxu0 0
        %5046 = vmatpush1.bf16.msra.mxu0 %v1475
        %5047 = vmatprep.subr.bf16.mxu0 0
        %5048 = vmatpush2.bf16.msra.mxu0 0
        %5049 = vmatprep.subr.bf16.mxu0 0
        %5050 = vmatpush2.bf16.msra.mxu0 0
        %5051 = vmatprep.subr.bf16.mxu0 0
        %5052 = vmatpush2.bf16.msra.mxu0 0
        %5053 = vmatprep.subr.bf16.mxu0 0
        %5054 = vmatpush2.bf16.msra.mxu0 0
        %5055 = vmatprep.subr.bf16.mxu0 0
        %5056 = vmatpush2.bf16.msra.mxu0 0
        %5057 = vmatprep.subr.bf16.mxu0 0
        %5058 = vmatpush2.bf16.msra.mxu0 0
        %5059 = vmatprep.subr.bf16.mxu0 0
        %5060 = vmatpush2.bf16.msra.mxu0 0
        %5061 = vmatprep.subr.bf16.mxu0 0
        %5062 = vmatpush2.bf16.msra.mxu0 0
        %5063 = vmatprep.mubr.bf16.mxu0 0
        %5064 = vmatmul.mubr.bf16.gmra.mxu0 %v5029
        %v5065 = vpop.f32.mrf.mxu0
        %v5066 = vadd.f32 0.0, %v5065
        %v5067 = vpop.f32.mrf.mxu0
        %v5068 = vpop.f32.mrf.mxu0
        %v5069 = vadd.f32 0.0, %v5068
        %v5070 = vpop.f32.mrf.mxu0
        %5071 = vdwg.mxu0
        %v5073 = vsel %vm3059, %v3793, 0
        %5075 = vmatprep.subr.bf16.mxu0 0
        %5076 = vmatpush1.bf16.msra.mxu0 0
        %5077 = vmatprep.subr.bf16.mxu0 0
        %5078 = vmatpush1.bf16.msra.mxu0 0
        %5079 = vmatprep.subr.bf16.mxu0 0
        %5080 = vmatpush1.bf16.msra.mxu0 0
        %5081 = vmatprep.subr.bf16.mxu0 0
        %5082 = vmatpush1.bf16.msra.mxu0 0
        %5083 = vmatprep.subr.bf16.mxu0 0
        %5084 = vmatpush1.bf16.msra.mxu0 0
        %5085 = vmatprep.subr.bf16.mxu0 0
        %5086 = vmatpush1.bf16.msra.mxu0 0
        %5087 = vmatprep.subr.bf16.mxu0 0
        %5088 = vmatpush1.bf16.msra.mxu0 0
        %5089 = vmatprep.subr.bf16.mxu0 0
        %5090 = vmatpush1.bf16.msra.mxu0 %v1476
        %5091 = vmatprep.subr.bf16.mxu0 0
        %5092 = vmatpush2.bf16.msra.mxu0 0
        %5093 = vmatprep.subr.bf16.mxu0 0
        %5094 = vmatpush2.bf16.msra.mxu0 0
        %5095 = vmatprep.subr.bf16.mxu0 0
        %5096 = vmatpush2.bf16.msra.mxu0 0
        %5097 = vmatprep.subr.bf16.mxu0 0
        %5098 = vmatpush2.bf16.msra.mxu0 0
        %5099 = vmatprep.subr.bf16.mxu0 0
        %5100 = vmatpush2.bf16.msra.mxu0 0
        %5101 = vmatprep.subr.bf16.mxu0 0
        %5102 = vmatpush2.bf16.msra.mxu0 0
        %5103 = vmatprep.subr.bf16.mxu0 0
        %5104 = vmatpush2.bf16.msra.mxu0 0
        %5105 = vmatprep.subr.bf16.mxu0 0
        %5106 = vmatpush2.bf16.msra.mxu0 0
        %5107 = vmatprep.mubr.bf16.mxu0 0
        %5108 = vmatmul.mubr.bf16.gmra.mxu0 %v5073
        %v5109 = vpop.f32.mrf.mxu0
        %v5110 = vadd.f32 0.0, %v5109
        %v5111 = vpop.f32.mrf.mxu0
        %v5112 = vpop.f32.mrf.mxu0
        %v5113 = vadd.f32 0.0, %v5112
        %v5114 = vpop.f32.mrf.mxu0
        %5115 = vdwg.mxu0
        %v5117 = vsel %vm3059, %v3794, 0
        %5119 = vmatprep.subr.bf16.mxu0 0
        %5120 = vmatpush1.bf16.msra.mxu0 0
        %5121 = vmatprep.subr.bf16.mxu0 0
        %5122 = vmatpush1.bf16.msra.mxu0 0
        %5123 = vmatprep.subr.bf16.mxu0 0
        %5124 = vmatpush1.bf16.msra.mxu0 0
        %5125 = vmatprep.subr.bf16.mxu0 0
        %5126 = vmatpush1.bf16.msra.mxu0 0
        %5127 = vmatprep.subr.bf16.mxu0 0
        %5128 = vmatpush1.bf16.msra.mxu0 0
        %5129 = vmatprep.subr.bf16.mxu0 0
        %5130 = vmatpush1.bf16.msra.mxu0 0
        %5131 = vmatprep.subr.bf16.mxu0 0
        %5132 = vmatpush1.bf16.msra.mxu0 0
        %5133 = vmatprep.subr.bf16.mxu0 0
        %5134 = vmatpush1.bf16.msra.mxu0 %v1477
        %5135 = vmatprep.subr.bf16.mxu0 0
        %5136 = vmatpush2.bf16.msra.mxu0 0
        %5137 = vmatprep.subr.bf16.mxu0 0
        %5138 = vmatpush2.bf16.msra.mxu0 0
        %5139 = vmatprep.subr.bf16.mxu0 0
        %5140 = vmatpush2.bf16.msra.mxu0 0
        %5141 = vmatprep.subr.bf16.mxu0 0
        %5142 = vmatpush2.bf16.msra.mxu0 0
        %5143 = vmatprep.subr.bf16.mxu0 0
        %5144 = vmatpush2.bf16.msra.mxu0 0
        %5145 = vmatprep.subr.bf16.mxu0 0
        %5146 = vmatpush2.bf16.msra.mxu0 0
        %5147 = vmatprep.subr.bf16.mxu0 0
        %5148 = vmatpush2.bf16.msra.mxu0 0
        %5149 = vmatprep.subr.bf16.mxu0 0
        %5150 = vmatpush2.bf16.msra.mxu0 0
        %5151 = vmatprep.mubr.bf16.mxu0 0
        %5152 = vmatmul.mubr.bf16.gmra.mxu0 %v5117
        %v5153 = vpop.f32.mrf.mxu0
        %v5154 = vadd.f32 0.0, %v5153
        %v5155 = vpop.f32.mrf.mxu0
        %v5156 = vpop.f32.mrf.mxu0
        %v5157 = vadd.f32 0.0, %v5156
        %v5158 = vpop.f32.mrf.mxu0
        %5159 = vdwg.mxu0
        %v5161 = vsel %vm3059, %v3795, 0
        %5163 = vmatprep.subr.bf16.mxu0 0
        %5164 = vmatpush1.bf16.msra.mxu0 0
        %5165 = vmatprep.subr.bf16.mxu0 0
        %5166 = vmatpush1.bf16.msra.mxu0 0
        %5167 = vmatprep.subr.bf16.mxu0 0
        %5168 = vmatpush1.bf16.msra.mxu0 0
        %5169 = vmatprep.subr.bf16.mxu0 0
        %5170 = vmatpush1.bf16.msra.mxu0 0
        %5171 = vmatprep.subr.bf16.mxu0 0
        %5172 = vmatpush1.bf16.msra.mxu0 0
        %5173 = vmatprep.subr.bf16.mxu0 0
        %5174 = vmatpush1.bf16.msra.mxu0 0
        %5175 = vmatprep.subr.bf16.mxu0 0
        %5176 = vmatpush1.bf16.msra.mxu0 0
        %5177 = vmatprep.subr.bf16.mxu0 0
        %5178 = vmatpush1.bf16.msra.mxu0 %v1478
        %5179 = vmatprep.subr.bf16.mxu0 0
        %5180 = vmatpush2.bf16.msra.mxu0 0
        %5181 = vmatprep.subr.bf16.mxu0 0
        %5182 = vmatpush2.bf16.msra.mxu0 0
        %5183 = vmatprep.subr.bf16.mxu0 0
        %5184 = vmatpush2.bf16.msra.mxu0 0
        %5185 = vmatprep.subr.bf16.mxu0 0
        %5186 = vmatpush2.bf16.msra.mxu0 0
        %5187 = vmatprep.subr.bf16.mxu0 0
        %5188 = vmatpush2.bf16.msra.mxu0 0
        %5189 = vmatprep.subr.bf16.mxu0 0
        %5190 = vmatpush2.bf16.msra.mxu0 0
        %5191 = vmatprep.subr.bf16.mxu0 0
        %5192 = vmatpush2.bf16.msra.mxu0 0
        %5193 = vmatprep.subr.bf16.mxu0 0
        %5194 = vmatpush2.bf16.msra.mxu0 0
        %5195 = vmatprep.mubr.bf16.mxu0 0
        %5196 = vmatmul.mubr.bf16.gmra.mxu0 %v5161
        %v5197 = vpop.f32.mrf.mxu0
        %v5198 = vadd.f32 0.0, %v5197
        %v5199 = vpop.f32.mrf.mxu0
        %v5200 = vpop.f32.mrf.mxu0
        %v5201 = vadd.f32 0.0, %v5200
        %v5202 = vpop.f32.mrf.mxu0
        %5203 = vdwg.mxu0
        %5220 = vrot.lane.b32.xlu0 %v4186, 32
        %v5221 = vpop.permute.xlu0 %5220
        %5222 = vrot.lane.b32.xlu0 %v4189, 32
        %v5223 = vpop.permute.xlu0 %5222
        %5224 = vrot.lane.b32.xlu0 %v4230, 32
        %v5225 = vpop.permute.xlu0 %5224
        %5226 = vrot.lane.b32.xlu0 %v4233, 32
        %v5227 = vpop.permute.xlu0 %5226
        %5228 = vrot.lane.b32.xlu0 %v4274, 32
        %v5229 = vpop.permute.xlu0 %5228
        %5230 = vrot.lane.b32.xlu0 %v4277, 32
        %v5231 = vpop.permute.xlu0 %5230
        %5232 = vrot.lane.b32.xlu0 %v4318, 32
        %v5233 = vpop.permute.xlu0 %5232
        %5234 = vrot.lane.b32.xlu0 %v4321, 32
        %v5235 = vpop.permute.xlu0 %5234
        %5236 = vrot.lane.b32.xlu0 %v4362, 32
        %v5237 = vpop.permute.xlu0 %5236
        %5238 = vrot.lane.b32.xlu0 %v4365, 32
        %v5239 = vpop.permute.xlu0 %5238
        %5240 = vrot.lane.b32.xlu0 %v4406, 32
        %v5241 = vpop.permute.xlu0 %5240
        %5242 = vrot.lane.b32.xlu0 %v4409, 32
        %v5243 = vpop.permute.xlu0 %5242
        %5244 = vrot.lane.b32.xlu0 %v4450, 32
        %v5245 = vpop.permute.xlu0 %5244
        %5246 = vrot.lane.b32.xlu0 %v4453, 32
        %v5247 = vpop.permute.xlu0 %5246
        %5248 = vrot.lane.b32.xlu0 %v4494, 32
        %v5249 = vpop.permute.xlu0 %5248
        %5250 = vrot.lane.b32.xlu0 %v4497, 32
        %v5251 = vpop.permute.xlu0 %5250
        %5284 = vrot.lane.b32.xlu0 %v4538, 64
        %v5285 = vpop.permute.xlu0 %5284
        %5286 = vrot.lane.b32.xlu0 %v4541, 64
        %v5287 = vpop.permute.xlu0 %5286
        %5288 = vrot.lane.b32.xlu0 %v4582, 64
        %v5289 = vpop.permute.xlu0 %5288
        %5290 = vrot.lane.b32.xlu0 %v4585, 64
        %v5291 = vpop.permute.xlu0 %5290
        %5292 = vrot.lane.b32.xlu0 %v4626, 64
        %v5293 = vpop.permute.xlu0 %5292
        %5294 = vrot.lane.b32.xlu0 %v4629, 64
        %v5295 = vpop.permute.xlu0 %5294
        %5296 = vrot.lane.b32.xlu0 %v4670, 64
        %v5297 = vpop.permute.xlu0 %5296
        %5298 = vrot.lane.b32.xlu0 %v4673, 64
        %v5299 = vpop.permute.xlu0 %5298
        %5300 = vrot.lane.b32.xlu0 %v4714, 64
        %v5301 = vpop.permute.xlu0 %5300
        %5302 = vrot.lane.b32.xlu0 %v4717, 64
        %v5303 = vpop.permute.xlu0 %5302
        %5304 = vrot.lane.b32.xlu0 %v4758, 64
        %v5305 = vpop.permute.xlu0 %5304
        %5306 = vrot.lane.b32.xlu0 %v4761, 64
        %v5307 = vpop.permute.xlu0 %5306
        %5308 = vrot.lane.b32.xlu0 %v4802, 64
        %v5309 = vpop.permute.xlu0 %5308
        %5310 = vrot.lane.b32.xlu0 %v4805, 64
        %v5311 = vpop.permute.xlu0 %5310
        %5312 = vrot.lane.b32.xlu0 %v4846, 64
        %v5313 = vpop.permute.xlu0 %5312
        %5314 = vrot.lane.b32.xlu0 %v4849, 64
        %v5315 = vpop.permute.xlu0 %5314
        %5348 = vrot.lane.b32.xlu0 %v4890, 96
        %v5349 = vpop.permute.xlu0 %5348
        %5350 = vrot.lane.b32.xlu0 %v4893, 96
        %v5351 = vpop.permute.xlu0 %5350
        %5352 = vrot.lane.b32.xlu0 %v4934, 96
        %v5353 = vpop.permute.xlu0 %5352
        %5354 = vrot.lane.b32.xlu0 %v4937, 96
        %v5355 = vpop.permute.xlu0 %5354
        %5356 = vrot.lane.b32.xlu0 %v4978, 96
        %v5357 = vpop.permute.xlu0 %5356
        %5358 = vrot.lane.b32.xlu0 %v4981, 96
        %v5359 = vpop.permute.xlu0 %5358
        %5360 = vrot.lane.b32.xlu0 %v5022, 96
        %v5361 = vpop.permute.xlu0 %5360
        %5362 = vrot.lane.b32.xlu0 %v5025, 96
        %v5363 = vpop.permute.xlu0 %5362
        %5364 = vrot.lane.b32.xlu0 %v5066, 96
        %v5365 = vpop.permute.xlu0 %5364
        %5366 = vrot.lane.b32.xlu0 %v5069, 96
        %v5367 = vpop.permute.xlu0 %5366
        %5368 = vrot.lane.b32.xlu0 %v5110, 96
        %v5369 = vpop.permute.xlu0 %5368
        %5370 = vrot.lane.b32.xlu0 %v5113, 96
        %v5371 = vpop.permute.xlu0 %5370
        %5372 = vrot.lane.b32.xlu0 %v5154, 96
        %v5373 = vpop.permute.xlu0 %5372
        %5374 = vrot.lane.b32.xlu0 %v5157, 96
        %v5375 = vpop.permute.xlu0 %5374
        %5376 = vrot.lane.b32.xlu0 %v5198, 96
        %v5377 = vpop.permute.xlu0 %5376
        %5378 = vrot.lane.b32.xlu0 %v5201, 96
        %v5379 = vpop.permute.xlu0 %5378
        %v5396 = vsel %vm1486, %v3834, %v5221
        %v5397 = vsel %vm1486, %v3837, %v5223
        %v5398 = vsel %vm1486, %v3878, %v5225
        %v5399 = vsel %vm1486, %v3881, %v5227
        %v5400 = vsel %vm1486, %v3922, %v5229
        %v5401 = vsel %vm1486, %v3925, %v5231
        %v5402 = vsel %vm1486, %v3966, %v5233
        %v5403 = vsel %vm1486, %v3969, %v5235
        %v5404 = vsel %vm1486, %v4010, %v5237
        %v5405 = vsel %vm1486, %v4013, %v5239
        %v5406 = vsel %vm1486, %v4054, %v5241
        %v5407 = vsel %vm1486, %v4057, %v5243
        %v5408 = vsel %vm1486, %v4098, %v5245
        %v5409 = vsel %vm1486, %v4101, %v5247
        %v5410 = vsel %vm1486, %v4142, %v5249
        %v5411 = vsel %vm1486, %v4145, %v5251
        %vm5412 = vcmask 523264
        %v5413 = vsel %vm5412, %v5396, %v5285
        %v5414 = vsel %vm5412, %v5397, %v5287
        %v5415 = vsel %vm5412, %v5398, %v5289
        %v5416 = vsel %vm5412, %v5399, %v5291
        %v5417 = vsel %vm5412, %v5400, %v5293
        %v5418 = vsel %vm5412, %v5401, %v5295
        %v5419 = vsel %vm5412, %v5402, %v5297
        %v5420 = vsel %vm5412, %v5403, %v5299
        %v5421 = vsel %vm5412, %v5404, %v5301
        %v5422 = vsel %vm5412, %v5405, %v5303
        %v5423 = vsel %vm5412, %v5406, %v5305
        %v5424 = vsel %vm5412, %v5407, %v5307
        %v5425 = vsel %vm5412, %v5408, %v5309
        %v5426 = vsel %vm5412, %v5409, %v5311
        %v5427 = vsel %vm5412, %v5410, %v5313
        %v5428 = vsel %vm5412, %v5411, %v5315
        %vm5429 = vcmask 785408
        %v5430 = vsel %vm5429, %v5413, %v5349
        %v5431 = vsel %vm5429, %v5414, %v5351
        %v5432 = vsel %vm5429, %v5415, %v5353
        %v5433 = vsel %vm5429, %v5416, %v5355
        %v5434 = vsel %vm5429, %v5417, %v5357
        %v5435 = vsel %vm5429, %v5418, %v5359
        %v5436 = vsel %vm5429, %v5419, %v5361
        %v5437 = vsel %vm5429, %v5420, %v5363
        %v5438 = vsel %vm5429, %v5421, %v5365
        %v5439 = vsel %vm5429, %v5422, %v5367
        %v5440 = vsel %vm5429, %v5423, %v5369
        %v5441 = vsel %vm5429, %v5424, %v5371
        %v5442 = vsel %vm5429, %v5425, %v5373
        %v5443 = vsel %vm5429, %v5426, %v5375
        %v5444 = vsel %vm5429, %v5427, %v5377
        %v5445 = vsel %vm5429, %v5428, %v5379
        %v5446 = vpack.c.bf16 %v5431, %v5430
        %v5447 = vpack.c.bf16 %v5433, %v5432
        %v5448 = vpack.c.bf16 %v5435, %v5434
        %v5449 = vpack.c.bf16 %v5437, %v5436
        %v5450 = vpack.c.bf16 %v5439, %v5438
        %v5451 = vpack.c.bf16 %v5441, %v5440
        %v5452 = vpack.c.bf16 %v5443, %v5442
        %v5453 = vpack.c.bf16 %v5445, %v5444
        %v5454 = vld [vmem:[%s397] sm:$0xf]
        %v5455 = vld [vmem:[%s397 + $0x4] sm:$0xf]
        %v5456 = vld [vmem:[%s397 + $0x8] sm:$0xf]
        %v5457 = vld [vmem:[%s397 + $0xc] sm:$0xf]
        %v5458 = vld [vmem:[%s397 + $0x10] sm:$0xf]
        %v5459 = vld [vmem:[%s397 + $0x14] sm:$0xf]
        %v5460 = vld [vmem:[%s397 + $0x18] sm:$0xf]
        %v5461 = vld [vmem:[%s397 + $0x1c] sm:$0xf]
        %v5462 = vld [vmem:[%s397 + $0x20] sm:$0xf]
        %v5463 = vld [vmem:[%s397 + $0x24] sm:$0xf]
        %v5464 = vld [vmem:[%s397 + $0x28] sm:$0xf]
        %v5465 = vld [vmem:[%s397 + $0x2c] sm:$0xf]
        %v5466 = vld [vmem:[%s397 + $0x30] sm:$0xf]
        %v5467 = vld [vmem:[%s397 + $0x34] sm:$0xf]
        %v5468 = vld [vmem:[%s397 + $0x38] sm:$0xf]
        %v5469 = vld [vmem:[%s397 + $0x3c] sm:$0xf]
        %v5486 = vunpack.c.l.b16 %v5454
        %v5487 = vunpack.c.l.b16 %v5455
        %v5488 = vunpack.c.l.b16 %v5456
        %v5489 = vunpack.c.l.b16 %v5457
        %v5490 = vunpack.c.l.b16 %v5458
        %v5491 = vunpack.c.l.b16 %v5459
        %v5492 = vunpack.c.l.b16 %v5460
        %v5493 = vunpack.c.l.b16 %v5461
        %v5494 = vunpack.c.l.b16 %v5462
        %v5495 = vunpack.c.l.b16 %v5463
        %v5496 = vunpack.c.l.b16 %v5464
        %v5497 = vunpack.c.l.b16 %v5465
        %v5498 = vunpack.c.l.b16 %v5466
        %v5499 = vunpack.c.l.b16 %v5467
        %v5500 = vunpack.c.l.b16 %v5468
        %v5501 = vunpack.c.l.b16 %v5469
        %v5502 = vpack.c.b16 %v5487, %v5486
        %v5503 = vpack.c.b16 %v5489, %v5488
        %v5504 = vpack.c.b16 %v5491, %v5490
        %v5505 = vpack.c.b16 %v5493, %v5492
        %v5506 = vpack.c.b16 %v5495, %v5494
        %v5507 = vpack.c.b16 %v5497, %v5496
        %v5508 = vpack.c.b16 %v5499, %v5498
        %v5509 = vpack.c.b16 %v5501, %v5500
        %5518 = vmatprep.subr.bf16.mxu0 0
        %5519 = vmatpush1.bf16.msra.mxu0 %v5509
        %5520 = vmatprep.subr.bf16.mxu0 0
        %5521 = vmatpush1.bf16.msra.mxu0 %v5508
        %5522 = vmatprep.subr.bf16.mxu0 0
        %5523 = vmatpush1.bf16.msra.mxu0 %v5507
        %5524 = vmatprep.subr.bf16.mxu0 0
        %5525 = vmatpush1.bf16.msra.mxu0 %v5506
        %5526 = vmatprep.subr.bf16.mxu0 0
        %5527 = vmatpush1.bf16.msra.mxu0 %v5505
        %5528 = vmatprep.subr.bf16.mxu0 0
        %5529 = vmatpush1.bf16.msra.mxu0 %v5504
        %5530 = vmatprep.subr.bf16.mxu0 0
        %5531 = vmatpush1.bf16.msra.mxu0 %v5503
        %5532 = vmatprep.subr.bf16.mxu0 0
        %5533 = vmatpush1.bf16.msra.mxu0 %v5502
        %5534 = vmatprep.subr.bf16.mxu0 0
        %5535 = vmatpush2.bf16.msra.mxu0 0
        %5536 = vmatprep.subr.bf16.mxu0 0
        %5537 = vmatpush2.bf16.msra.mxu0 0
        %5538 = vmatprep.subr.bf16.mxu0 0
        %5539 = vmatpush2.bf16.msra.mxu0 0
        %5540 = vmatprep.subr.bf16.mxu0 0
        %5541 = vmatpush2.bf16.msra.mxu0 0
        %5542 = vmatprep.subr.bf16.mxu0 0
        %5543 = vmatpush2.bf16.msra.mxu0 0
        %5544 = vmatprep.subr.bf16.mxu0 0
        %5545 = vmatpush2.bf16.msra.mxu0 0
        %5546 = vmatprep.subr.bf16.mxu0 0
        %5547 = vmatpush2.bf16.msra.mxu0 0
        %5548 = vmatprep.subr.bf16.mxu0 0
        %5549 = vmatpush2.bf16.msra.mxu0 0
        %5550 = vmatprep.mubr.bf16.mxu0 0
        %5551 = vmatmul.mubr.bf16.gmra.mxu0 %v5446
        %v5552 = vpop.f32.mrf.mxu0
        %v5553 = vadd.f32 0.0, %v5552
        %v5554 = vpop.f32.mrf.mxu0
        %v5555 = vpop.f32.mrf.mxu0
        %v5556 = vadd.f32 0.0, %v5555
        %v5557 = vpop.f32.mrf.mxu0
        %5558 = vmatprep.mubr.bf16.mxu0 0
        %5559 = vmatmul.mubr.bf16.gmra.mxu0 %v5447
        %v5560 = vpop.f32.mrf.mxu0
        %v5561 = vadd.f32 0.0, %v5560
        %v5562 = vpop.f32.mrf.mxu0
        %v5563 = vpop.f32.mrf.mxu0
        %v5564 = vadd.f32 0.0, %v5563
        %v5565 = vpop.f32.mrf.mxu0
        %5566 = vmatprep.mubr.bf16.mxu0 0
        %5567 = vmatmul.mubr.bf16.gmra.mxu0 %v5448
        %v5568 = vpop.f32.mrf.mxu0
        %v5569 = vadd.f32 0.0, %v5568
        %v5570 = vpop.f32.mrf.mxu0
        %v5571 = vpop.f32.mrf.mxu0
        %v5572 = vadd.f32 0.0, %v5571
        %v5573 = vpop.f32.mrf.mxu0
        %5574 = vmatprep.mubr.bf16.mxu0 0
        %5575 = vmatmul.mubr.bf16.gmra.mxu0 %v5449
        %v5576 = vpop.f32.mrf.mxu0
        %v5577 = vadd.f32 0.0, %v5576
        %v5578 = vpop.f32.mrf.mxu0
        %v5579 = vpop.f32.mrf.mxu0
        %v5580 = vadd.f32 0.0, %v5579
        %v5581 = vpop.f32.mrf.mxu0
        %5582 = vmatprep.mubr.bf16.mxu0 0
        %5583 = vmatmul.mubr.bf16.gmra.mxu0 %v5450
        %v5584 = vpop.f32.mrf.mxu0
        %v5585 = vadd.f32 0.0, %v5584
        %v5586 = vpop.f32.mrf.mxu0
        %v5587 = vpop.f32.mrf.mxu0
        %v5588 = vadd.f32 0.0, %v5587
        %v5589 = vpop.f32.mrf.mxu0
        %5590 = vmatprep.mubr.bf16.mxu0 0
        %5591 = vmatmul.mubr.bf16.gmra.mxu0 %v5451
        %v5592 = vpop.f32.mrf.mxu0
        %v5593 = vadd.f32 0.0, %v5592
        %v5594 = vpop.f32.mrf.mxu0
        %v5595 = vpop.f32.mrf.mxu0
        %v5596 = vadd.f32 0.0, %v5595
        %v5597 = vpop.f32.mrf.mxu0
        %5598 = vmatprep.mubr.bf16.mxu0 0
        %5599 = vmatmul.mubr.bf16.gmra.mxu0 %v5452
        %v5600 = vpop.f32.mrf.mxu0
        %v5601 = vadd.f32 0.0, %v5600
        %v5602 = vpop.f32.mrf.mxu0
        %v5603 = vpop.f32.mrf.mxu0
        %v5604 = vadd.f32 0.0, %v5603
        %v5605 = vpop.f32.mrf.mxu0
        %5606 = vmatprep.mubr.bf16.mxu0 0
        %5607 = vmatmul.mubr.bf16.gmra.mxu0 %v5453
        %v5608 = vpop.f32.mrf.mxu0
        %v5609 = vadd.f32 0.0, %v5608
        %v5610 = vpop.f32.mrf.mxu0
        %v5611 = vpop.f32.mrf.mxu0
        %v5612 = vadd.f32 0.0, %v5611
        %v5613 = vpop.f32.mrf.mxu0
        %5614 = vdwg.mxu0
        %v5615 = vadd.f32 %v509, %v5553
        %v5616 = vadd.f32 %v510, %v5556
        %v5617 = vadd.f32 %v511, %v5561
        %v5618 = vadd.f32 %v512, %v5564
        %v5619 = vadd.f32 %v513, %v5569
        %v5620 = vadd.f32 %v514, %v5572
        %v5621 = vadd.f32 %v515, %v5577
        %v5622 = vadd.f32 %v516, %v5580
        %v5623 = vadd.f32 %v517, %v5585
        %v5624 = vadd.f32 %v518, %v5588
        %v5625 = vadd.f32 %v519, %v5593
        %v5626 = vadd.f32 %v520, %v5596
        %v5627 = vadd.f32 %v521, %v5601
        %v5628 = vadd.f32 %v522, %v5604
        %v5629 = vadd.f32 %v523, %v5609
        %v5630 = vadd.f32 %v524, %v5612
        %v5631 = vpack.c.bf16 %v5616, %v5615
        %v5632 = vpack.c.bf16 %v5618, %v5617
        %v5633 = vpack.c.bf16 %v5620, %v5619
        %v5634 = vpack.c.bf16 %v5622, %v5621
        %v5635 = vpack.c.bf16 %v5624, %v5623
        %v5636 = vpack.c.bf16 %v5626, %v5625
        %v5637 = vpack.c.bf16 %v5628, %v5627
        %v5638 = vpack.c.bf16 %v5630, %v5629
        %v5639 = vld [vmem:[%s406] sm:$0xff]
        %v5640 = vld [vmem:[%s406 + $0x8] sm:$0xff]
        %v5641 = vld [vmem:[%s406 + $0x10] sm:$0xff]
        %v5642 = vld [vmem:[%s406 + $0x18] sm:$0xff]
        %v5643 = vld [vmem:[%s406 + $0x20] sm:$0xff]
        %v5644 = vld [vmem:[%s406 + $0x28] sm:$0xff]
        %v5645 = vld [vmem:[%s406 + $0x30] sm:$0xff]
        %v5646 = vld [vmem:[%s406 + $0x38] sm:$0xff]
        %v5647 = vld [vmem:[%s406 + $0x40] sm:$0xff]
        %v5648 = vld [vmem:[%s406 + $0x48] sm:$0xff]
        %v5649 = vld [vmem:[%s406 + $0x50] sm:$0xff]
        %v5650 = vld [vmem:[%s406 + $0x58] sm:$0xff]
        %v5651 = vld [vmem:[%s406 + $0x60] sm:$0xff]
        %v5652 = vld [vmem:[%s406 + $0x68] sm:$0xff]
        %v5653 = vld [vmem:[%s406 + $0x70] sm:$0xff]
        %v5654 = vld [vmem:[%s406 + $0x78] sm:$0xff]
        %v5655 = vld [vmem:[%s467] sm:$0x3]
        %v5657 = vlaneseq
        %v5658 = vshrl.u32 %v5657, 7
        %v5659 = vsub.s32 0, %v5658
        %v5660 = vrot.slane %v5655, %v5659
        %v5661 = vlaneseq
        %v5662 = vshrl.u32 %v5661, 7
        %v5663 = vsub.s32 1, %v5662
        %v5664 = vrot.slane %v5655, %v5663
        %v5683 = vunpack.c.l.b16 %v5639
        %v5684 = vunpack.c.h.b16 %v5639
        %v5685 = vunpack.c.l.b16 %v5640
        %v5686 = vunpack.c.h.b16 %v5640
        %v5687 = vunpack.c.l.b16 %v5641
        %v5688 = vunpack.c.h.b16 %v5641
        %v5689 = vunpack.c.l.b16 %v5642
        %v5690 = vunpack.c.h.b16 %v5642
        %v5691 = vunpack.c.l.b16 %v5643
        %v5692 = vunpack.c.h.b16 %v5643
        %v5693 = vunpack.c.l.b16 %v5644
        %v5694 = vunpack.c.h.b16 %v5644
        %v5695 = vunpack.c.l.b16 %v5645
        %v5696 = vunpack.c.h.b16 %v5645
        %v5697 = vunpack.c.l.b16 %v5646
        %v5698 = vunpack.c.h.b16 %v5646
        %v5699 = vunpack.c.l.b16 %v5647
        %v5700 = vunpack.c.h.b16 %v5647
        %v5701 = vunpack.c.l.b16 %v5648
        %v5702 = vunpack.c.h.b16 %v5648
        %v5703 = vunpack.c.l.b16 %v5649
        %v5704 = vunpack.c.h.b16 %v5649
        %v5705 = vunpack.c.l.b16 %v5650
        %v5706 = vunpack.c.h.b16 %v5650
        %v5707 = vunpack.c.l.b16 %v5651
        %v5708 = vunpack.c.h.b16 %v5651
        %v5709 = vunpack.c.l.b16 %v5652
        %v5710 = vunpack.c.h.b16 %v5652
        %v5711 = vunpack.c.l.b16 %v5653
        %v5712 = vunpack.c.h.b16 %v5653
        %v5713 = vunpack.c.l.b16 %v5654
        %v5714 = vunpack.c.h.b16 %v5654
        %v5715 = vpack.c.b16 %v5685, %v5683
        %v5716 = vpack.c.b16 %v5686, %v5684
        %v5717 = vpack.c.b16 %v5689, %v5687
        %v5718 = vpack.c.b16 %v5690, %v5688
        %v5719 = vpack.c.b16 %v5693, %v5691
        %v5720 = vpack.c.b16 %v5694, %v5692
        %v5721 = vpack.c.b16 %v5697, %v5695
        %v5722 = vpack.c.b16 %v5698, %v5696
        %v5723 = vpack.c.b16 %v5701, %v5699
        %v5724 = vpack.c.b16 %v5702, %v5700
        %v5725 = vpack.c.b16 %v5705, %v5703
        %v5726 = vpack.c.b16 %v5706, %v5704
        %v5727 = vpack.c.b16 %v5709, %v5707
        %v5728 = vpack.c.b16 %v5710, %v5708
        %v5729 = vpack.c.b16 %v5713, %v5711
        %v5730 = vpack.c.b16 %v5714, %v5712
        %5747 = vmatprep.subr.bf16.mxu0 %v5730
        %5748 = vmatpush1.bf16.msra.mxu0 %v5729
        %5749 = vmatprep.subr.bf16.mxu0 %v5728
        %5750 = vmatpush1.bf16.msra.mxu0 %v5727
        %5751 = vmatprep.subr.bf16.mxu0 %v5726
        %5752 = vmatpush1.bf16.msra.mxu0 %v5725
        %5753 = vmatprep.subr.bf16.mxu0 %v5724
        %5754 = vmatpush1.bf16.msra.mxu0 %v5723
        %5755 = vmatprep.subr.bf16.mxu0 %v5722
        %5756 = vmatpush1.bf16.msra.mxu0 %v5721
        %5757 = vmatprep.subr.bf16.mxu0 %v5720
        %5758 = vmatpush1.bf16.msra.mxu0 %v5719
        %5759 = vmatprep.subr.bf16.mxu0 %v5718
        %5760 = vmatpush1.bf16.msra.mxu0 %v5717
        %5761 = vmatprep.subr.bf16.mxu0 %v5716
        %5762 = vmatpush1.bf16.msra.mxu0 %v5715
        %5763 = vmatprep.subr.bf16.mxu0 0
        %5764 = vmatpush2.bf16.msra.mxu0 0
        %5765 = vmatprep.subr.bf16.mxu0 0
        %5766 = vmatpush2.bf16.msra.mxu0 0
        %5767 = vmatprep.subr.bf16.mxu0 0
        %5768 = vmatpush2.bf16.msra.mxu0 0
        %5769 = vmatprep.subr.bf16.mxu0 0
        %5770 = vmatpush2.bf16.msra.mxu0 0
        %5771 = vmatprep.subr.bf16.mxu0 0
        %5772 = vmatpush2.bf16.msra.mxu0 0
        %5773 = vmatprep.subr.bf16.mxu0 0
        %5774 = vmatpush2.bf16.msra.mxu0 0
        %5775 = vmatprep.subr.bf16.mxu0 0
        %5776 = vmatpush2.bf16.msra.mxu0 0
        %5777 = vmatprep.subr.bf16.mxu0 0
        %5778 = vmatpush2.bf16.msra.mxu0 0
        %5779 = vmatprep.mubr.bf16.mxu0 0
        %5780 = vmatmul.mubr.bf16.gmra.mxu0 %v5631
        %v5781 = vpop.f32.mrf.mxu0
        %v5782 = vadd.f32 %v5660, %v5781
        %v5783 = vpop.f32.mrf.mxu0
        %v5784 = vadd.f32 %v5664, %v5783
        %v5785 = vpop.f32.mrf.mxu0
        %v5786 = vadd.f32 %v5660, %v5785
        %v5787 = vpop.f32.mrf.mxu0
        %v5788 = vadd.f32 %v5664, %v5787
        %5789 = vmatprep.mubr.bf16.mxu0 0
        %5790 = vmatmul.mubr.bf16.gmra.mxu0 %v5632
        %v5791 = vpop.f32.mrf.mxu0
        %v5792 = vadd.f32 %v5660, %v5791
        %v5793 = vpop.f32.mrf.mxu0
        %v5794 = vadd.f32 %v5664, %v5793
        %v5795 = vpop.f32.mrf.mxu0
        %v5796 = vadd.f32 %v5660, %v5795
        %v5797 = vpop.f32.mrf.mxu0
        %v5798 = vadd.f32 %v5664, %v5797
        %5799 = vmatprep.mubr.bf16.mxu0 0
        %5800 = vmatmul.mubr.bf16.gmra.mxu0 %v5633
        %v5801 = vpop.f32.mrf.mxu0
        %v5802 = vadd.f32 %v5660, %v5801
        %v5803 = vpop.f32.mrf.mxu0
        %v5804 = vadd.f32 %v5664, %v5803
        %v5805 = vpop.f32.mrf.mxu0
        %v5806 = vadd.f32 %v5660, %v5805
        %v5807 = vpop.f32.mrf.mxu0
        %v5808 = vadd.f32 %v5664, %v5807
        %5809 = vmatprep.mubr.bf16.mxu0 0
        %5810 = vmatmul.mubr.bf16.gmra.mxu0 %v5634
        %v5811 = vpop.f32.mrf.mxu0
        %v5812 = vadd.f32 %v5660, %v5811
        %v5813 = vpop.f32.mrf.mxu0
        %v5814 = vadd.f32 %v5664, %v5813
        %v5815 = vpop.f32.mrf.mxu0
        %v5816 = vadd.f32 %v5660, %v5815
        %v5817 = vpop.f32.mrf.mxu0
        %v5818 = vadd.f32 %v5664, %v5817
        %5819 = vmatprep.mubr.bf16.mxu0 0
        %5820 = vmatmul.mubr.bf16.gmra.mxu0 %v5635
        %v5821 = vpop.f32.mrf.mxu0
        %v5822 = vadd.f32 %v5660, %v5821
        %v5823 = vpop.f32.mrf.mxu0
        %v5824 = vadd.f32 %v5664, %v5823
        %v5825 = vpop.f32.mrf.mxu0
        %v5826 = vadd.f32 %v5660, %v5825
        %v5827 = vpop.f32.mrf.mxu0
        %v5828 = vadd.f32 %v5664, %v5827
        %5829 = vmatprep.mubr.bf16.mxu0 0
        %5830 = vmatmul.mubr.bf16.gmra.mxu0 %v5636
        %v5831 = vpop.f32.mrf.mxu0
        %v5832 = vadd.f32 %v5660, %v5831
        %v5833 = vpop.f32.mrf.mxu0
        %v5834 = vadd.f32 %v5664, %v5833
        %v5835 = vpop.f32.mrf.mxu0
        %v5836 = vadd.f32 %v5660, %v5835
        %v5837 = vpop.f32.mrf.mxu0
        %v5838 = vadd.f32 %v5664, %v5837
        %5839 = vmatprep.mubr.bf16.mxu0 0
        %5840 = vmatmul.mubr.bf16.gmra.mxu0 %v5637
        %v5841 = vpop.f32.mrf.mxu0
        %v5842 = vadd.f32 %v5660, %v5841
        %v5843 = vpop.f32.mrf.mxu0
        %v5844 = vadd.f32 %v5664, %v5843
        %v5845 = vpop.f32.mrf.mxu0
        %v5846 = vadd.f32 %v5660, %v5845
        %v5847 = vpop.f32.mrf.mxu0
        %v5848 = vadd.f32 %v5664, %v5847
        %5849 = vmatprep.mubr.bf16.mxu0 0
        %5850 = vmatmul.mubr.bf16.gmra.mxu0 %v5638
        %v5851 = vpop.f32.mrf.mxu0
        %v5852 = vadd.f32 %v5660, %v5851
        %v5853 = vpop.f32.mrf.mxu0
        %v5854 = vadd.f32 %v5664, %v5853
        %v5855 = vpop.f32.mrf.mxu0
        %v5856 = vadd.f32 %v5660, %v5855
        %v5857 = vpop.f32.mrf.mxu0
        %v5858 = vadd.f32 %v5664, %v5857
        %5859 = vdwg.mxu0
        %v5860 = vmax.f32 %v5782, 0.0
        %v5861 = vmax.f32 %v5784, 0.0
        %v5862 = vmax.f32 %v5786, 0.0
        %v5863 = vmax.f32 %v5788, 0.0
        %v5864 = vmax.f32 %v5792, 0.0
        %v5865 = vmax.f32 %v5794, 0.0
        %v5866 = vmax.f32 %v5796, 0.0
        %v5867 = vmax.f32 %v5798, 0.0
        %v5868 = vmax.f32 %v5802, 0.0
        %v5869 = vmax.f32 %v5804, 0.0
        %v5870 = vmax.f32 %v5806, 0.0
        %v5871 = vmax.f32 %v5808, 0.0
        %v5872 = vmax.f32 %v5812, 0.0
        %v5873 = vmax.f32 %v5814, 0.0
        %v5874 = vmax.f32 %v5816, 0.0
        %v5875 = vmax.f32 %v5818, 0.0
        %v5876 = vmax.f32 %v5822, 0.0
        %v5877 = vmax.f32 %v5824, 0.0
        %v5878 = vmax.f32 %v5826, 0.0
        %v5879 = vmax.f32 %v5828, 0.0
        %v5880 = vmax.f32 %v5832, 0.0
        %v5881 = vmax.f32 %v5834, 0.0
        %v5882 = vmax.f32 %v5836, 0.0
        %v5883 = vmax.f32 %v5838, 0.0
        %v5884 = vmax.f32 %v5842, 0.0
        %v5885 = vmax.f32 %v5844, 0.0
        %v5886 = vmax.f32 %v5846, 0.0
        %v5887 = vmax.f32 %v5848, 0.0
        %v5888 = vmax.f32 %v5852, 0.0
        %v5889 = vmax.f32 %v5854, 0.0
        %v5890 = vmax.f32 %v5856, 0.0
        %v5891 = vmax.f32 %v5858, 0.0
        %v5892 = vpack.c.bf16 %v5862, %v5860
        %v5893 = vpack.c.bf16 %v5863, %v5861
        %v5894 = vpack.c.bf16 %v5866, %v5864
        %v5895 = vpack.c.bf16 %v5867, %v5865
        %v5896 = vpack.c.bf16 %v5870, %v5868
        %v5897 = vpack.c.bf16 %v5871, %v5869
        %v5898 = vpack.c.bf16 %v5874, %v5872
        %v5899 = vpack.c.bf16 %v5875, %v5873
        %v5900 = vpack.c.bf16 %v5878, %v5876
        %v5901 = vpack.c.bf16 %v5879, %v5877
        %v5902 = vpack.c.bf16 %v5882, %v5880
        %v5903 = vpack.c.bf16 %v5883, %v5881
        %v5904 = vpack.c.bf16 %v5886, %v5884
        %v5905 = vpack.c.bf16 %v5887, %v5885
        %v5906 = vpack.c.bf16 %v5890, %v5888
        %v5907 = vpack.c.bf16 %v5891, %v5889
        %v5908 = vld [vmem:[%s415] sm:$0xf]
        %v5909 = vld [vmem:[%s415 + $0x4] sm:$0xf]
        %v5910 = vld [vmem:[%s415 + $0x8] sm:$0xf]
        %v5911 = vld [vmem:[%s415 + $0xc] sm:$0xf]
        %v5912 = vld [vmem:[%s415 + $0x10] sm:$0xf]
        %v5913 = vld [vmem:[%s415 + $0x14] sm:$0xf]
        %v5914 = vld [vmem:[%s415 + $0x18] sm:$0xf]
        %v5915 = vld [vmem:[%s415 + $0x1c] sm:$0xf]
        %v5916 = vld [vmem:[%s415 + $0x20] sm:$0xf]
        %v5917 = vld [vmem:[%s415 + $0x24] sm:$0xf]
        %v5918 = vld [vmem:[%s415 + $0x28] sm:$0xf]
        %v5919 = vld [vmem:[%s415 + $0x2c] sm:$0xf]
        %v5920 = vld [vmem:[%s415 + $0x30] sm:$0xf]
        %v5921 = vld [vmem:[%s415 + $0x34] sm:$0xf]
        %v5922 = vld [vmem:[%s415 + $0x38] sm:$0xf]
        %v5923 = vld [vmem:[%s415 + $0x3c] sm:$0xf]
        %v5924 = vld [vmem:[%s415 + $0x40] sm:$0xf]
        %v5925 = vld [vmem:[%s415 + $0x44] sm:$0xf]
        %v5926 = vld [vmem:[%s415 + $0x48] sm:$0xf]
        %v5927 = vld [vmem:[%s415 + $0x4c] sm:$0xf]
        %v5928 = vld [vmem:[%s415 + $0x50] sm:$0xf]
        %v5929 = vld [vmem:[%s415 + $0x54] sm:$0xf]
        %v5930 = vld [vmem:[%s415 + $0x58] sm:$0xf]
        %v5931 = vld [vmem:[%s415 + $0x5c] sm:$0xf]
        %v5932 = vld [vmem:[%s415 + $0x60] sm:$0xf]
        %v5933 = vld [vmem:[%s415 + $0x64] sm:$0xf]
        %v5934 = vld [vmem:[%s415 + $0x68] sm:$0xf]
        %v5935 = vld [vmem:[%s415 + $0x6c] sm:$0xf]
        %v5936 = vld [vmem:[%s415 + $0x70] sm:$0xf]
        %v5937 = vld [vmem:[%s415 + $0x74] sm:$0xf]
        %v5938 = vld [vmem:[%s415 + $0x78] sm:$0xf]
        %v5939 = vld [vmem:[%s415 + $0x7c] sm:$0xf]
        %v5940 = vld [vmem:[%s470] sm:$0x1]
        %v5942 = vlaneseq
        %v5943 = vshrl.u32 %v5942, 7
        %v5944 = vsub.s32 0, %v5943
        %v5945 = vrot.slane %v5940, %v5944
        %v5979 = vunpack.c.l.b16 %v5908
        %v5980 = vunpack.c.l.b16 %v5909
        %v5981 = vunpack.c.l.b16 %v5910
        %v5982 = vunpack.c.l.b16 %v5911
        %v5983 = vunpack.c.l.b16 %v5912
        %v5984 = vunpack.c.l.b16 %v5913
        %v5985 = vunpack.c.l.b16 %v5914
        %v5986 = vunpack.c.l.b16 %v5915
        %v5987 = vunpack.c.l.b16 %v5916
        %v5988 = vunpack.c.l.b16 %v5917
        %v5989 = vunpack.c.l.b16 %v5918
        %v5990 = vunpack.c.l.b16 %v5919
        %v5991 = vunpack.c.l.b16 %v5920
        %v5992 = vunpack.c.l.b16 %v5921
        %v5993 = vunpack.c.l.b16 %v5922
        %v5994 = vunpack.c.l.b16 %v5923
        %v5995 = vunpack.c.l.b16 %v5924
        %v5996 = vunpack.c.l.b16 %v5925
        %v5997 = vunpack.c.l.b16 %v5926
        %v5998 = vunpack.c.l.b16 %v5927
        %v5999 = vunpack.c.l.b16 %v5928
        %v6000 = vunpack.c.l.b16 %v5929
        %v6001 = vunpack.c.l.b16 %v5930
        %v6002 = vunpack.c.l.b16 %v5931
        %v6003 = vunpack.c.l.b16 %v5932
        %v6004 = vunpack.c.l.b16 %v5933
        %v6005 = vunpack.c.l.b16 %v5934
        %v6006 = vunpack.c.l.b16 %v5935
        %v6007 = vunpack.c.l.b16 %v5936
        %v6008 = vunpack.c.l.b16 %v5937
        %v6009 = vunpack.c.l.b16 %v5938
        %v6010 = vunpack.c.l.b16 %v5939
        %v6011 = vpack.c.b16 %v5980, %v5979
        %v6012 = vpack.c.b16 %v5982, %v5981
        %v6013 = vpack.c.b16 %v5984, %v5983
        %v6014 = vpack.c.b16 %v5986, %v5985
        %v6015 = vpack.c.b16 %v5988, %v5987
        %v6016 = vpack.c.b16 %v5990, %v5989
        %v6017 = vpack.c.b16 %v5992, %v5991
        %v6018 = vpack.c.b16 %v5994, %v5993
        %v6019 = vpack.c.b16 %v5996, %v5995
        %v6020 = vpack.c.b16 %v5998, %v5997
        %v6021 = vpack.c.b16 %v6000, %v5999
        %v6022 = vpack.c.b16 %v6002, %v6001
        %v6023 = vpack.c.b16 %v6004, %v6003
        %v6024 = vpack.c.b16 %v6006, %v6005
        %v6025 = vpack.c.b16 %v6008, %v6007
        %v6026 = vpack.c.b16 %v6010, %v6009
        %6043 = vmatprep.subr.bf16.mxu0 0
        %6044 = vmatpush1.bf16.msra.mxu0 %v6018
        %6045 = vmatprep.subr.bf16.mxu0 0
        %6046 = vmatpush1.bf16.msra.mxu0 %v6017
        %6047 = vmatprep.subr.bf16.mxu0 0
        %6048 = vmatpush1.bf16.msra.mxu0 %v6016
        %6049 = vmatprep.subr.bf16.mxu0 0
        %6050 = vmatpush1.bf16.msra.mxu0 %v6015
        %6051 = vmatprep.subr.bf16.mxu0 0
        %6052 = vmatpush1.bf16.msra.mxu0 %v6014
        %6053 = vmatprep.subr.bf16.mxu0 0
        %6054 = vmatpush1.bf16.msra.mxu0 %v6013
        %6055 = vmatprep.subr.bf16.mxu0 0
        %6056 = vmatpush1.bf16.msra.mxu0 %v6012
        %6057 = vmatprep.subr.bf16.mxu0 0
        %6058 = vmatpush1.bf16.msra.mxu0 %v6011
        %6059 = vmatprep.subr.bf16.mxu0 0
        %6060 = vmatpush2.bf16.msra.mxu0 %v6026
        %6061 = vmatprep.subr.bf16.mxu0 0
        %6062 = vmatpush2.bf16.msra.mxu0 %v6025
        %6063 = vmatprep.subr.bf16.mxu0 0
        %6064 = vmatpush2.bf16.msra.mxu0 %v6024
        %6065 = vmatprep.subr.bf16.mxu0 0
        %6066 = vmatpush2.bf16.msra.mxu0 %v6023
        %6067 = vmatprep.subr.bf16.mxu0 0
        %6068 = vmatpush2.bf16.msra.mxu0 %v6022
        %6069 = vmatprep.subr.bf16.mxu0 0
        %6070 = vmatpush2.bf16.msra.mxu0 %v6021
        %6071 = vmatprep.subr.bf16.mxu0 0
        %6072 = vmatpush2.bf16.msra.mxu0 %v6020
        %6073 = vmatprep.subr.bf16.mxu0 0
        %6074 = vmatpush2.bf16.msra.mxu0 %v6019
        %6075 = vmatprep.mubr.bf16.mxu0 %v5893
        %6076 = vmatmul.mubr.bf16.gmra.mxu0 %v5892
        %v6077 = vpop.f32.mrf.mxu0
        %v6078 = vadd.f32 %v5945, %v6077
        %v6079 = vpop.f32.mrf.mxu0
        %v6080 = vpop.f32.mrf.mxu0
        %v6081 = vadd.f32 %v5945, %v6080
        %v6082 = vpop.f32.mrf.mxu0
        %6083 = vmatprep.mubr.bf16.mxu0 %v5895
        %6084 = vmatmul.mubr.bf16.gmra.mxu0 %v5894
        %v6085 = vpop.f32.mrf.mxu0
        %v6086 = vadd.f32 %v5945, %v6085
        %v6087 = vpop.f32.mrf.mxu0
        %v6088 = vpop.f32.mrf.mxu0
        %v6089 = vadd.f32 %v5945, %v6088
        %v6090 = vpop.f32.mrf.mxu0
        %6091 = vmatprep.mubr.bf16.mxu0 %v5897
        %6092 = vmatmul.mubr.bf16.gmra.mxu0 %v5896
        %v6093 = vpop.f32.mrf.mxu0
        %v6094 = vadd.f32 %v5945, %v6093
        %v6095 = vpop.f32.mrf.mxu0
        %v6096 = vpop.f32.mrf.mxu0
        %v6097 = vadd.f32 %v5945, %v6096
        %v6098 = vpop.f32.mrf.mxu0
        %6099 = vmatprep.mubr.bf16.mxu0 %v5899
        %6100 = vmatmul.mubr.bf16.gmra.mxu0 %v5898
        %v6101 = vpop.f32.mrf.mxu0
        %v6102 = vadd.f32 %v5945, %v6101
        %v6103 = vpop.f32.mrf.mxu0
        %v6104 = vpop.f32.mrf.mxu0
        %v6105 = vadd.f32 %v5945, %v6104
        %v6106 = vpop.f32.mrf.mxu0
        %6107 = vmatprep.mubr.bf16.mxu0 %v5901
        %6108 = vmatmul.mubr.bf16.gmra.mxu0 %v5900
        %v6109 = vpop.f32.mrf.mxu0
        %v6110 = vadd.f32 %v5945, %v6109
        %v6111 = vpop.f32.mrf.mxu0
        %v6112 = vpop.f32.mrf.mxu0
        %v6113 = vadd.f32 %v5945, %v6112
        %v6114 = vpop.f32.mrf.mxu0
        %6115 = vmatprep.mubr.bf16.mxu0 %v5903
        %6116 = vmatmul.mubr.bf16.gmra.mxu0 %v5902
        %v6117 = vpop.f32.mrf.mxu0
        %v6118 = vadd.f32 %v5945, %v6117
        %v6119 = vpop.f32.mrf.mxu0
        %v6120 = vpop.f32.mrf.mxu0
        %v6121 = vadd.f32 %v5945, %v6120
        %v6122 = vpop.f32.mrf.mxu0
        %6123 = vmatprep.mubr.bf16.mxu0 %v5905
        %6124 = vmatmul.mubr.bf16.gmra.mxu0 %v5904
        %v6125 = vpop.f32.mrf.mxu0
        %v6126 = vadd.f32 %v5945, %v6125
        %v6127 = vpop.f32.mrf.mxu0
        %v6128 = vpop.f32.mrf.mxu0
        %v6129 = vadd.f32 %v5945, %v6128
        %v6130 = vpop.f32.mrf.mxu0
        %6131 = vmatprep.mubr.bf16.mxu0 %v5907
        %6132 = vmatmul.mubr.bf16.gmra.mxu0 %v5906
        %v6133 = vpop.f32.mrf.mxu0
        %v6134 = vadd.f32 %v5945, %v6133
        %v6135 = vpop.f32.mrf.mxu0
        %v6136 = vpop.f32.mrf.mxu0
        %v6137 = vadd.f32 %v5945, %v6136
        %v6138 = vpop.f32.mrf.mxu0
        %6139 = vdwg.mxu0
        %v6140 = vadd.f32 %v5615, %v6078
        %v6141 = vadd.f32 %v5616, %v6081
        %v6142 = vadd.f32 %v5617, %v6086
        %v6143 = vadd.f32 %v5618, %v6089
        %v6144 = vadd.f32 %v5619, %v6094
        %v6145 = vadd.f32 %v5620, %v6097
        %v6146 = vadd.f32 %v5621, %v6102
        %v6147 = vadd.f32 %v5622, %v6105
        %v6148 = vadd.f32 %v5623, %v6110
        %v6149 = vadd.f32 %v5624, %v6113
        %v6150 = vadd.f32 %v5625, %v6118
        %v6151 = vadd.f32 %v5626, %v6121
        %v6152 = vadd.f32 %v5627, %v6126
        %v6153 = vadd.f32 %v5628, %v6129
        %v6154 = vadd.f32 %v5629, %v6134
        %v6155 = vadd.f32 %v5630, %v6137
        %6156 = vst [vmem:[#allocation11] sm:$0xff] %v6140
        %6157 = vst [vmem:[#allocation11 + $0x8] sm:$0xff] %v6141
        %6158 = vst [vmem:[#allocation11 + $0x10] sm:$0xff] %v6142
        %6159 = vst [vmem:[#allocation11 + $0x18] sm:$0xff] %v6143
        %6160 = vst [vmem:[#allocation11 + $0x20] sm:$0xff] %v6144
        %6161 = vst [vmem:[#allocation11 + $0x28] sm:$0xff] %v6145
        %6162 = vst [vmem:[#allocation11 + $0x30] sm:$0xff] %v6146
        %6163 = vst [vmem:[#allocation11 + $0x38] sm:$0xff] %v6147
        %6164 = vst [vmem:[#allocation11 + $0x40] sm:$0xff] %v6148
        %6165 = vst [vmem:[#allocation11 + $0x48] sm:$0xff] %v6149
        %6166 = vst [vmem:[#allocation11 + $0x50] sm:$0xff] %v6150
        %6167 = vst [vmem:[#allocation11 + $0x58] sm:$0xff] %v6151
        %6168 = vst [vmem:[#allocation11 + $0x60] sm:$0xff] %v6152
        %6169 = vst [vmem:[#allocation11 + $0x68] sm:$0xff] %v6153
        %6170 = vst [vmem:[#allocation11 + $0x70] sm:$0xff] %v6154
        %6171 = vst [vmem:[#allocation11 + $0x78] sm:$0xff] %v6155
        // Predicated region
        $region73: #{tpu_custom_call.1} parent=47 // pred_check
          %p6172 = pneg %p238
        $region74: #{tpu_custom_call.1} parent=47 // pred_check_branch
          %6174 = sbr.rel (%p6172) target = $region76
        $region75: #{tpu_custom_call.1} parent=47 // pred_region
          %s6175 = smul.u32 16, %s30
          %s6177 = ssub.s32 2048, 2048
          %6178 = vsyncadd [#allocation4], %s6177
          %s6179 = smul.addr %s6175, 128
          %s6180 = scalar_lea.hbm %s7, %s6179
          %s6181 = sshll.u32 [#allocation11], 4
          %s6182 = int_to_ptr.vmem [resolvable:$true] %s6181
          %6187 = dma.vmem_to_hbm [thread:$0]  %s6182, 2048, %s6180, [#allocation4], 128, 128, 8
        $region76: #{tpu_custom_call.1} parent=47 // pred_fallthru
          _
        // Predicated region
        $region77: #{tpu_custom_call.1} parent=47 // pred_check
          %p6188 = pneg %p238
        $region78: #{tpu_custom_call.1} parent=47 // pred_check_branch
          %6190 = sbr.rel (%p6188) target = $region80
        $region79: #{tpu_custom_call.1} parent=47 // pred_region
          %6191 = dma.done [#allocation4], 2048
        $region80: #{tpu_custom_call.1} parent=47 // pred_fallthru
          _
      $region48: #{tpu_custom_call.1} parent=5 // pred_fallthru
        _
      %p6192 = scmp.le.s32.totalorder 2, %s21
      // Predicated region
      $region81: #{tpu_custom_call.1} parent=5 // pred_check
        %p6193 = pneg %p6192
      $region82: #{tpu_custom_call.1} parent=5 // pred_check_branch
        %6195 = sbr.rel (%p6193) target = $region84
      $region83: #{tpu_custom_call.1} parent=5 // pred_region
        %s6196 = ssub.s32 %s21, 2
      $region84: #{tpu_custom_call.1} parent=5 // pred_fallthru
        _
    $region6: #{tpu_custom_call.1} parent=1 // loop_footer
      %s25 = sadd.s32 1, %s21
    $region7: #{tpu_custom_call.1} parent=1 // loop_footer_branch
      %20 = sbr.rel target = $region3
    $region8: #{tpu_custom_call.1} parent=1 // loop_exit
      _
    %6197 = vsyncpa [#allocation3], 1
    %s6198 = scalar_lea.sflag [#allocation3], 1
    %6199 = vsyncpa %s6198, 1
    %6200 = vsyncpa [#allocation6], 1
    %s6201 = scalar_lea.sflag [#allocation6], 1
    %6202 = vsyncpa %s6201, 1
    %6203 = vsyncpa [#allocation9], 1
    %s6204 = scalar_lea.sflag [#allocation9], 1
    %6205 = vsyncpa %s6204, 1
    %6206 = vsyncpa [#allocation4], 1
    %s6207 = scalar_lea.sflag [#allocation4], 1
    %6208 = vsyncpa %s6207, 1

</llo_original>
